<compile_context>
chip_gen: v7x
topology: tpu7x:2x2x1
jax: 0.10.0
libtpu: 0.0.40
codegen_flags: <defaults>
</compile_context>

<pallas_src>
import functools
import math

import jax
import jax.numpy as jnp
from jax.experimental import pallas as pl
from jax.experimental.pallas import tpu as pltpu


# ----------------------------------------------------------------------------
# Fused residual-block kernel
# ----------------------------------------------------------------------------
def _resblock_kernel(*refs, has_sc_linear, tn, n_j):
    it = iter(refs)
    x_ref = next(it)                       # (B, Fin_p)  f32, block-resident
    s1_ref = next(it); sh1_ref = next(it)  # (1, Fin_p)  folded BN1
    w1_ref = next(it); b1_ref = next(it)   # (Fin_p, tn) bf16 / (1, tn)
    s2_ref = next(it); sh2_ref = next(it)  # (1, tn)     folded BN2
    w2_ref = next(it); b2_ref = next(it)   # (Fout_p, tn) bf16 / (1, tn)
    if has_sc_linear:
        wsc_ref = next(it); bsc_ref = next(it)   # (Fin_p, tn) bf16 / (1, tn)
    o_ref = next(it)                       # (B, tn)
    h_scr = next(it)                       # (B, Fin_p)      bf16: relu(bn1(x))
    u_scr = next(it)                       # (n_j, B, tn)    bf16: relu(bn2(linear1))
    sc_scr = next(it)                      # (n_j, B, tn)    f32 : shortcut

    p = pl.program_id(0)
    j = pl.program_id(1)

    # One-time prologue: fold BN1 + ReLU of x into VMEM once (reused by every
    # output tile); stage the identity shortcut when there is no shortcut Linear.
    @pl.when((p == 0) & (j == 0))
    def _():
        x = x_ref[...]
        h = jnp.maximum(x * s1_ref[...] + sh1_ref[...], 0.0)
        h_scr[...] = h.astype(h_scr.dtype)
        if not has_sc_linear:
            for jp in range(n_j):                       # static, unrolled
                sc_scr[jp] = x[:, jp * tn:(jp + 1) * tn].astype(sc_scr.dtype)

    # Phase 0: stream W1 (+ shortcut W) tile j -> build u / shortcut in VMEM.
    @pl.when(p == 0)
    def _():
        t = jnp.dot(h_scr[...], w1_ref[...], preferred_element_type=jnp.float32)
        t = t + b1_ref[...]
        # dropout is the identity in eval mode
        u = jnp.maximum(t * s2_ref[...] + sh2_ref[...], 0.0)
        u_scr[j] = u.astype(u_scr.dtype)
        if has_sc_linear:
            sc = jnp.dot(x_ref[...].astype(wsc_ref.dtype), wsc_ref[...],
                         preferred_element_type=jnp.float32) + bsc_ref[...]
            sc_scr[j] = sc

    # Phase 1: stream W2 tile j -> y_tile = u @ W2_tile + b2 + shortcut_tile.
    @pl.when(p == 1)
    def _():
        acc = jnp.zeros(o_ref.shape, jnp.float32)
        for jp in range(n_j):                           # static K-chunks, unrolled
            acc += jnp.dot(u_scr[jp], w2_ref[jp * tn:(jp + 1) * tn, :],
                           preferred_element_type=jnp.float32)
        acc = acc + b2_ref[...] + sc_scr[j]
        o_ref[...] = acc.astype(o_ref.dtype)


# ----------------------------------------------------------------------------
# Wrapper: padding, weight transpose + bf16 cast, BlockSpecs / grid
# ----------------------------------------------------------------------------
def _round_up(n, m):
    return ((n + m - 1) // m) * m


def _pick_tn(f_padded):
    # largest lane-dense tile that divides the padded feature count
    for t in (512, 384, 256, 128):
        if f_padded % t == 0:
            return t
    return 128


def _fold_bn(gamma, beta, mean, var, eps=1e-5):
    scale = gamma / jnp.sqrt(var + eps)
    shift = beta - mean * scale
    return scale, shift


def residual_block_forward(params, x, *, weight_dtype=jnp.bfloat16):
    """x: (B, in_features) f32. Returns (B, out_features) f32."""
    B, fin = x.shape
    fout = params["w1"].shape[0]

    fin_p = _round_up(fin, 128)
    fout_p = _round_up(fout, 128)
    tn = _pick_tn(fout_p)
    n_j = fout_p // tn

    has_sc_linear = "w_sc" in params
    if not has_sc_linear:
        assert fin == fout and fin_p == fout_p

    def pad2(a, r, c):
        return jnp.pad(a, ((0, r - a.shape[0]), (0, c - a.shape[1])))

    def pad_row(a, c):
        a = a.reshape(1, -1)
        return jnp.pad(a, ((0, 0), (0, c - a.shape[1])))

    s1, sh1 = _fold_bn(*params["bn1"])
    s2, sh2 = _fold_bn(*params["bn2"])

    xp = pad2(x.astype(jnp.float32), B, fin_p)
    s1p = pad_row(s1, fin_p)
    sh1p = pad_row(sh1, fin_p)
    w1t = pad2(params["w1"].T, fin_p, fout_p).astype(weight_dtype)   # (Fin_p, Fout_p)
    b1p = pad_row(params["b1"], fout_p)
    s2p = pad_row(s2, fout_p)
    sh2p = pad_row(sh2, fout_p)
    w2t = pad2(params["w2"].T, fout_p, fout_p).astype(weight_dtype)  # (Fout_p, Fout_p)
    b2p = pad_row(params["b2"], fout_p)

    last = n_j - 1
    const = lambda p, j: (0, 0)
    stream0 = lambda p, j: (0, j * (1 - p) + last * p)   # streamed in phase 0, parked after
    stream1 = lambda p, j: (0, j * p)                    # parked in phase 0, streamed in phase 1

    inputs = [xp, s1p, sh1p, w1t, b1p, s2p, sh2p, w2t, b2p]
    in_specs = [
        pl.BlockSpec((B, fin_p), const),
        pl.BlockSpec((1, fin_p), const),
        pl.BlockSpec((1, fin_p), const),
        pl.BlockSpec((fin_p, tn), stream0),
        pl.BlockSpec((1, tn), stream0),
        pl.BlockSpec((1, tn), stream0),
        pl.BlockSpec((1, tn), stream0),
        pl.BlockSpec((fout_p, tn), stream1),
        pl.BlockSpec((1, tn), stream1),
    ]
    if has_sc_linear:
        wsct = pad2(params["w_sc"].T, fin_p, fout_p).astype(weight_dtype)
        bscp = pad_row(params["b_sc"], fout_p)
        inputs += [wsct, bscp]
        in_specs += [pl.BlockSpec((fin_p, tn), stream0),
                     pl.BlockSpec((1, tn), stream0)]

    kernel = functools.partial(_resblock_kernel,
                               has_sc_linear=has_sc_linear, tn=tn, n_j=n_j)

    out = pl.pallas_call(
        kernel,
        out_shape=jax.ShapeDtypeStruct((B, fout_p), x.dtype),
        grid_spec=pltpu.PrefetchScalarGridSpec(
            num_scalar_prefetch=0,
            grid=(2, n_j),
            in_specs=in_specs,
            out_specs=pl.BlockSpec((B, tn), stream1),
            scratch_shapes=[
                pltpu.VMEM((B, fin_p), weight_dtype),      # relu(bn1(x))
                pltpu.VMEM((n_j, B, tn), weight_dtype),    # relu(bn2(linear1(...)))
                pltpu.VMEM((n_j, B, tn), jnp.float32),     # shortcut
            ]),
        compiler_params=pltpu.CompilerParams(
            # phase 1 consumes the full phase-0 scratch -> both axes sequential
            # (no megacore split of the tile axis over the shared scratch).
            dimension_semantics=("arbitrary", "arbitrary"),
            vmem_limit_bytes=32 * 1024 * 1024),
    )(*inputs)

    return out[:, :fout]


# ----------------------------------------------------------------------------
# Deterministic parameter construction (PyTorch shapes / init conventions)
# ----------------------------------------------------------------------------
def _init_linear(key, in_f, out_f):
    k1, k2 = jax.random.split(key)
    bound = 1.0 / math.sqrt(in_f)
    w = jax.random.uniform(k1, (out_f, in_f), jnp.float32, -bound, bound)
    b = jax.random.uniform(k2, (out_f,), jnp.float32, -bound, bound)
    return w, b


def _init_bn(key, f):
    k1, k2, k3, k4 = jax.random.split(key, 4)
    gamma = 1.0 + 0.1 * jax.random.normal(k1, (f,), jnp.float32)
    beta = 0.1 * jax.random.normal(k2, (f,), jnp.float32)
    mean = 0.1 * jax.random.normal(k3, (f,), jnp.float32)
    var = jax.random.uniform(k4, (f,), jnp.float32, 0.5, 1.5)
    return gamma, beta, mean, var


def make_block_params(key, in_features, out_features):
    ks = jax.random.split(key, 5)
    params = {
        "bn1": _init_bn(ks[0], in_features),
        "bn2": _init_bn(ks[2], out_features),
    }
    params["w1"], params["b1"] = _init_linear(ks[1], in_features, out_features)
    params["w2"], params["b2"] = _init_linear(ks[3], out_features, out_features)
    if in_features != out_features:
        params["w_sc"], params["b_sc"] = _init_linear(ks[4], in_features, out_features)
    return params


# ----------------------------------------------------------------------------
# Pure-JAX reference (same bf16 weight streaming, f32 accumulation)
# ----------------------------------------------------------------------------
def _ref_block(params, x, *, weight_dtype=jnp.bfloat16):
    wd = weight_dtype
    s1, sh1 = _fold_bn(*params["bn1"])
    s2, sh2 = _fold_bn(*params["bn2"])
    h = jnp.maximum(x * s1 + sh1, 0.0).astype(wd)
    t = jnp.dot(h, params["w1"].T.astype(wd),
                preferred_element_type=jnp.float32) + params["b1"]
    u = jnp.maximum(t * s2 + sh2, 0.0).astype(wd)
    y = jnp.dot(u, params["w2"].T.astype(wd),
                preferred_element_type=jnp.float32) + params["b2"]
    if "w_sc" in params:
        sc = jnp.dot(x.astype(wd), params["w_sc"].T.astype(wd),
                     preferred_element_type=jnp.float32) + params["b_sc"]
    else:
        sc = x
    return y + sc


# TODO(synk): training-mode semantics (batch-statistic BatchNorm, stochastic
# Dropout masking) are not implemented; this kernel reproduces eval() forward.

if __name__ == "__main__":
    key = jax.random.PRNGKey(0)
    cases = [
        # (batch, in_features, out_features)
        (8, 256, 768),   # Linear shortcut; output tiled as 2 x 384
        (8, 192, 192),   # Identity shortcut; features padded 192 -> 256
    ]
    fwd = jax.jit(residual_block_forward)
    for (B, fin, fout) in cases:
        key, kp, kx = jax.random.split(key, 3)
        params = make_block_params(kp, fin, fout)
        x = jax.random.normal(kx, (B, fin), jnp.float32)

        out = jax.block_until_ready(fwd(params, x))
        ref = jax.block_until_ready(_ref_block(params, x))

        assert out.shape == (B, fout), out.shape
        err = jnp.max(jnp.abs(out - ref)) / (jnp.max(jnp.abs(ref)) + 1e-6)
        # kernel and reference use identical bf16 weight quantization; remaining
        # difference is f32 accumulation-order noise.
        if not bool(err < 2e-3):
            raise AssertionError(
                f"Pallas mismatch (B={B}, in={fin}, out={fout}): rel_err={err}")
    print("KERNEL_OK")
</pallas_src>

<mosaic_0001>
module attributes {stable_mosaic.version = 11 : i64} {
  func.func @_resblock_kernel(%arg0: i32, %arg1: i32, %arg2: memref<8x256xf32, #tpu.memory_space<vmem>>, %arg3: memref<1x256xf32, #tpu.memory_space<vmem>>, %arg4: memref<1x256xf32, #tpu.memory_space<vmem>>, %arg5: memref<256x384xbf16, #tpu.memory_space<vmem>>, %arg6: memref<1x384xf32, #tpu.memory_space<vmem>>, %arg7: memref<1x384xf32, #tpu.memory_space<vmem>>, %arg8: memref<1x384xf32, #tpu.memory_space<vmem>>, %arg9: memref<768x384xbf16, #tpu.memory_space<vmem>>, %arg10: memref<1x384xf32, #tpu.memory_space<vmem>>, %arg11: memref<256x384xbf16, #tpu.memory_space<vmem>>, %arg12: memref<1x384xf32, #tpu.memory_space<vmem>>, %arg13: memref<8x384xf32, #tpu.memory_space<vmem>>, %arg14: memref<8x256xbf16, #tpu.memory_space<vmem>>, %arg15: memref<2x8x384xbf16, #tpu.memory_space<vmem>>, %arg16: memref<2x8x384xf32, #tpu.memory_space<vmem>>) attributes {dimension_semantics = [#tpu.dimension_semantics<arbitrary>, #tpu.dimension_semantics<arbitrary>], iteration_bounds = array<i64: 2, 2>, scalar_prefetch = 0 : i64, scratch_operands = 3 : i64, tpu.core_type = #tpu.core_type<tc>, window_params = [{pipeline_mode = #tpu.pipeline_mode<synchronous>, transform_indices = @transform_0, window_bounds = array<i64: 8, 256>}, {pipeline_mode = #tpu.pipeline_mode<synchronous>, transform_indices = @transform_1, window_bounds = array<i64: 1, 256>}, {pipeline_mode = #tpu.pipeline_mode<synchronous>, transform_indices = @transform_2, window_bounds = array<i64: 1, 256>}, {transform_indices = @transform_3, window_bounds = array<i64: 256, 384>}, {transform_indices = @transform_4, window_bounds = array<i64: 1, 384>}, {transform_indices = @transform_5, window_bounds = array<i64: 1, 384>}, {transform_indices = @transform_6, window_bounds = array<i64: 1, 384>}, {transform_indices = @transform_7, window_bounds = array<i64: 768, 384>}, {transform_indices = @transform_8, window_bounds = array<i64: 1, 384>}, {transform_indices = @transform_9, window_bounds = array<i64: 256, 384>}, {transform_indices = @transform_10, window_bounds = array<i64: 1, 384>}, {transform_indices = @transform_11, window_bounds = array<i64: 8, 384>}]} {
    %c0_i32 = arith.constant 0 : i32
    %0 = arith.cmpi eq, %arg0, %c0_i32 : i32
    %c0_i32_0 = arith.constant 0 : i32
    %1 = arith.cmpi eq, %arg1, %c0_i32_0 : i32
    %2 = arith.andi %0, %1 : i1
    %3 = arith.extui %2 : i1 to i32
    %c0_i32_1 = arith.constant 0 : i32
    %4 = arith.cmpi ne, %3, %c0_i32_1 : i32
    scf.if %4 {
      %c0 = arith.constant 0 : index
      %c0_5 = arith.constant 0 : index
      %11 = vector.load %arg2[%c0, %c0_5] : memref<8x256xf32, #tpu.memory_space<vmem>>, vector<8x256xf32>
      %c0_6 = arith.constant 0 : index
      %c0_7 = arith.constant 0 : index
      %12 = vector.load %arg3[%c0_6, %c0_7] : memref<1x256xf32, #tpu.memory_space<vmem>>, vector<1x256xf32>
      %13 = vector.broadcast %12 : vector<1x256xf32> to vector<8x256xf32>
      %14 = arith.mulf %11, %13 : vector<8x256xf32>
      %c0_8 = arith.constant 0 : index
      %c0_9 = arith.constant 0 : index
      %15 = vector.load %arg4[%c0_8, %c0_9] : memref<1x256xf32, #tpu.memory_space<vmem>>, vector<1x256xf32>
      %16 = vector.broadcast %15 : vector<1x256xf32> to vector<8x256xf32>
      %17 = arith.addf %14, %16 : vector<8x256xf32>
      %cst = arith.constant 0.000000e+00 : f32
      %18 = vector.broadcast %cst : f32 to vector<8x256xf32>
      %19 = arith.maximumf %17, %18 : vector<8x256xf32>
      %20 = arith.truncf %19 : vector<8x256xf32> to vector<8x256xbf16>
      %c0_10 = arith.constant 0 : index
      %c0_11 = arith.constant 0 : index
      %21 = vector.load %arg14[%c0_10, %c0_11] : memref<8x256xbf16, #tpu.memory_space<vmem>>, vector<8x256xbf16>
      tpu.vector_store %arg14[%c0_10, %c0_11], %20 {strides = array<i32>} : memref<8x256xbf16, #tpu.memory_space<vmem>>, vector<8x256xbf16>,
    } else {
    }
    %c0_i32_2 = arith.constant 0 : i32
    %5 = arith.cmpi eq, %arg0, %c0_i32_2 : i32
    %6 = arith.extui %5 : i1 to i32
    %c0_i32_3 = arith.constant 0 : i32
    %7 = arith.cmpi ne, %6, %c0_i32_3 : i32
    scf.if %7 {
      %c0 = arith.constant 0 : index
      %c0_5 = arith.constant 0 : index
      %11 = vector.load %arg14[%c0, %c0_5] : memref<8x256xbf16, #tpu.memory_space<vmem>>, vector<8x256xbf16>
      %c0_6 = arith.constant 0 : index
      %c0_7 = arith.constant 0 : index
      %12 = vector.load %arg5[%c0_6, %c0_7] : memref<256x384xbf16, #tpu.memory_space<vmem>>, vector<256x384xbf16>
      %cst = arith.constant dense<0.000000e+00> : vector<8x384xf32>
      %13 = tpu.matmul %11, %12, %cst {dimension_numbers = #tpu.dot_dimension_numbers<[1], [0], [0], [1], [0, 0, 1, 1], [], []>} : vector<8x256xbf16>, vector<256x384xbf16>, vector<8x384xf32> -> vector<8x384xf32>
      %c0_8 = arith.constant 0 : index
      %c0_9 = arith.constant 0 : index
      %14 = vector.load %arg6[%c0_8, %c0_9] : memref<1x384xf32, #tpu.memory_space<vmem>>, vector<1x384xf32>
      %15 = vector.broadcast %14 : vector<1x384xf32> to vector<8x384xf32>
      %16 = arith.addf %13, %15 : vector<8x384xf32>
      %c0_10 = arith.constant 0 : index
      %c0_11 = arith.constant 0 : index
      %17 = vector.load %arg7[%c0_10, %c0_11] : memref<1x384xf32, #tpu.memory_space<vmem>>, vector<1x384xf32>
      %18 = vector.broadcast %17 : vector<1x384xf32> to vector<8x384xf32>
      %19 = arith.mulf %16, %18 : vector<8x384xf32>
      %c0_12 = arith.constant 0 : index
      %c0_13 = arith.constant 0 : index
      %20 = vector.load %arg8[%c0_12, %c0_13] : memref<1x384xf32, #tpu.memory_space<vmem>>, vector<1x384xf32>
      %21 = vector.broadcast %20 : vector<1x384xf32> to vector<8x384xf32>
      %22 = arith.addf %19, %21 : vector<8x384xf32>
      %cst_14 = arith.constant 0.000000e+00 : f32
      %23 = vector.broadcast %cst_14 : f32 to vector<8x384xf32>
      %24 = arith.maximumf %22, %23 : vector<8x384xf32>
      %25 = arith.truncf %24 : vector<8x384xf32> to vector<8x384xbf16>
      %26 = arith.index_cast %arg1 : i32 to index
      %c0_15 = arith.constant 0 : index
      %c0_16 = arith.constant 0 : index
      %27 = vector.load %arg15[%26, %c0_15, %c0_16] : memref<2x8x384xbf16, #tpu.memory_space<vmem>>, vector<1x8x384xbf16>
      %28 = vector.shape_cast %27 : vector<1x8x384xbf16> to vector<8x384xbf16>
      %29 = vector.shape_cast %25 : vector<8x384xbf16> to vector<1x8x384xbf16>
      tpu.vector_store %arg15[%26, %c0_15, %c0_16], %29 {strides = array<i32>} : memref<2x8x384xbf16, #tpu.memory_space<vmem>>, vector<1x8x384xbf16>,
      %c0_17 = arith.constant 0 : index
      %c0_18 = arith.constant 0 : index
      %30 = vector.load %arg2[%c0_17, %c0_18] : memref<8x256xf32, #tpu.memory_space<vmem>>, vector<8x256xf32>
      %31 = arith.truncf %30 : vector<8x256xf32> to vector<8x256xbf16>
      %c0_19 = arith.constant 0 : index
      %c0_20 = arith.constant 0 : index
      %32 = vector.load %arg11[%c0_19, %c0_20] : memref<256x384xbf16, #tpu.memory_space<vmem>>, vector<256x384xbf16>
      %cst_21 = arith.constant dense<0.000000e+00> : vector<8x384xf32>
      %33 = tpu.matmul %31, %32, %cst_21 {dimension_numbers = #tpu.dot_dimension_numbers<[1], [0], [0], [1], [0, 0, 1, 1], [], []>} : vector<8x256xbf16>, vector<256x384xbf16>, vector<8x384xf32> -> vector<8x384xf32>
      %c0_22 = arith.constant 0 : index
      %c0_23 = arith.constant 0 : index
      %34 = vector.load %arg12[%c0_22, %c0_23] : memref<1x384xf32, #tpu.memory_space<vmem>>, vector<1x384xf32>
      %35 = vector.broadcast %34 : vector<1x384xf32> to vector<8x384xf32>
      %36 = arith.addf %33, %35 : vector<8x384xf32>
      %37 = arith.index_cast %arg1 : i32 to index
      %c0_24 = arith.constant 0 : index
      %c0_25 = arith.constant 0 : index
      %38 = vector.load %arg16[%37, %c0_24, %c0_25] : memref<2x8x384xf32, #tpu.memory_space<vmem>>, vector<1x8x384xf32>
      %39 = vector.shape_cast %38 : vector<1x8x384xf32> to vector<8x384xf32>
      %40 = vector.shape_cast %36 : vector<8x384xf32> to vector<1x8x384xf32>
      tpu.vector_store %arg16[%37, %c0_24, %c0_25], %40 {strides = array<i32>} : memref<2x8x384xf32, #tpu.memory_space<vmem>>, vector<1x8x384xf32>,
    } else {
    }
    %c1_i32 = arith.constant 1 : i32
    %8 = arith.cmpi eq, %arg0, %c1_i32 : i32
    %9 = arith.extui %8 : i1 to i32
    %c0_i32_4 = arith.constant 0 : i32
    %10 = arith.cmpi ne, %9, %c0_i32_4 : i32
    scf.if %10 {
      %cst = arith.constant 0.000000e+00 : f32
      %11 = vector.broadcast %cst : f32 to vector<8x384xf32>
      %c0 = arith.constant 0 : index
      %c0_5 = arith.constant 0 : index
      %c0_6 = arith.constant 0 : index
      %12 = vector.load %arg15[%c0, %c0_5, %c0_6] : memref<2x8x384xbf16, #tpu.memory_space<vmem>>, vector<1x8x384xbf16>
      %13 = vector.shape_cast %12 : vector<1x8x384xbf16> to vector<8x384xbf16>
      %c0_7 = arith.constant 0 : index
      %c0_8 = arith.constant 0 : index
      %14 = vector.load %arg9[%c0_7, %c0_8] : memref<768x384xbf16, #tpu.memory_space<vmem>>, vector<384x384xbf16>
      %cst_9 = arith.constant dense<0.000000e+00> : vector<8x384xf32>
      %15 = tpu.matmul %13, %14, %cst_9 {dimension_numbers = #tpu.dot_dimension_numbers<[1], [0], [0], [1], [0, 0, 1, 1], [], []>} : vector<8x384xbf16>, vector<384x384xbf16>, vector<8x384xf32> -> vector<8x384xf32>
      %16 = arith.addf %11, %15 : vector<8x384xf32>
      %c1 = arith.constant 1 : index
      %c0_10 = arith.constant 0 : index
      %c0_11 = arith.constant 0 : index
      %17 = vector.load %arg15[%c1, %c0_10, %c0_11] : memref<2x8x384xbf16, #tpu.memory_space<vmem>>, vector<1x8x384xbf16>
      %18 = vector.shape_cast %17 : vector<1x8x384xbf16> to vector<8x384xbf16>
      %c384 = arith.constant 384 : index
      %c0_12 = arith.constant 0 : index
      %19 = vector.load %arg9[%c384, %c0_12] : memref<768x384xbf16, #tpu.memory_space<vmem>>, vector<384x384xbf16>
      %cst_13 = arith.constant dense<0.000000e+00> : vector<8x384xf32>
      %20 = tpu.matmul %18, %19, %cst_13 {dimension_numbers = #tpu.dot_dimension_numbers<[1], [0], [0], [1], [0, 0, 1, 1], [], []>} : vector<8x384xbf16>, vector<384x384xbf16>, vector<8x384xf32> -> vector<8x384xf32>
      %21 = arith.addf %16, %20 : vector<8x384xf32>
      %c0_14 = arith.constant 0 : index
      %c0_15 = arith.constant 0 : index
      %22 = vector.load %arg10[%c0_14, %c0_15] : memref<1x384xf32, #tpu.memory_space<vmem>>, vector<1x384xf32>
      %23 = vector.broadcast %22 : vector<1x384xf32> to vector<8x384xf32>
      %24 = arith.addf %21, %23 : vector<8x384xf32>
      %25 = arith.index_cast %arg1 : i32 to index
      %c0_16 = arith.constant 0 : index
      %c0_17 = arith.constant 0 : index
      %26 = vector.load %arg16[%25, %c0_16, %c0_17] : memref<2x8x384xf32, #tpu.memory_space<vmem>>, vector<1x8x384xf32>
      %27 = vector.shape_cast %26 : vector<1x8x384xf32> to vector<8x384xf32>
      %28 = arith.addf %24, %27 : vector<8x384xf32>
      %c0_18 = arith.constant 0 : index
      %c0_19 = arith.constant 0 : index
      %29 = vector.load %arg13[%c0_18, %c0_19] : memref<8x384xf32, #tpu.memory_space<vmem>>, vector<8x384xf32>
      tpu.vector_store %arg13[%c0_18, %c0_19], %28 {strides = array<i32>} : memref<8x384xf32, #tpu.memory_space<vmem>>, vector<8x384xf32>,
    } else {
    }
    return
  }
  func.func @transform_0(%arg0: i32, %arg1: i32) -> (i32, i32) {
    %c0_i32 = arith.constant 0 : i32
    %c0_i32_0 = arith.constant 0 : i32
    %c0_i32_1 = arith.constant 0 : i32
    return %c0_i32, %c0_i32_0 : i32, i32
  }
  func.func @transform_1(%arg0: i32, %arg1: i32) -> (i32, i32) {
    %c0_i32 = arith.constant 0 : i32
    %c0_i32_0 = arith.constant 0 : i32
    %c0_i32_1 = arith.constant 0 : i32
    return %c0_i32, %c0_i32_0 : i32, i32
  }
  func.func @transform_2(%arg0: i32, %arg1: i32) -> (i32, i32) {
    %c0_i32 = arith.constant 0 : i32
    %c0_i32_0 = arith.constant 0 : i32
    %c0_i32_1 = arith.constant 0 : i32
    return %c0_i32, %c0_i32_0 : i32, i32
  }
  func.func @transform_3(%arg0: i32, %arg1: i32) -> (i32, i32) {
    %c1_i32 = arith.constant 1 : i32
    %0 = arith.subi %c1_i32, %arg0 : i32
    %1 = arith.muli %arg1, %0 : i32
    %c1_i32_0 = arith.constant 1 : i32
    %2 = arith.muli %c1_i32_0, %arg0 : i32
    %3 = arith.addi %1, %2 : i32
    %c0_i32 = arith.constant 0 : i32
    %c0_i32_1 = arith.constant 0 : i32
    return %c0_i32, %3 : i32, i32
  }
  func.func @transform_4(%arg0: i32, %arg1: i32) -> (i32, i32) {
    %c1_i32 = arith.constant 1 : i32
    %0 = arith.subi %c1_i32, %arg0 : i32
    %1 = arith.muli %arg1, %0 : i32
    %c1_i32_0 = arith.constant 1 : i32
    %2 = arith.muli %c1_i32_0, %arg0 : i32
    %3 = arith.addi %1, %2 : i32
    %c0_i32 = arith.constant 0 : i32
    %c0_i32_1 = arith.constant 0 : i32
    return %c0_i32, %3 : i32, i32
  }
  func.func @transform_5(%arg0: i32, %arg1: i32) -> (i32, i32) {
    %c1_i32 = arith.constant 1 : i32
    %0 = arith.subi %c1_i32, %arg0 : i32
    %1 = arith.muli %arg1, %0 : i32
    %c1_i32_0 = arith.constant 1 : i32
    %2 = arith.muli %c1_i32_0, %arg0 : i32
    %3 = arith.addi %1, %2 : i32
    %c0_i32 = arith.constant 0 : i32
    %c0_i32_1 = arith.constant 0 : i32
    return %c0_i32, %3 : i32, i32
  }
  func.func @transform_6(%arg0: i32, %arg1: i32) -> (i32, i32) {
    %c1_i32 = arith.constant 1 : i32
    %0 = arith.subi %c1_i32, %arg0 : i32
    %1 = arith.muli %arg1, %0 : i32
    %c1_i32_0 = arith.constant 1 : i32
    %2 = arith.muli %c1_i32_0, %arg0 : i32
    %3 = arith.addi %1, %2 : i32
    %c0_i32 = arith.constant 0 : i32
    %c0_i32_1 = arith.constant 0 : i32
    return %c0_i32, %3 : i32, i32
  }
  func.func @transform_7(%arg0: i32, %arg1: i32) -> (i32, i32) {
    %0 = arith.muli %arg1, %arg0 : i32
    %c0_i32 = arith.constant 0 : i32
    %c0_i32_0 = arith.constant 0 : i32
    return %c0_i32, %0 : i32, i32
  }
  func.func @transform_8(%arg0: i32, %arg1: i32) -> (i32, i32) {
    %0 = arith.muli %arg1, %arg0 : i32
    %c0_i32 = arith.constant 0 : i32
    %c0_i32_0 = arith.constant 0 : i32
    return %c0_i32, %0 : i32, i32
  }
  func.func @transform_9(%arg0: i32, %arg1: i32) -> (i32, i32) {
    %c1_i32 = arith.constant 1 : i32
    %0 = arith.subi %c1_i32, %arg0 : i32
    %1 = arith.muli %arg1, %0 : i32
    %c1_i32_0 = arith.constant 1 : i32
    %2 = arith.muli %c1_i32_0, %arg0 : i32
    %3 = arith.addi %1, %2 : i32
    %c0_i32 = arith.constant 0 : i32
    %c0_i32_1 = arith.constant 0 : i32
    return %c0_i32, %3 : i32, i32
  }
  func.func @transform_10(%arg0: i32, %arg1: i32) -> (i32, i32) {
    %c1_i32 = arith.constant 1 : i32
    %0 = arith.subi %c1_i32, %arg0 : i32
    %1 = arith.muli %arg1, %0 : i32
    %c1_i32_0 = arith.constant 1 : i32
    %2 = arith.muli %c1_i32_0, %arg0 : i32
    %3 = arith.addi %1, %2 : i32
    %c0_i32 = arith.constant 0 : i32
    %c0_i32_1 = arith.constant 0 : i32
    return %c0_i32, %3 : i32, i32
  }
  func.func @transform_11(%arg0: i32, %arg1: i32) -> (i32, i32) {
    %0 = arith.muli %arg1, %arg0 : i32
    %c0_i32 = arith.constant 0 : i32
    %c0_i32_0 = arith.constant 0 : i32
    return %c0_i32, %0 : i32, i32
  }
}

</mosaic_0001>

<llo_original>
// kernel: residual_block_forward.1
$region0: #{residual_block_forward.1}
  #allocation0 [shape = 'u32[]', space=smem, size = 0x4, offset = 0x4, fixed_abs, tag = 'smem constant byte address 0x4 - core index']
  #allocation1 [shape = 'u32[144,128]{1,0:T(1,128)}', space=vmem, size = 0x12000, scoped, tag = 'internal scratch']
  #allocation2 [shape = 'bf16[8,256]{1,0:T(8,128)(2,1)}', space=vmem, size = 0x1000, scoped, tag = 'scratch operand']
  #allocation3 [shape = 'bf16[2,8,384]{2,1,0:T(8,128)(2,1)}', space=vmem, size = 0x3000, scoped, tag = 'scratch operand']
  #allocation4 [shape = 'f32[2,8,384]{2,1,0:T(8,128)}', space=vmem, size = 0x6000, scoped, tag = 'scratch operand']
  %s0 = inlined_call_operand.vmem [shape: f32[8,256], index: 0, kind: input, shape index: {}]
  %s1 = inlined_call_operand.vmem [shape: f32[1,256], index: 1, kind: input, shape index: {}]
  %s2 = inlined_call_operand.vmem [shape: f32[1,256], index: 2, kind: input, shape index: {}]
  %s3 = inlined_call_operand.vmem [shape: bf16[256,768], index: 3, kind: input, shape index: {}]
  %s4 = inlined_call_operand.vmem [shape: f32[1,768], index: 4, kind: input, shape index: {}]
  %s5 = inlined_call_operand.vmem [shape: f32[1,768], index: 5, kind: input, shape index: {}]
  %s6 = inlined_call_operand.vmem [shape: f32[1,768], index: 6, kind: input, shape index: {}]
  %s7 = inlined_call_operand.vmem [shape: bf16[768,768], index: 7, kind: input, shape index: {}]
  %s8 = inlined_call_operand.vmem [shape: f32[1,768], index: 8, kind: input, shape index: {}]
  %s9 = inlined_call_operand.vmem [shape: bf16[256,768], index: 9, kind: input, shape index: {}]
  %s10 = inlined_call_operand.vmem [shape: f32[1,768], index: 10, kind: input, shape index: {}]
  %s11 = inlined_call_operand.hbm [shape: f32[8,768], index: 11, kind: output, shape index: {}]
  %s12 = sld [smem:[#allocation0]]
  $region167: #{residual_block_forward.1} parent=0
    _
  %s14 = ssub.s32 1, %s12
  %s15 = scalar_select 0, %s14, %s12
  $region1: #{residual_block_forward.1} parent=0
    #allocation5 [shape = 'u8[393216]{0}', space=vmem, size = 0x60000, scoped, tag = 'input window, operand 3']
    #allocation6 [shape = 'u8[1179648]{0}', space=vmem, size = 0x120000, scoped, tag = 'input window, operand 7']
    #allocation7 [shape = 'u8[393216]{0}', space=vmem, size = 0x60000, scoped, tag = 'input window, operand 9']
    #allocation8 [shape = 'u8[24576]{0}', space=vmem, size = 0x6000, scoped, tag = 'output window, operand 0']
    #allocation9 [shape = 's32[2]{0}', space=sflag, size = 0x8, scoped, tag = 'scoped memory for residual_block_forward.1']
    %16 = vsyncpa [#allocation9], 0
    %s17 = scalar_lea.sflag [#allocation9], 1
    %18 = vsyncpa %s17, 0
    loop: start=0, step=1, limit=6
    $region2: #{residual_block_forward.1} parent=1 // loop_pre_header
      _
    $region3: #{residual_block_forward.1} parent=1 // loop_header
      %s20 = sphi 0, %s24
      %p21 = scmp.ge.s32.totalorder %s20, 6
      %s27 = sphi 0, %s39
      %s28 = sphi 0, %s35
      %s29 = sphi 0, %s27
      %s30 = sphi 0, %s28
      %s31 = sphi 0, %s29
      %s32 = sphi 0, %s30
      %s40 = sphi 0, %s40
      %s42 = sphi 0, %s40
      %s43 = sphi 0, %s42
      %s57 = sphi 0, %s43
      %s61 = sphi 0, %s61
      %s63 = sphi 0, %s61
      %s64 = sphi 0, %s63
      %s78 = sphi 0, %s64
      %s82 = sphi 0, %s82
      %s84 = sphi 0, %s82
      %s85 = sphi 0, %s84
      %s99 = sphi 0, %s85
      %s111 = sphi 0, %s113
      %s114 = sphi 0, %s111
      %s115 = sphi 0, %s114
      %s131 = sphi 0, %s115
      %s143 = sphi 0, %s145
      %s146 = sphi 0, %s143
      %s147 = sphi 0, %s146
      %s163 = sphi 0, %s147
      %s175 = sphi 0, %s177
      %s178 = sphi 0, %s175
      %s179 = sphi 0, %s178
      %s195 = sphi 0, %s179
      %s207 = sphi 0, %s209
      %s210 = sphi 0, %s207
      %s211 = sphi 0, %s210
      %s227 = sphi 0, %s211
      %s235 = sphi 0, %s237
      %s238 = sphi 0, %s235
      %s239 = sphi 0, %s238
      %s255 = sphi 0, %s239
      %s263 = sphi 0, %s265
      %s266 = sphi 0, %s263
      %s267 = sphi 0, %s266
      %s283 = sphi 0, %s267
      %s295 = sphi 0, %s297
      %s298 = sphi 0, %s295
      %s299 = sphi 0, %s298
      %s315 = sphi 0, %s299
      %s327 = sphi 0, %s329
      %s330 = sphi 0, %s327
      %s331 = sphi 0, %s330
      %s347 = sphi 0, %s331
      %s355 = sphi 0, %s357
      %s358 = sphi 0, %s355
      %s359 = sphi 0, %s358
      %s375 = sphi 0, %s359
    $region4: #{residual_block_forward.1} parent=1 // loop_header_branch
      %23 = sbr.rel (%p21) target = $region8
    $region5: #{residual_block_forward.1} parent=1 // loop_body
      %s25 = ssub.s32 %s20, 1
      %s26 = ssub.s32 %s20, 2
      %s33 = sadd.s32 1, %s28
      %p34 = scmp.ge.s32.totalorder %s33, 2
      %s35 = scalar_select %p34, 0, %s33
      %s36 = sadd.s32 1, %s27
      %s37 = scalar_select %p34, %s36, %s27
      %p38 = scmp.ge.s32.totalorder %s37, 2
      %s39 = scalar_select %p38, 0, %s37
      %s41 = sadd.s32 %s40, 1
      %p44 = scmp.eq.s32.totalorder %s20, 3
      %p45 = scmp.ne.s32.totalorder %s40, %s42
      %p46 = scmp.eq.s32.totalorder %s20, 0
      %p47 = por %p45, %p46
      %p48 = scmp.ne.s32.totalorder %s40, %s42
      %p49 = scmp.eq.s32.totalorder %s25, 3
      %p50 = por %p48, %p49
      %p51 = scmp.ne.s32.totalorder %s42, %s43
      %p52 = scmp.eq.s32.totalorder %s25, 0
      %p53 = por %p51, %p52
      %p54 = scmp.ne.s32.totalorder %s42, %s43
      %p55 = scmp.eq.s32.totalorder %s26, 3
      %p56 = por %p54, %p55
      %p58 = scmp.ne.s32.totalorder %s43, %s57
      %p59 = scmp.eq.s32.totalorder %s26, 0
      %p60 = por %p58, %p59
      %s62 = sadd.s32 %s61, 1
      %p65 = scmp.eq.s32.totalorder %s20, 3
      %p66 = scmp.ne.s32.totalorder %s61, %s63
      %p67 = scmp.eq.s32.totalorder %s20, 0
      %p68 = por %p66, %p67
      %p69 = scmp.ne.s32.totalorder %s61, %s63
      %p70 = scmp.eq.s32.totalorder %s25, 3
      %p71 = por %p69, %p70
      %p72 = scmp.ne.s32.totalorder %s63, %s64
      %p73 = scmp.eq.s32.totalorder %s25, 0
      %p74 = por %p72, %p73
      %p75 = scmp.ne.s32.totalorder %s63, %s64
      %p76 = scmp.eq.s32.totalorder %s26, 3
      %p77 = por %p75, %p76
      %p79 = scmp.ne.s32.totalorder %s64, %s78
      %p80 = scmp.eq.s32.totalorder %s26, 0
      %p81 = por %p79, %p80
      %s83 = sadd.s32 %s82, 1
      %p86 = scmp.eq.s32.totalorder %s20, 3
      %p87 = scmp.ne.s32.totalorder %s82, %s84
      %p88 = scmp.eq.s32.totalorder %s20, 0
      %p89 = por %p87, %p88
      %p90 = scmp.ne.s32.totalorder %s82, %s84
      %p91 = scmp.eq.s32.totalorder %s25, 3
      %p92 = por %p90, %p91
      %p93 = scmp.ne.s32.totalorder %s84, %s85
      %p94 = scmp.eq.s32.totalorder %s25, 0
      %p95 = por %p93, %p94
      %p96 = scmp.ne.s32.totalorder %s84, %s85
      %p97 = scmp.eq.s32.totalorder %s26, 3
      %p98 = por %p96, %p97
      %p100 = scmp.ne.s32.totalorder %s85, %s99
      %p101 = scmp.eq.s32.totalorder %s26, 0
      %p102 = por %p100, %p101
      %s103 = ssub.s32 1, %s27
      %s104 = smul.u32 %s28, %s103
      %s105 = sadd.s32 %s104, %s27
      %s106 = ssub.s32 1, %s39
      %s107 = smul.u32 %s35, %s106
      %s108 = sadd.s32 %s107, %s39
      %s109 = ssub.s32 %s105, %s108
      %p110 = scmp.eq.s32.totalorder %s109, 0
      %s112 = sadd.s32 %s111, 1
      %s113 = scalar_select %p110, %s111, %s112
      %p116 = pneg %p110
      %p117 = scmp.eq.s32.totalorder %s20, 3
      %p118 = por %p116, %p117
      %p119 = scmp.ne.s32.totalorder %s111, %s114
      %p120 = scmp.eq.s32.totalorder %s20, 0
      %p121 = por %p119, %p120
      %p122 = scmp.ne.s32.totalorder %s111, %s114
      %p123 = scmp.eq.s32.totalorder %s25, 3
      %p124 = por %p122, %p123
      %p125 = scmp.ne.s32.totalorder %s114, %s115
      %p126 = scmp.eq.s32.totalorder %s25, 0
      %p127 = por %p125, %p126
      %p128 = scmp.ne.s32.totalorder %s114, %s115
      %p129 = scmp.eq.s32.totalorder %s26, 3
      %p130 = por %p128, %p129
      %p132 = scmp.ne.s32.totalorder %s115, %s131
      %p133 = scmp.eq.s32.totalorder %s26, 0
      %p134 = por %p132, %p133
      %s135 = ssub.s32 1, %s27
      %s136 = smul.u32 %s28, %s135
      %s137 = sadd.s32 %s136, %s27
      %s138 = ssub.s32 1, %s39
      %s139 = smul.u32 %s35, %s138
      %s140 = sadd.s32 %s139, %s39
      %s141 = ssub.s32 %s137, %s140
      %p142 = scmp.eq.s32.totalorder %s141, 0
      %s144 = sadd.s32 %s143, 1
      %s145 = scalar_select %p142, %s143, %s144
      %p148 = pneg %p142
      %p149 = scmp.eq.s32.totalorder %s20, 3
      %p150 = por %p148, %p149
      %p151 = scmp.ne.s32.totalorder %s143, %s146
      %p152 = scmp.eq.s32.totalorder %s20, 0
      %p153 = por %p151, %p152
      %p154 = scmp.ne.s32.totalorder %s143, %s146
      %p155 = scmp.eq.s32.totalorder %s25, 3
      %p156 = por %p154, %p155
      %p157 = scmp.ne.s32.totalorder %s146, %s147
      %p158 = scmp.eq.s32.totalorder %s25, 0
      %p159 = por %p157, %p158
      %p160 = scmp.ne.s32.totalorder %s146, %s147
      %p161 = scmp.eq.s32.totalorder %s26, 3
      %p162 = por %p160, %p161
      %p164 = scmp.ne.s32.totalorder %s147, %s163
      %p165 = scmp.eq.s32.totalorder %s26, 0
      %p166 = por %p164, %p165
      %s167 = ssub.s32 1, %s27
      %s168 = smul.u32 %s28, %s167
      %s169 = sadd.s32 %s168, %s27
      %s170 = ssub.s32 1, %s39
      %s171 = smul.u32 %s35, %s170
      %s172 = sadd.s32 %s171, %s39
      %s173 = ssub.s32 %s169, %s172
      %p174 = scmp.eq.s32.totalorder %s173, 0
      %s176 = sadd.s32 %s175, 1
      %s177 = scalar_select %p174, %s175, %s176
      %p180 = pneg %p174
      %p181 = scmp.eq.s32.totalorder %s20, 3
      %p182 = por %p180, %p181
      %p183 = scmp.ne.s32.totalorder %s175, %s178
      %p184 = scmp.eq.s32.totalorder %s20, 0
      %p185 = por %p183, %p184
      %p186 = scmp.ne.s32.totalorder %s175, %s178
      %p187 = scmp.eq.s32.totalorder %s25, 3
      %p188 = por %p186, %p187
      %p189 = scmp.ne.s32.totalorder %s178, %s179
      %p190 = scmp.eq.s32.totalorder %s25, 0
      %p191 = por %p189, %p190
      %p192 = scmp.ne.s32.totalorder %s178, %s179
      %p193 = scmp.eq.s32.totalorder %s26, 3
      %p194 = por %p192, %p193
      %p196 = scmp.ne.s32.totalorder %s179, %s195
      %p197 = scmp.eq.s32.totalorder %s26, 0
      %p198 = por %p196, %p197
      %s199 = ssub.s32 1, %s27
      %s200 = smul.u32 %s28, %s199
      %s201 = sadd.s32 %s200, %s27
      %s202 = ssub.s32 1, %s39
      %s203 = smul.u32 %s35, %s202
      %s204 = sadd.s32 %s203, %s39
      %s205 = ssub.s32 %s201, %s204
      %p206 = scmp.eq.s32.totalorder %s205, 0
      %s208 = sadd.s32 %s207, 1
      %s209 = scalar_select %p206, %s207, %s208
      %p212 = pneg %p206
      %p213 = scmp.eq.s32.totalorder %s20, 3
      %p214 = por %p212, %p213
      %p215 = scmp.ne.s32.totalorder %s207, %s210
      %p216 = scmp.eq.s32.totalorder %s20, 0
      %p217 = por %p215, %p216
      %p218 = scmp.ne.s32.totalorder %s207, %s210
      %p219 = scmp.eq.s32.totalorder %s25, 3
      %p220 = por %p218, %p219
      %p221 = scmp.ne.s32.totalorder %s210, %s211
      %p222 = scmp.eq.s32.totalorder %s25, 0
      %p223 = por %p221, %p222
      %p224 = scmp.ne.s32.totalorder %s210, %s211
      %p225 = scmp.eq.s32.totalorder %s26, 3
      %p226 = por %p224, %p225
      %p228 = scmp.ne.s32.totalorder %s211, %s227
      %p229 = scmp.eq.s32.totalorder %s26, 0
      %p230 = por %p228, %p229
      %s231 = smul.u32 %s28, %s27
      %s232 = smul.u32 %s35, %s39
      %s233 = ssub.s32 %s231, %s232
      %p234 = scmp.eq.s32.totalorder %s233, 0
      %s236 = sadd.s32 %s235, 1
      %s237 = scalar_select %p234, %s235, %s236
      %p240 = pneg %p234
      %p241 = scmp.eq.s32.totalorder %s20, 3
      %p242 = por %p240, %p241
      %p243 = scmp.ne.s32.totalorder %s235, %s238
      %p244 = scmp.eq.s32.totalorder %s20, 0
      %p245 = por %p243, %p244
      %p246 = scmp.ne.s32.totalorder %s235, %s238
      %p247 = scmp.eq.s32.totalorder %s25, 3
      %p248 = por %p246, %p247
      %p249 = scmp.ne.s32.totalorder %s238, %s239
      %p250 = scmp.eq.s32.totalorder %s25, 0
      %p251 = por %p249, %p250
      %p252 = scmp.ne.s32.totalorder %s238, %s239
      %p253 = scmp.eq.s32.totalorder %s26, 3
      %p254 = por %p252, %p253
      %p256 = scmp.ne.s32.totalorder %s239, %s255
      %p257 = scmp.eq.s32.totalorder %s26, 0
      %p258 = por %p256, %p257
      %s259 = smul.u32 %s28, %s27
      %s260 = smul.u32 %s35, %s39
      %s261 = ssub.s32 %s259, %s260
      %p262 = scmp.eq.s32.totalorder %s261, 0
      %s264 = sadd.s32 %s263, 1
      %s265 = scalar_select %p262, %s263, %s264
      %p268 = pneg %p262
      %p269 = scmp.eq.s32.totalorder %s20, 3
      %p270 = por %p268, %p269
      %p271 = scmp.ne.s32.totalorder %s263, %s266
      %p272 = scmp.eq.s32.totalorder %s20, 0
      %p273 = por %p271, %p272
      %p274 = scmp.ne.s32.totalorder %s263, %s266
      %p275 = scmp.eq.s32.totalorder %s25, 3
      %p276 = por %p274, %p275
      %p277 = scmp.ne.s32.totalorder %s266, %s267
      %p278 = scmp.eq.s32.totalorder %s25, 0
      %p279 = por %p277, %p278
      %p280 = scmp.ne.s32.totalorder %s266, %s267
      %p281 = scmp.eq.s32.totalorder %s26, 3
      %p282 = por %p280, %p281
      %p284 = scmp.ne.s32.totalorder %s267, %s283
      %p285 = scmp.eq.s32.totalorder %s26, 0
      %p286 = por %p284, %p285
      %s287 = ssub.s32 1, %s27
      %s288 = smul.u32 %s28, %s287
      %s289 = sadd.s32 %s288, %s27
      %s290 = ssub.s32 1, %s39
      %s291 = smul.u32 %s35, %s290
      %s292 = sadd.s32 %s291, %s39
      %s293 = ssub.s32 %s289, %s292
      %p294 = scmp.eq.s32.totalorder %s293, 0
      %s296 = sadd.s32 %s295, 1
      %s297 = scalar_select %p294, %s295, %s296
      %p300 = pneg %p294
      %p301 = scmp.eq.s32.totalorder %s20, 3
      %p302 = por %p300, %p301
      %p303 = scmp.ne.s32.totalorder %s295, %s298
      %p304 = scmp.eq.s32.totalorder %s20, 0
      %p305 = por %p303, %p304
      %p306 = scmp.ne.s32.totalorder %s295, %s298
      %p307 = scmp.eq.s32.totalorder %s25, 3
      %p308 = por %p306, %p307
      %p309 = scmp.ne.s32.totalorder %s298, %s299
      %p310 = scmp.eq.s32.totalorder %s25, 0
      %p311 = por %p309, %p310
      %p312 = scmp.ne.s32.totalorder %s298, %s299
      %p313 = scmp.eq.s32.totalorder %s26, 3
      %p314 = por %p312, %p313
      %p316 = scmp.ne.s32.totalorder %s299, %s315
      %p317 = scmp.eq.s32.totalorder %s26, 0
      %p318 = por %p316, %p317
      %s319 = ssub.s32 1, %s27
      %s320 = smul.u32 %s28, %s319
      %s321 = sadd.s32 %s320, %s27
      %s322 = ssub.s32 1, %s39
      %s323 = smul.u32 %s35, %s322
      %s324 = sadd.s32 %s323, %s39
      %s325 = ssub.s32 %s321, %s324
      %p326 = scmp.eq.s32.totalorder %s325, 0
      %s328 = sadd.s32 %s327, 1
      %s329 = scalar_select %p326, %s327, %s328
      %p332 = pneg %p326
      %p333 = scmp.eq.s32.totalorder %s20, 3
      %p334 = por %p332, %p333
      %p335 = scmp.ne.s32.totalorder %s327, %s330
      %p336 = scmp.eq.s32.totalorder %s20, 0
      %p337 = por %p335, %p336
      %p338 = scmp.ne.s32.totalorder %s327, %s330
      %p339 = scmp.eq.s32.totalorder %s25, 3
      %p340 = por %p338, %p339
      %p341 = scmp.ne.s32.totalorder %s330, %s331
      %p342 = scmp.eq.s32.totalorder %s25, 0
      %p343 = por %p341, %p342
      %p344 = scmp.ne.s32.totalorder %s330, %s331
      %p345 = scmp.eq.s32.totalorder %s26, 3
      %p346 = por %p344, %p345
      %p348 = scmp.ne.s32.totalorder %s331, %s347
      %p349 = scmp.eq.s32.totalorder %s26, 0
      %p350 = por %p348, %p349
      %s351 = smul.u32 %s28, %s27
      %s352 = smul.u32 %s35, %s39
      %s353 = ssub.s32 %s351, %s352
      %p354 = scmp.eq.s32.totalorder %s353, 0
      %s356 = sadd.s32 %s355, 1
      %s357 = scalar_select %p354, %s355, %s356
      %p360 = pneg %p354
      %p361 = scmp.eq.s32.totalorder %s20, 3
      %p362 = por %p360, %p361
      %p363 = scmp.ne.s32.totalorder %s355, %s358
      %p364 = scmp.eq.s32.totalorder %s20, 0
      %p365 = por %p363, %p364
      %p366 = scmp.ne.s32.totalorder %s355, %s358
      %p367 = scmp.eq.s32.totalorder %s25, 3
      %p368 = por %p366, %p367
      %p369 = scmp.ne.s32.totalorder %s358, %s359
      %p370 = scmp.eq.s32.totalorder %s25, 0
      %p371 = por %p369, %p370
      %p372 = scmp.ne.s32.totalorder %s358, %s359
      %p373 = scmp.eq.s32.totalorder %s26, 3
      %p374 = por %p372, %p373
      %p376 = scmp.ne.s32.totalorder %s359, %s375
      %p377 = scmp.eq.s32.totalorder %s26, 0
      %p378 = por %p376, %p377
      %p379 = scmp.le.s32.totalorder 1, %s20
      %p380 = scmp.lt.s32.totalorder %s20, 5
      %p381 = pnand %p379, %p380
      %p382 = pneg %p381
      // Predicated region
      $region9: #{residual_block_forward.1} parent=5 // pred_check
        _
      $region10: #{residual_block_forward.1} parent=5 // pred_check_branch
        %384 = sbr.rel (%p381) target = $region12
      $region11: #{residual_block_forward.1} parent=5 // pred_region
        %s385 = ssub.s32 %s20, 1
        // Predicated region
        $region13: #{residual_block_forward.1} parent=11 // pred_check
          %p386 = pneg %p53
        $region14: #{residual_block_forward.1} parent=11 // pred_check_branch
          %388 = sbr.rel (%p386) target = $region16
        $region15: #{residual_block_forward.1} parent=11 // pred_region
          _
        $region16: #{residual_block_forward.1} parent=11 // pred_fallthru
          _
        // Predicated region
        $region17: #{residual_block_forward.1} parent=11 // pred_check
          %p389 = pneg %p74
        $region18: #{residual_block_forward.1} parent=11 // pred_check_branch
          %391 = sbr.rel (%p389) target = $region20
        $region19: #{residual_block_forward.1} parent=11 // pred_region
          _
        $region20: #{residual_block_forward.1} parent=11 // pred_fallthru
          _
        // Predicated region
        $region21: #{residual_block_forward.1} parent=11 // pred_check
          %p392 = pneg %p95
        $region22: #{residual_block_forward.1} parent=11 // pred_check_branch
          %394 = sbr.rel (%p392) target = $region24
        $region23: #{residual_block_forward.1} parent=11 // pred_region
          _
        $region24: #{residual_block_forward.1} parent=11 // pred_fallthru
          _
      $region12: #{residual_block_forward.1} parent=5 // pred_fallthru
        _
      %p395 = scmp.lt.s32.totalorder %s20, 4
      // Predicated region
      $region25: #{residual_block_forward.1} parent=5 // pred_check
        %p396 = pneg %p395
      $region26: #{residual_block_forward.1} parent=5 // pred_check_branch
        %398 = sbr.rel (%p396) target = $region28
      $region27: #{residual_block_forward.1} parent=5 // pred_region
        // Predicated region
        $region29: #{residual_block_forward.1} parent=27 // pred_check
          %p399 = pneg %p121
        $region30: #{residual_block_forward.1} parent=27 // pred_check_branch
          %401 = sbr.rel (%p399) target = $region32
        $region31: #{residual_block_forward.1} parent=27 // pred_region
          %s402 = sand.u32 %s111, 1
          %s403 = sand.u32 %s111, 1
          %s404 = smul.addr %s403, 384
          %s405 = scalar_lea.vmem [#allocation5], %s404
          %s406 = ssub.s32 1, %s27
          %s407 = smul.u32 %s28, %s406
          %s408 = sadd.s32 %s407, %s27
          %s409 = smul.u32 3, %s408
          %s410 = smul.addr %s409, 4
          %s411 = scalar_lea.vmem %s3, %s410
          // Predicated region
          $region33: #{residual_block_forward.1} parent=31 // pred_check
            _
          $region34: #{residual_block_forward.1} parent=31 // pred_check_branch
            %413 = sbr.rel (0) target = $region36
          $region35: #{residual_block_forward.1} parent=31 // pred_region
            // Predicated region
            $region37: #{residual_block_forward.1} parent=35 // pred_check
              _
            $region38: #{residual_block_forward.1} parent=35 // pred_check_branch
              %415 = sbr.rel (0) target = $region40
            $region39: #{residual_block_forward.1} parent=35 // pred_region
              %s416 = scalar_lea.vmem %s411, 8
              %s417 = scalar_lea.vmem %s405, 8 [#allocation5]
              loop: start=0, step=1, limit=1
              $region41: #{residual_block_forward.1} parent=39 // loop_pre_header
                _
              $region42: #{residual_block_forward.1} parent=39 // loop_header
                %s419 = sphi 0, %s423
                %p420 = scmp.ge.s32.totalorder %s419, 1
                %s424 = sphi %s411, %s411
                %s425 = sphi %s405, %s405
              $region43: #{residual_block_forward.1} parent=39 // loop_header_branch
                %422 = sbr.rel (%p420) target = $region47
              $region44: #{residual_block_forward.1} parent=39 // loop_body
                %v426 = vld [vmem:[%s424] sm:$0xff]
                %427 = vst [vmem:[%s425] sm:$0xff] %v426
                %v428 = vld [vmem:[%s424 + $0x18] sm:$0xff]
                %429 = vst [vmem:[%s425 + $0xc] sm:$0xff] %v428
                %v430 = vld [vmem:[%s424 + $0x30] sm:$0xff]
                %431 = vst [vmem:[%s425 + $0x18] sm:$0xff] %v430
                %v432 = vld [vmem:[%s424 + $0x48] sm:$0xff]
                %433 = vst [vmem:[%s425 + $0x24] sm:$0xff] %v432
                %v434 = vld [vmem:[%s424 + $0x60] sm:$0xff]
                %435 = vst [vmem:[%s425 + $0x30] sm:$0xff] %v434
                %v436 = vld [vmem:[%s424 + $0x78] sm:$0xff]
                %437 = vst [vmem:[%s425 + $0x3c] sm:$0xff] %v436
                %v438 = vld [vmem:[%s424 + $0x90] sm:$0xff]
                %439 = vst [vmem:[%s425 + $0x48] sm:$0xff] %v438
                %v440 = vld [vmem:[%s424 + $0xa8] sm:$0xff]
                %441 = vst [vmem:[%s425 + $0x54] sm:$0xff] %v440
                %v442 = vld [vmem:[%s424 + $0xc0] sm:$0xff]
                %443 = vst [vmem:[%s425 + $0x60] sm:$0xff] %v442
                %v444 = vld [vmem:[%s424 + $0xd8] sm:$0xff]
                %445 = vst [vmem:[%s425 + $0x6c] sm:$0xff] %v444
                %v446 = vld [vmem:[%s424 + $0xf0] sm:$0xff]
                %447 = vst [vmem:[%s425 + $0x78] sm:$0xff] %v446
                %v448 = vld [vmem:[%s424 + $0x108] sm:$0xff]
                %449 = vst [vmem:[%s425 + $0x84] sm:$0xff] %v448
                %v450 = vld [vmem:[%s424 + $0x120] sm:$0xff]
                %451 = vst [vmem:[%s425 + $0x90] sm:$0xff] %v450
                %v452 = vld [vmem:[%s424 + $0x138] sm:$0xff]
                %453 = vst [vmem:[%s425 + $0x9c] sm:$0xff] %v452
                %v454 = vld [vmem:[%s424 + $0x150] sm:$0xff]
                %455 = vst [vmem:[%s425 + $0xa8] sm:$0xff] %v454
                %v456 = vld [vmem:[%s424 + $0x168] sm:$0xff]
                %457 = vst [vmem:[%s425 + $0xb4] sm:$0xff] %v456
                %v458 = vld [vmem:[%s424 + $0x180] sm:$0xff]
                %459 = vst [vmem:[%s425 + $0xc0] sm:$0xff] %v458
                %v460 = vld [vmem:[%s424 + $0x198] sm:$0xff]
                %461 = vst [vmem:[%s425 + $0xcc] sm:$0xff] %v460
                %v462 = vld [vmem:[%s424 + $0x1b0] sm:$0xff]
                %463 = vst [vmem:[%s425 + $0xd8] sm:$0xff] %v462
                %v464 = vld [vmem:[%s424 + $0x1c8] sm:$0xff]
                %465 = vst [vmem:[%s425 + $0xe4] sm:$0xff] %v464
                %v466 = vld [vmem:[%s424 + $0x1e0] sm:$0xff]
                %467 = vst [vmem:[%s425 + $0xf0] sm:$0xff] %v466
                %v468 = vld [vmem:[%s424 + $0x1f8] sm:$0xff]
                %469 = vst [vmem:[%s425 + $0xfc] sm:$0xff] %v468
                %v470 = vld [vmem:[%s424 + $0x210] sm:$0xff]
                %471 = vst [vmem:[%s425 + $0x108] sm:$0xff] %v470
                %v472 = vld [vmem:[%s424 + $0x228] sm:$0xff]
                %473 = vst [vmem:[%s425 + $0x114] sm:$0xff] %v472
                %v474 = vld [vmem:[%s424 + $0x240] sm:$0xff]
                %475 = vst [vmem:[%s425 + $0x120] sm:$0xff] %v474
                %v476 = vld [vmem:[%s424 + $0x258] sm:$0xff]
                %477 = vst [vmem:[%s425 + $0x12c] sm:$0xff] %v476
                %v478 = vld [vmem:[%s424 + $0x270] sm:$0xff]
                %479 = vst [vmem:[%s425 + $0x138] sm:$0xff] %v478
                %v480 = vld [vmem:[%s424 + $0x288] sm:$0xff]
                %481 = vst [vmem:[%s425 + $0x144] sm:$0xff] %v480
                %v482 = vld [vmem:[%s424 + $0x2a0] sm:$0xff]
                %483 = vst [vmem:[%s425 + $0x150] sm:$0xff] %v482
                %v484 = vld [vmem:[%s424 + $0x2b8] sm:$0xff]
                %485 = vst [vmem:[%s425 + $0x15c] sm:$0xff] %v484
                %v486 = vld [vmem:[%s424 + $0x2d0] sm:$0xff]
                %487 = vst [vmem:[%s425 + $0x168] sm:$0xff] %v486
                %v488 = vld [vmem:[%s424 + $0x2e8] sm:$0xff]
                %489 = vst [vmem:[%s425 + $0x174] sm:$0xff] %v488
              $region45: #{residual_block_forward.1} parent=39 // loop_footer
                %s423 = sadd.s32 1, %s419
              $region46: #{residual_block_forward.1} parent=39 // loop_footer_branch
                %418 = sbr.rel target = $region42
              $region47: #{residual_block_forward.1} parent=39 // loop_exit
                _
              loop: start=0, step=1, limit=1
              $region48: #{residual_block_forward.1} parent=39 // loop_pre_header
                _
              $region49: #{residual_block_forward.1} parent=39 // loop_header
                %s492 = sphi 0, %s496
                %p493 = scmp.ge.s32.totalorder %s492, 1
                %s497 = sphi %s416, %s416
                %s498 = sphi %s417, %s417
              $region50: #{residual_block_forward.1} parent=39 // loop_header_branch
                %495 = sbr.rel (%p493) target = $region54
              $region51: #{residual_block_forward.1} parent=39 // loop_body
                %v499 = vld [vmem:[%s497] sm:$0xf]
                %500 = vst [vmem:[%s498] sm:$0xf] %v499
                %v501 = vld [vmem:[%s497 + $0x18] sm:$0xf]
                %502 = vst [vmem:[%s498 + $0xc] sm:$0xf] %v501
                %v503 = vld [vmem:[%s497 + $0x30] sm:$0xf]
                %504 = vst [vmem:[%s498 + $0x18] sm:$0xf] %v503
                %v505 = vld [vmem:[%s497 + $0x48] sm:$0xf]
                %506 = vst [vmem:[%s498 + $0x24] sm:$0xf] %v505
                %v507 = vld [vmem:[%s497 + $0x60] sm:$0xf]
                %508 = vst [vmem:[%s498 + $0x30] sm:$0xf] %v507
                %v509 = vld [vmem:[%s497 + $0x78] sm:$0xf]
                %510 = vst [vmem:[%s498 + $0x3c] sm:$0xf] %v509
                %v511 = vld [vmem:[%s497 + $0x90] sm:$0xf]
                %512 = vst [vmem:[%s498 + $0x48] sm:$0xf] %v511
                %v513 = vld [vmem:[%s497 + $0xa8] sm:$0xf]
                %514 = vst [vmem:[%s498 + $0x54] sm:$0xf] %v513
                %v515 = vld [vmem:[%s497 + $0xc0] sm:$0xf]
                %516 = vst [vmem:[%s498 + $0x60] sm:$0xf] %v515
                %v517 = vld [vmem:[%s497 + $0xd8] sm:$0xf]
                %518 = vst [vmem:[%s498 + $0x6c] sm:$0xf] %v517
                %v519 = vld [vmem:[%s497 + $0xf0] sm:$0xf]
                %520 = vst [vmem:[%s498 + $0x78] sm:$0xf] %v519
                %v521 = vld [vmem:[%s497 + $0x108] sm:$0xf]
                %522 = vst [vmem:[%s498 + $0x84] sm:$0xf] %v521
                %v523 = vld [vmem:[%s497 + $0x120] sm:$0xf]
                %524 = vst [vmem:[%s498 + $0x90] sm:$0xf] %v523
                %v525 = vld [vmem:[%s497 + $0x138] sm:$0xf]
                %526 = vst [vmem:[%s498 + $0x9c] sm:$0xf] %v525
                %v527 = vld [vmem:[%s497 + $0x150] sm:$0xf]
                %528 = vst [vmem:[%s498 + $0xa8] sm:$0xf] %v527
                %v529 = vld [vmem:[%s497 + $0x168] sm:$0xf]
                %530 = vst [vmem:[%s498 + $0xb4] sm:$0xf] %v529
                %v531 = vld [vmem:[%s497 + $0x180] sm:$0xf]
                %532 = vst [vmem:[%s498 + $0xc0] sm:$0xf] %v531
                %v533 = vld [vmem:[%s497 + $0x198] sm:$0xf]
                %534 = vst [vmem:[%s498 + $0xcc] sm:$0xf] %v533
                %v535 = vld [vmem:[%s497 + $0x1b0] sm:$0xf]
                %536 = vst [vmem:[%s498 + $0xd8] sm:$0xf] %v535
                %v537 = vld [vmem:[%s497 + $0x1c8] sm:$0xf]
                %538 = vst [vmem:[%s498 + $0xe4] sm:$0xf] %v537
                %v539 = vld [vmem:[%s497 + $0x1e0] sm:$0xf]
                %540 = vst [vmem:[%s498 + $0xf0] sm:$0xf] %v539
                %v541 = vld [vmem:[%s497 + $0x1f8] sm:$0xf]
                %542 = vst [vmem:[%s498 + $0xfc] sm:$0xf] %v541
                %v543 = vld [vmem:[%s497 + $0x210] sm:$0xf]
                %544 = vst [vmem:[%s498 + $0x108] sm:$0xf] %v543
                %v545 = vld [vmem:[%s497 + $0x228] sm:$0xf]
                %546 = vst [vmem:[%s498 + $0x114] sm:$0xf] %v545
                %v547 = vld [vmem:[%s497 + $0x240] sm:$0xf]
                %548 = vst [vmem:[%s498 + $0x120] sm:$0xf] %v547
                %v549 = vld [vmem:[%s497 + $0x258] sm:$0xf]
                %550 = vst [vmem:[%s498 + $0x12c] sm:$0xf] %v549
                %v551 = vld [vmem:[%s497 + $0x270] sm:$0xf]
                %552 = vst [vmem:[%s498 + $0x138] sm:$0xf] %v551
                %v553 = vld [vmem:[%s497 + $0x288] sm:$0xf]
                %554 = vst [vmem:[%s498 + $0x144] sm:$0xf] %v553
                %v555 = vld [vmem:[%s497 + $0x2a0] sm:$0xf]
                %556 = vst [vmem:[%s498 + $0x150] sm:$0xf] %v555
                %v557 = vld [vmem:[%s497 + $0x2b8] sm:$0xf]
                %558 = vst [vmem:[%s498 + $0x15c] sm:$0xf] %v557
                %v559 = vld [vmem:[%s497 + $0x2d0] sm:$0xf]
                %560 = vst [vmem:[%s498 + $0x168] sm:$0xf] %v559
                %v561 = vld [vmem:[%s497 + $0x2e8] sm:$0xf]
                %562 = vst [vmem:[%s498 + $0x174] sm:$0xf] %v561
              $region52: #{residual_block_forward.1} parent=39 // loop_footer
                %s496 = sadd.s32 1, %s492
              $region53: #{residual_block_forward.1} parent=39 // loop_footer_branch
                %491 = sbr.rel target = $region49
              $region54: #{residual_block_forward.1} parent=39 // loop_exit
                _
            $region40: #{residual_block_forward.1} parent=35 // pred_fallthru
              _
          $region36: #{residual_block_forward.1} parent=31 // pred_fallthru
            _
          %563 = vnop
        $region32: #{residual_block_forward.1} parent=27 // pred_fallthru
          _
        // Predicated region
        $region55: #{residual_block_forward.1} parent=27 // pred_check
          %p564 = pneg %p153
        $region56: #{residual_block_forward.1} parent=27 // pred_check_branch
          %566 = sbr.rel (%p564) target = $region58
        $region57: #{residual_block_forward.1} parent=27 // pred_region
          %s567 = ssub.s32 1, %s27
          %s568 = smul.u32 %s28, %s567
          %s569 = sadd.s32 %s568, %s27
          %s570 = smul.u32 3, %s569
          %p571 = scmp.lt.s32.totalorder %s570, 5
          %s572 = scalar_select %p571, %s570, 5
          %s573 = scalar_lea.vmem %s4, %s572
          %s574 = ssub.s32 1, %s27
          %s575 = smul.u32 %s28, %s574
          %s576 = sadd.s32 %s575, %s27
          %s577 = smul.u32 3, %s576
        $region58: #{residual_block_forward.1} parent=27 // pred_fallthru
          _
        // Predicated region
        $region59: #{residual_block_forward.1} parent=27 // pred_check
          %p578 = pneg %p185
        $region60: #{residual_block_forward.1} parent=27 // pred_check_branch
          %580 = sbr.rel (%p578) target = $region62
        $region61: #{residual_block_forward.1} parent=27 // pred_region
          %s581 = ssub.s32 1, %s27
          %s582 = smul.u32 %s28, %s581
          %s583 = sadd.s32 %s582, %s27
          %s584 = smul.u32 3, %s583
          %p585 = scmp.lt.s32.totalorder %s584, 5
          %s586 = scalar_select %p585, %s584, 5
          %s587 = scalar_lea.vmem %s5, %s586
          %s588 = ssub.s32 1, %s27
          %s589 = smul.u32 %s28, %s588
          %s590 = sadd.s32 %s589, %s27
          %s591 = smul.u32 3, %s590
        $region62: #{residual_block_forward.1} parent=27 // pred_fallthru
          _
        // Predicated region
        $region63: #{residual_block_forward.1} parent=27 // pred_check
          %p592 = pneg %p217
        $region64: #{residual_block_forward.1} parent=27 // pred_check_branch
          %594 = sbr.rel (%p592) target = $region66
        $region65: #{residual_block_forward.1} parent=27 // pred_region
          %s595 = ssub.s32 1, %s27
          %s596 = smul.u32 %s28, %s595
          %s597 = sadd.s32 %s596, %s27
          %s598 = smul.u32 3, %s597
          %p599 = scmp.lt.s32.totalorder %s598, 5
          %s600 = scalar_select %p599, %s598, 5
          %s601 = scalar_lea.vmem %s6, %s600
          %s602 = ssub.s32 1, %s27
          %s603 = smul.u32 %s28, %s602
          %s604 = sadd.s32 %s603, %s27
          %s605 = smul.u32 3, %s604
        $region66: #{residual_block_forward.1} parent=27 // pred_fallthru
          _
        // Predicated region
        $region67: #{residual_block_forward.1} parent=27 // pred_check
          %p606 = pneg %p245
        $region68: #{residual_block_forward.1} parent=27 // pred_check_branch
          %608 = sbr.rel (%p606) target = $region70
        $region69: #{residual_block_forward.1} parent=27 // pred_region
          %s609 = sand.u32 %s235, 1
          %s610 = sand.u32 %s235, 1
          %s611 = smul.addr %s610, 1152
          %s612 = scalar_lea.vmem [#allocation6], %s611
          %s613 = smul.u32 %s28, %s27
          %s614 = smul.u32 3, %s613
          %s615 = smul.addr %s614, 4
          %s616 = scalar_lea.vmem %s7, %s615
          // Predicated region
          $region71: #{residual_block_forward.1} parent=69 // pred_check
            _
          $region72: #{residual_block_forward.1} parent=69 // pred_check_branch
            %618 = sbr.rel (0) target = $region74
          $region73: #{residual_block_forward.1} parent=69 // pred_region
            // Predicated region
            $region75: #{residual_block_forward.1} parent=73 // pred_check
              _
            $region76: #{residual_block_forward.1} parent=73 // pred_check_branch
              %620 = sbr.rel (0) target = $region78
            $region77: #{residual_block_forward.1} parent=73 // pred_region
              %s621 = scalar_lea.vmem %s616, 8
              %s622 = scalar_lea.vmem %s612, 8 [#allocation6]
              loop: start=0, step=1, limit=1
              $region79: #{residual_block_forward.1} parent=77 // loop_pre_header
                _
              $region80: #{residual_block_forward.1} parent=77 // loop_header
                %s624 = sphi 0, %s628
                %p625 = scmp.ge.s32.totalorder %s624, 1
                %s629 = sphi %s616, %s616
                %s630 = sphi %s612, %s612
              $region81: #{residual_block_forward.1} parent=77 // loop_header_branch
                %627 = sbr.rel (%p625) target = $region85
              $region82: #{residual_block_forward.1} parent=77 // loop_body
                %v631 = vld [vmem:[%s629] sm:$0xff]
                %632 = vst [vmem:[%s630] sm:$0xff] %v631
                %v633 = vld [vmem:[%s629 + $0x18] sm:$0xff]
                %634 = vst [vmem:[%s630 + $0xc] sm:$0xff] %v633
                %v635 = vld [vmem:[%s629 + $0x30] sm:$0xff]
                %636 = vst [vmem:[%s630 + $0x18] sm:$0xff] %v635
                %v637 = vld [vmem:[%s629 + $0x48] sm:$0xff]
                %638 = vst [vmem:[%s630 + $0x24] sm:$0xff] %v637
                %v639 = vld [vmem:[%s629 + $0x60] sm:$0xff]
                %640 = vst [vmem:[%s630 + $0x30] sm:$0xff] %v639
                %v641 = vld [vmem:[%s629 + $0x78] sm:$0xff]
                %642 = vst [vmem:[%s630 + $0x3c] sm:$0xff] %v641
                %v643 = vld [vmem:[%s629 + $0x90] sm:$0xff]
                %644 = vst [vmem:[%s630 + $0x48] sm:$0xff] %v643
                %v645 = vld [vmem:[%s629 + $0xa8] sm:$0xff]
                %646 = vst [vmem:[%s630 + $0x54] sm:$0xff] %v645
                %v647 = vld [vmem:[%s629 + $0xc0] sm:$0xff]
                %648 = vst [vmem:[%s630 + $0x60] sm:$0xff] %v647
                %v649 = vld [vmem:[%s629 + $0xd8] sm:$0xff]
                %650 = vst [vmem:[%s630 + $0x6c] sm:$0xff] %v649
                %v651 = vld [vmem:[%s629 + $0xf0] sm:$0xff]
                %652 = vst [vmem:[%s630 + $0x78] sm:$0xff] %v651
                %v653 = vld [vmem:[%s629 + $0x108] sm:$0xff]
                %654 = vst [vmem:[%s630 + $0x84] sm:$0xff] %v653
                %v655 = vld [vmem:[%s629 + $0x120] sm:$0xff]
                %656 = vst [vmem:[%s630 + $0x90] sm:$0xff] %v655
                %v657 = vld [vmem:[%s629 + $0x138] sm:$0xff]
                %658 = vst [vmem:[%s630 + $0x9c] sm:$0xff] %v657
                %v659 = vld [vmem:[%s629 + $0x150] sm:$0xff]
                %660 = vst [vmem:[%s630 + $0xa8] sm:$0xff] %v659
                %v661 = vld [vmem:[%s629 + $0x168] sm:$0xff]
                %662 = vst [vmem:[%s630 + $0xb4] sm:$0xff] %v661
                %v663 = vld [vmem:[%s629 + $0x180] sm:$0xff]
                %664 = vst [vmem:[%s630 + $0xc0] sm:$0xff] %v663
                %v665 = vld [vmem:[%s629 + $0x198] sm:$0xff]
                %666 = vst [vmem:[%s630 + $0xcc] sm:$0xff] %v665
                %v667 = vld [vmem:[%s629 + $0x1b0] sm:$0xff]
                %668 = vst [vmem:[%s630 + $0xd8] sm:$0xff] %v667
                %v669 = vld [vmem:[%s629 + $0x1c8] sm:$0xff]
                %670 = vst [vmem:[%s630 + $0xe4] sm:$0xff] %v669
                %v671 = vld [vmem:[%s629 + $0x1e0] sm:$0xff]
                %672 = vst [vmem:[%s630 + $0xf0] sm:$0xff] %v671
                %v673 = vld [vmem:[%s629 + $0x1f8] sm:$0xff]
                %674 = vst [vmem:[%s630 + $0xfc] sm:$0xff] %v673
                %v675 = vld [vmem:[%s629 + $0x210] sm:$0xff]
                %676 = vst [vmem:[%s630 + $0x108] sm:$0xff] %v675
                %v677 = vld [vmem:[%s629 + $0x228] sm:$0xff]
                %678 = vst [vmem:[%s630 + $0x114] sm:$0xff] %v677
                %v679 = vld [vmem:[%s629 + $0x240] sm:$0xff]
                %680 = vst [vmem:[%s630 + $0x120] sm:$0xff] %v679
                %v681 = vld [vmem:[%s629 + $0x258] sm:$0xff]
                %682 = vst [vmem:[%s630 + $0x12c] sm:$0xff] %v681
                %v683 = vld [vmem:[%s629 + $0x270] sm:$0xff]
                %684 = vst [vmem:[%s630 + $0x138] sm:$0xff] %v683
                %v685 = vld [vmem:[%s629 + $0x288] sm:$0xff]
                %686 = vst [vmem:[%s630 + $0x144] sm:$0xff] %v685
                %v687 = vld [vmem:[%s629 + $0x2a0] sm:$0xff]
                %688 = vst [vmem:[%s630 + $0x150] sm:$0xff] %v687
                %v689 = vld [vmem:[%s629 + $0x2b8] sm:$0xff]
                %690 = vst [vmem:[%s630 + $0x15c] sm:$0xff] %v689
                %v691 = vld [vmem:[%s629 + $0x2d0] sm:$0xff]
                %692 = vst [vmem:[%s630 + $0x168] sm:$0xff] %v691
                %v693 = vld [vmem:[%s629 + $0x2e8] sm:$0xff]
                %694 = vst [vmem:[%s630 + $0x174] sm:$0xff] %v693
                %v695 = vld [vmem:[%s629 + $0x300] sm:$0xff]
                %696 = vst [vmem:[%s630 + $0x180] sm:$0xff] %v695
                %v697 = vld [vmem:[%s629 + $0x318] sm:$0xff]
                %698 = vst [vmem:[%s630 + $0x18c] sm:$0xff] %v697
                %v699 = vld [vmem:[%s629 + $0x330] sm:$0xff]
                %700 = vst [vmem:[%s630 + $0x198] sm:$0xff] %v699
                %v701 = vld [vmem:[%s629 + $0x348] sm:$0xff]
                %702 = vst [vmem:[%s630 + $0x1a4] sm:$0xff] %v701
                %v703 = vld [vmem:[%s629 + $0x360] sm:$0xff]
                %704 = vst [vmem:[%s630 + $0x1b0] sm:$0xff] %v703
                %v705 = vld [vmem:[%s629 + $0x378] sm:$0xff]
                %706 = vst [vmem:[%s630 + $0x1bc] sm:$0xff] %v705
                %v707 = vld [vmem:[%s629 + $0x390] sm:$0xff]
                %708 = vst [vmem:[%s630 + $0x1c8] sm:$0xff] %v707
                %v709 = vld [vmem:[%s629 + $0x3a8] sm:$0xff]
                %710 = vst [vmem:[%s630 + $0x1d4] sm:$0xff] %v709
                %v711 = vld [vmem:[%s629 + $0x3c0] sm:$0xff]
                %712 = vst [vmem:[%s630 + $0x1e0] sm:$0xff] %v711
                %v713 = vld [vmem:[%s629 + $0x3d8] sm:$0xff]
                %714 = vst [vmem:[%s630 + $0x1ec] sm:$0xff] %v713
                %v715 = vld [vmem:[%s629 + $0x3f0] sm:$0xff]
                %716 = vst [vmem:[%s630 + $0x1f8] sm:$0xff] %v715
                %v717 = vld [vmem:[%s629 + $0x408] sm:$0xff]
                %718 = vst [vmem:[%s630 + $0x204] sm:$0xff] %v717
                %v719 = vld [vmem:[%s629 + $0x420] sm:$0xff]
                %720 = vst [vmem:[%s630 + $0x210] sm:$0xff] %v719
                %v721 = vld [vmem:[%s629 + $0x438] sm:$0xff]
                %722 = vst [vmem:[%s630 + $0x21c] sm:$0xff] %v721
                %v723 = vld [vmem:[%s629 + $0x450] sm:$0xff]
                %724 = vst [vmem:[%s630 + $0x228] sm:$0xff] %v723
                %v725 = vld [vmem:[%s629 + $0x468] sm:$0xff]
                %726 = vst [vmem:[%s630 + $0x234] sm:$0xff] %v725
                %v727 = vld [vmem:[%s629 + $0x480] sm:$0xff]
                %728 = vst [vmem:[%s630 + $0x240] sm:$0xff] %v727
                %v729 = vld [vmem:[%s629 + $0x498] sm:$0xff]
                %730 = vst [vmem:[%s630 + $0x24c] sm:$0xff] %v729
                %v731 = vld [vmem:[%s629 + $0x4b0] sm:$0xff]
                %732 = vst [vmem:[%s630 + $0x258] sm:$0xff] %v731
                %v733 = vld [vmem:[%s629 + $0x4c8] sm:$0xff]
                %734 = vst [vmem:[%s630 + $0x264] sm:$0xff] %v733
                %v735 = vld [vmem:[%s629 + $0x4e0] sm:$0xff]
                %736 = vst [vmem:[%s630 + $0x270] sm:$0xff] %v735
                %v737 = vld [vmem:[%s629 + $0x4f8] sm:$0xff]
                %738 = vst [vmem:[%s630 + $0x27c] sm:$0xff] %v737
                %v739 = vld [vmem:[%s629 + $0x510] sm:$0xff]
                %740 = vst [vmem:[%s630 + $0x288] sm:$0xff] %v739
                %v741 = vld [vmem:[%s629 + $0x528] sm:$0xff]
                %742 = vst [vmem:[%s630 + $0x294] sm:$0xff] %v741
                %v743 = vld [vmem:[%s629 + $0x540] sm:$0xff]
                %744 = vst [vmem:[%s630 + $0x2a0] sm:$0xff] %v743
                %v745 = vld [vmem:[%s629 + $0x558] sm:$0xff]
                %746 = vst [vmem:[%s630 + $0x2ac] sm:$0xff] %v745
                %v747 = vld [vmem:[%s629 + $0x570] sm:$0xff]
                %748 = vst [vmem:[%s630 + $0x2b8] sm:$0xff] %v747
                %v749 = vld [vmem:[%s629 + $0x588] sm:$0xff]
                %750 = vst [vmem:[%s630 + $0x2c4] sm:$0xff] %v749
                %v751 = vld [vmem:[%s629 + $0x5a0] sm:$0xff]
                %752 = vst [vmem:[%s630 + $0x2d0] sm:$0xff] %v751
                %v753 = vld [vmem:[%s629 + $0x5b8] sm:$0xff]
                %754 = vst [vmem:[%s630 + $0x2dc] sm:$0xff] %v753
                %v755 = vld [vmem:[%s629 + $0x5d0] sm:$0xff]
                %756 = vst [vmem:[%s630 + $0x2e8] sm:$0xff] %v755
                %v757 = vld [vmem:[%s629 + $0x5e8] sm:$0xff]
                %758 = vst [vmem:[%s630 + $0x2f4] sm:$0xff] %v757
                %v759 = vld [vmem:[%s629 + $0x600] sm:$0xff]
                %760 = vst [vmem:[%s630 + $0x300] sm:$0xff] %v759
                %v761 = vld [vmem:[%s629 + $0x618] sm:$0xff]
                %762 = vst [vmem:[%s630 + $0x30c] sm:$0xff] %v761
                %v763 = vld [vmem:[%s629 + $0x630] sm:$0xff]
                %764 = vst [vmem:[%s630 + $0x318] sm:$0xff] %v763
                %v765 = vld [vmem:[%s629 + $0x648] sm:$0xff]
                %766 = vst [vmem:[%s630 + $0x324] sm:$0xff] %v765
                %v767 = vld [vmem:[%s629 + $0x660] sm:$0xff]
                %768 = vst [vmem:[%s630 + $0x330] sm:$0xff] %v767
                %v769 = vld [vmem:[%s629 + $0x678] sm:$0xff]
                %770 = vst [vmem:[%s630 + $0x33c] sm:$0xff] %v769
                %v771 = vld [vmem:[%s629 + $0x690] sm:$0xff]
                %772 = vst [vmem:[%s630 + $0x348] sm:$0xff] %v771
                %v773 = vld [vmem:[%s629 + $0x6a8] sm:$0xff]
                %774 = vst [vmem:[%s630 + $0x354] sm:$0xff] %v773
                %v775 = vld [vmem:[%s629 + $0x6c0] sm:$0xff]
                %776 = vst [vmem:[%s630 + $0x360] sm:$0xff] %v775
                %v777 = vld [vmem:[%s629 + $0x6d8] sm:$0xff]
                %778 = vst [vmem:[%s630 + $0x36c] sm:$0xff] %v777
                %v779 = vld [vmem:[%s629 + $0x6f0] sm:$0xff]
                %780 = vst [vmem:[%s630 + $0x378] sm:$0xff] %v779
                %v781 = vld [vmem:[%s629 + $0x708] sm:$0xff]
                %782 = vst [vmem:[%s630 + $0x384] sm:$0xff] %v781
                %v783 = vld [vmem:[%s629 + $0x720] sm:$0xff]
                %784 = vst [vmem:[%s630 + $0x390] sm:$0xff] %v783
                %v785 = vld [vmem:[%s629 + $0x738] sm:$0xff]
                %786 = vst [vmem:[%s630 + $0x39c] sm:$0xff] %v785
                %v787 = vld [vmem:[%s629 + $0x750] sm:$0xff]
                %788 = vst [vmem:[%s630 + $0x3a8] sm:$0xff] %v787
                %v789 = vld [vmem:[%s629 + $0x768] sm:$0xff]
                %790 = vst [vmem:[%s630 + $0x3b4] sm:$0xff] %v789
                %v791 = vld [vmem:[%s629 + $0x780] sm:$0xff]
                %792 = vst [vmem:[%s630 + $0x3c0] sm:$0xff] %v791
                %v793 = vld [vmem:[%s629 + $0x798] sm:$0xff]
                %794 = vst [vmem:[%s630 + $0x3cc] sm:$0xff] %v793
                %v795 = vld [vmem:[%s629 + $0x7b0] sm:$0xff]
                %796 = vst [vmem:[%s630 + $0x3d8] sm:$0xff] %v795
                %v797 = vld [vmem:[%s629 + $0x7c8] sm:$0xff]
                %798 = vst [vmem:[%s630 + $0x3e4] sm:$0xff] %v797
                %v799 = vld [vmem:[%s629 + $0x7e0] sm:$0xff]
                %800 = vst [vmem:[%s630 + $0x3f0] sm:$0xff] %v799
                %v801 = vld [vmem:[%s629 + $0x7f8] sm:$0xff]
                %802 = vst [vmem:[%s630 + $0x3fc] sm:$0xff] %v801
                %v803 = vld [vmem:[%s629 + $0x810] sm:$0xff]
                %804 = vst [vmem:[%s630 + $0x408] sm:$0xff] %v803
                %v805 = vld [vmem:[%s629 + $0x828] sm:$0xff]
                %806 = vst [vmem:[%s630 + $0x414] sm:$0xff] %v805
                %v807 = vld [vmem:[%s629 + $0x840] sm:$0xff]
                %808 = vst [vmem:[%s630 + $0x420] sm:$0xff] %v807
                %v809 = vld [vmem:[%s629 + $0x858] sm:$0xff]
                %810 = vst [vmem:[%s630 + $0x42c] sm:$0xff] %v809
                %v811 = vld [vmem:[%s629 + $0x870] sm:$0xff]
                %812 = vst [vmem:[%s630 + $0x438] sm:$0xff] %v811
                %v813 = vld [vmem:[%s629 + $0x888] sm:$0xff]
                %814 = vst [vmem:[%s630 + $0x444] sm:$0xff] %v813
                %v815 = vld [vmem:[%s629 + $0x8a0] sm:$0xff]
                %816 = vst [vmem:[%s630 + $0x450] sm:$0xff] %v815
                %v817 = vld [vmem:[%s629 + $0x8b8] sm:$0xff]
                %818 = vst [vmem:[%s630 + $0x45c] sm:$0xff] %v817
                %v819 = vld [vmem:[%s629 + $0x8d0] sm:$0xff]
                %820 = vst [vmem:[%s630 + $0x468] sm:$0xff] %v819
                %v821 = vld [vmem:[%s629 + $0x8e8] sm:$0xff]
                %822 = vst [vmem:[%s630 + $0x474] sm:$0xff] %v821
              $region83: #{residual_block_forward.1} parent=77 // loop_footer
                %s628 = sadd.s32 1, %s624
              $region84: #{residual_block_forward.1} parent=77 // loop_footer_branch
                %623 = sbr.rel target = $region80
              $region85: #{residual_block_forward.1} parent=77 // loop_exit
                _
              loop: start=0, step=1, limit=1
              $region86: #{residual_block_forward.1} parent=77 // loop_pre_header
                _
              $region87: #{residual_block_forward.1} parent=77 // loop_header
                %s825 = sphi 0, %s829
                %p826 = scmp.ge.s32.totalorder %s825, 1
                %s830 = sphi %s621, %s621
                %s831 = sphi %s622, %s622
              $region88: #{residual_block_forward.1} parent=77 // loop_header_branch
                %828 = sbr.rel (%p826) target = $region92
              $region89: #{residual_block_forward.1} parent=77 // loop_body
                %v832 = vld [vmem:[%s830] sm:$0xf]
                %833 = vst [vmem:[%s831] sm:$0xf] %v832
                %v834 = vld [vmem:[%s830 + $0x18] sm:$0xf]
                %835 = vst [vmem:[%s831 + $0xc] sm:$0xf] %v834
                %v836 = vld [vmem:[%s830 + $0x30] sm:$0xf]
                %837 = vst [vmem:[%s831 + $0x18] sm:$0xf] %v836
                %v838 = vld [vmem:[%s830 + $0x48] sm:$0xf]
                %839 = vst [vmem:[%s831 + $0x24] sm:$0xf] %v838
                %v840 = vld [vmem:[%s830 + $0x60] sm:$0xf]
                %841 = vst [vmem:[%s831 + $0x30] sm:$0xf] %v840
                %v842 = vld [vmem:[%s830 + $0x78] sm:$0xf]
                %843 = vst [vmem:[%s831 + $0x3c] sm:$0xf] %v842
                %v844 = vld [vmem:[%s830 + $0x90] sm:$0xf]
                %845 = vst [vmem:[%s831 + $0x48] sm:$0xf] %v844
                %v846 = vld [vmem:[%s830 + $0xa8] sm:$0xf]
                %847 = vst [vmem:[%s831 + $0x54] sm:$0xf] %v846
                %v848 = vld [vmem:[%s830 + $0xc0] sm:$0xf]
                %849 = vst [vmem:[%s831 + $0x60] sm:$0xf] %v848
                %v850 = vld [vmem:[%s830 + $0xd8] sm:$0xf]
                %851 = vst [vmem:[%s831 + $0x6c] sm:$0xf] %v850
                %v852 = vld [vmem:[%s830 + $0xf0] sm:$0xf]
                %853 = vst [vmem:[%s831 + $0x78] sm:$0xf] %v852
                %v854 = vld [vmem:[%s830 + $0x108] sm:$0xf]
                %855 = vst [vmem:[%s831 + $0x84] sm:$0xf] %v854
                %v856 = vld [vmem:[%s830 + $0x120] sm:$0xf]
                %857 = vst [vmem:[%s831 + $0x90] sm:$0xf] %v856
                %v858 = vld [vmem:[%s830 + $0x138] sm:$0xf]
                %859 = vst [vmem:[%s831 + $0x9c] sm:$0xf] %v858
                %v860 = vld [vmem:[%s830 + $0x150] sm:$0xf]
                %861 = vst [vmem:[%s831 + $0xa8] sm:$0xf] %v860
                %v862 = vld [vmem:[%s830 + $0x168] sm:$0xf]
                %863 = vst [vmem:[%s831 + $0xb4] sm:$0xf] %v862
                %v864 = vld [vmem:[%s830 + $0x180] sm:$0xf]
                %865 = vst [vmem:[%s831 + $0xc0] sm:$0xf] %v864
                %v866 = vld [vmem:[%s830 + $0x198] sm:$0xf]
                %867 = vst [vmem:[%s831 + $0xcc] sm:$0xf] %v866
                %v868 = vld [vmem:[%s830 + $0x1b0] sm:$0xf]
                %869 = vst [vmem:[%s831 + $0xd8] sm:$0xf] %v868
                %v870 = vld [vmem:[%s830 + $0x1c8] sm:$0xf]
                %871 = vst [vmem:[%s831 + $0xe4] sm:$0xf] %v870
                %v872 = vld [vmem:[%s830 + $0x1e0] sm:$0xf]
                %873 = vst [vmem:[%s831 + $0xf0] sm:$0xf] %v872
                %v874 = vld [vmem:[%s830 + $0x1f8] sm:$0xf]
                %875 = vst [vmem:[%s831 + $0xfc] sm:$0xf] %v874
                %v876 = vld [vmem:[%s830 + $0x210] sm:$0xf]
                %877 = vst [vmem:[%s831 + $0x108] sm:$0xf] %v876
                %v878 = vld [vmem:[%s830 + $0x228] sm:$0xf]
                %879 = vst [vmem:[%s831 + $0x114] sm:$0xf] %v878
                %v880 = vld [vmem:[%s830 + $0x240] sm:$0xf]
                %881 = vst [vmem:[%s831 + $0x120] sm:$0xf] %v880
                %v882 = vld [vmem:[%s830 + $0x258] sm:$0xf]
                %883 = vst [vmem:[%s831 + $0x12c] sm:$0xf] %v882
                %v884 = vld [vmem:[%s830 + $0x270] sm:$0xf]
                %885 = vst [vmem:[%s831 + $0x138] sm:$0xf] %v884
                %v886 = vld [vmem:[%s830 + $0x288] sm:$0xf]
                %887 = vst [vmem:[%s831 + $0x144] sm:$0xf] %v886
                %v888 = vld [vmem:[%s830 + $0x2a0] sm:$0xf]
                %889 = vst [vmem:[%s831 + $0x150] sm:$0xf] %v888
                %v890 = vld [vmem:[%s830 + $0x2b8] sm:$0xf]
                %891 = vst [vmem:[%s831 + $0x15c] sm:$0xf] %v890
                %v892 = vld [vmem:[%s830 + $0x2d0] sm:$0xf]
                %893 = vst [vmem:[%s831 + $0x168] sm:$0xf] %v892
                %v894 = vld [vmem:[%s830 + $0x2e8] sm:$0xf]
                %895 = vst [vmem:[%s831 + $0x174] sm:$0xf] %v894
                %v896 = vld [vmem:[%s830 + $0x300] sm:$0xf]
                %897 = vst [vmem:[%s831 + $0x180] sm:$0xf] %v896
                %v898 = vld [vmem:[%s830 + $0x318] sm:$0xf]
                %899 = vst [vmem:[%s831 + $0x18c] sm:$0xf] %v898
                %v900 = vld [vmem:[%s830 + $0x330] sm:$0xf]
                %901 = vst [vmem:[%s831 + $0x198] sm:$0xf] %v900
                %v902 = vld [vmem:[%s830 + $0x348] sm:$0xf]
                %903 = vst [vmem:[%s831 + $0x1a4] sm:$0xf] %v902
                %v904 = vld [vmem:[%s830 + $0x360] sm:$0xf]
                %905 = vst [vmem:[%s831 + $0x1b0] sm:$0xf] %v904
                %v906 = vld [vmem:[%s830 + $0x378] sm:$0xf]
                %907 = vst [vmem:[%s831 + $0x1bc] sm:$0xf] %v906
                %v908 = vld [vmem:[%s830 + $0x390] sm:$0xf]
                %909 = vst [vmem:[%s831 + $0x1c8] sm:$0xf] %v908
                %v910 = vld [vmem:[%s830 + $0x3a8] sm:$0xf]
                %911 = vst [vmem:[%s831 + $0x1d4] sm:$0xf] %v910
                %v912 = vld [vmem:[%s830 + $0x3c0] sm:$0xf]
                %913 = vst [vmem:[%s831 + $0x1e0] sm:$0xf] %v912
                %v914 = vld [vmem:[%s830 + $0x3d8] sm:$0xf]
                %915 = vst [vmem:[%s831 + $0x1ec] sm:$0xf] %v914
                %v916 = vld [vmem:[%s830 + $0x3f0] sm:$0xf]
                %917 = vst [vmem:[%s831 + $0x1f8] sm:$0xf] %v916
                %v918 = vld [vmem:[%s830 + $0x408] sm:$0xf]
                %919 = vst [vmem:[%s831 + $0x204] sm:$0xf] %v918
                %v920 = vld [vmem:[%s830 + $0x420] sm:$0xf]
                %921 = vst [vmem:[%s831 + $0x210] sm:$0xf] %v920
                %v922 = vld [vmem:[%s830 + $0x438] sm:$0xf]
                %923 = vst [vmem:[%s831 + $0x21c] sm:$0xf] %v922
                %v924 = vld [vmem:[%s830 + $0x450] sm:$0xf]
                %925 = vst [vmem:[%s831 + $0x228] sm:$0xf] %v924
                %v926 = vld [vmem:[%s830 + $0x468] sm:$0xf]
                %927 = vst [vmem:[%s831 + $0x234] sm:$0xf] %v926
                %v928 = vld [vmem:[%s830 + $0x480] sm:$0xf]
                %929 = vst [vmem:[%s831 + $0x240] sm:$0xf] %v928
                %v930 = vld [vmem:[%s830 + $0x498] sm:$0xf]
                %931 = vst [vmem:[%s831 + $0x24c] sm:$0xf] %v930
                %v932 = vld [vmem:[%s830 + $0x4b0] sm:$0xf]
                %933 = vst [vmem:[%s831 + $0x258] sm:$0xf] %v932
                %v934 = vld [vmem:[%s830 + $0x4c8] sm:$0xf]
                %935 = vst [vmem:[%s831 + $0x264] sm:$0xf] %v934
                %v936 = vld [vmem:[%s830 + $0x4e0] sm:$0xf]
                %937 = vst [vmem:[%s831 + $0x270] sm:$0xf] %v936
                %v938 = vld [vmem:[%s830 + $0x4f8] sm:$0xf]
                %939 = vst [vmem:[%s831 + $0x27c] sm:$0xf] %v938
                %v940 = vld [vmem:[%s830 + $0x510] sm:$0xf]
                %941 = vst [vmem:[%s831 + $0x288] sm:$0xf] %v940
                %v942 = vld [vmem:[%s830 + $0x528] sm:$0xf]
                %943 = vst [vmem:[%s831 + $0x294] sm:$0xf] %v942
                %v944 = vld [vmem:[%s830 + $0x540] sm:$0xf]
                %945 = vst [vmem:[%s831 + $0x2a0] sm:$0xf] %v944
                %v946 = vld [vmem:[%s830 + $0x558] sm:$0xf]
                %947 = vst [vmem:[%s831 + $0x2ac] sm:$0xf] %v946
                %v948 = vld [vmem:[%s830 + $0x570] sm:$0xf]
                %949 = vst [vmem:[%s831 + $0x2b8] sm:$0xf] %v948
                %v950 = vld [vmem:[%s830 + $0x588] sm:$0xf]
                %951 = vst [vmem:[%s831 + $0x2c4] sm:$0xf] %v950
                %v952 = vld [vmem:[%s830 + $0x5a0] sm:$0xf]
                %953 = vst [vmem:[%s831 + $0x2d0] sm:$0xf] %v952
                %v954 = vld [vmem:[%s830 + $0x5b8] sm:$0xf]
                %955 = vst [vmem:[%s831 + $0x2dc] sm:$0xf] %v954
                %v956 = vld [vmem:[%s830 + $0x5d0] sm:$0xf]
                %957 = vst [vmem:[%s831 + $0x2e8] sm:$0xf] %v956
                %v958 = vld [vmem:[%s830 + $0x5e8] sm:$0xf]
                %959 = vst [vmem:[%s831 + $0x2f4] sm:$0xf] %v958
                %v960 = vld [vmem:[%s830 + $0x600] sm:$0xf]
                %961 = vst [vmem:[%s831 + $0x300] sm:$0xf] %v960
                %v962 = vld [vmem:[%s830 + $0x618] sm:$0xf]
                %963 = vst [vmem:[%s831 + $0x30c] sm:$0xf] %v962
                %v964 = vld [vmem:[%s830 + $0x630] sm:$0xf]
                %965 = vst [vmem:[%s831 + $0x318] sm:$0xf] %v964
                %v966 = vld [vmem:[%s830 + $0x648] sm:$0xf]
                %967 = vst [vmem:[%s831 + $0x324] sm:$0xf] %v966
                %v968 = vld [vmem:[%s830 + $0x660] sm:$0xf]
                %969 = vst [vmem:[%s831 + $0x330] sm:$0xf] %v968
                %v970 = vld [vmem:[%s830 + $0x678] sm:$0xf]
                %971 = vst [vmem:[%s831 + $0x33c] sm:$0xf] %v970
                %v972 = vld [vmem:[%s830 + $0x690] sm:$0xf]
                %973 = vst [vmem:[%s831 + $0x348] sm:$0xf] %v972
                %v974 = vld [vmem:[%s830 + $0x6a8] sm:$0xf]
                %975 = vst [vmem:[%s831 + $0x354] sm:$0xf] %v974
                %v976 = vld [vmem:[%s830 + $0x6c0] sm:$0xf]
                %977 = vst [vmem:[%s831 + $0x360] sm:$0xf] %v976
                %v978 = vld [vmem:[%s830 + $0x6d8] sm:$0xf]
                %979 = vst [vmem:[%s831 + $0x36c] sm:$0xf] %v978
                %v980 = vld [vmem:[%s830 + $0x6f0] sm:$0xf]
                %981 = vst [vmem:[%s831 + $0x378] sm:$0xf] %v980
                %v982 = vld [vmem:[%s830 + $0x708] sm:$0xf]
                %983 = vst [vmem:[%s831 + $0x384] sm:$0xf] %v982
                %v984 = vld [vmem:[%s830 + $0x720] sm:$0xf]
                %985 = vst [vmem:[%s831 + $0x390] sm:$0xf] %v984
                %v986 = vld [vmem:[%s830 + $0x738] sm:$0xf]
                %987 = vst [vmem:[%s831 + $0x39c] sm:$0xf] %v986
                %v988 = vld [vmem:[%s830 + $0x750] sm:$0xf]
                %989 = vst [vmem:[%s831 + $0x3a8] sm:$0xf] %v988
                %v990 = vld [vmem:[%s830 + $0x768] sm:$0xf]
                %991 = vst [vmem:[%s831 + $0x3b4] sm:$0xf] %v990
                %v992 = vld [vmem:[%s830 + $0x780] sm:$0xf]
                %993 = vst [vmem:[%s831 + $0x3c0] sm:$0xf] %v992
                %v994 = vld [vmem:[%s830 + $0x798] sm:$0xf]
                %995 = vst [vmem:[%s831 + $0x3cc] sm:$0xf] %v994
                %v996 = vld [vmem:[%s830 + $0x7b0] sm:$0xf]
                %997 = vst [vmem:[%s831 + $0x3d8] sm:$0xf] %v996
                %v998 = vld [vmem:[%s830 + $0x7c8] sm:$0xf]
                %999 = vst [vmem:[%s831 + $0x3e4] sm:$0xf] %v998
                %v1000 = vld [vmem:[%s830 + $0x7e0] sm:$0xf]
                %1001 = vst [vmem:[%s831 + $0x3f0] sm:$0xf] %v1000
                %v1002 = vld [vmem:[%s830 + $0x7f8] sm:$0xf]
                %1003 = vst [vmem:[%s831 + $0x3fc] sm:$0xf] %v1002
                %v1004 = vld [vmem:[%s830 + $0x810] sm:$0xf]
                %1005 = vst [vmem:[%s831 + $0x408] sm:$0xf] %v1004
                %v1006 = vld [vmem:[%s830 + $0x828] sm:$0xf]
                %1007 = vst [vmem:[%s831 + $0x414] sm:$0xf] %v1006
                %v1008 = vld [vmem:[%s830 + $0x840] sm:$0xf]
                %1009 = vst [vmem:[%s831 + $0x420] sm:$0xf] %v1008
                %v1010 = vld [vmem:[%s830 + $0x858] sm:$0xf]
                %1011 = vst [vmem:[%s831 + $0x42c] sm:$0xf] %v1010
                %v1012 = vld [vmem:[%s830 + $0x870] sm:$0xf]
                %1013 = vst [vmem:[%s831 + $0x438] sm:$0xf] %v1012
                %v1014 = vld [vmem:[%s830 + $0x888] sm:$0xf]
                %1015 = vst [vmem:[%s831 + $0x444] sm:$0xf] %v1014
                %v1016 = vld [vmem:[%s830 + $0x8a0] sm:$0xf]
                %1017 = vst [vmem:[%s831 + $0x450] sm:$0xf] %v1016
                %v1018 = vld [vmem:[%s830 + $0x8b8] sm:$0xf]
                %1019 = vst [vmem:[%s831 + $0x45c] sm:$0xf] %v1018
                %v1020 = vld [vmem:[%s830 + $0x8d0] sm:$0xf]
                %1021 = vst [vmem:[%s831 + $0x468] sm:$0xf] %v1020
                %v1022 = vld [vmem:[%s830 + $0x8e8] sm:$0xf]
                %1023 = vst [vmem:[%s831 + $0x474] sm:$0xf] %v1022
              $region90: #{residual_block_forward.1} parent=77 // loop_footer
                %s829 = sadd.s32 1, %s825
              $region91: #{residual_block_forward.1} parent=77 // loop_footer_branch
                %824 = sbr.rel target = $region87
              $region92: #{residual_block_forward.1} parent=77 // loop_exit
                _
            $region78: #{residual_block_forward.1} parent=73 // pred_fallthru
              _
          $region74: #{residual_block_forward.1} parent=69 // pred_fallthru
            _
          %1024 = vnop
        $region70: #{residual_block_forward.1} parent=27 // pred_fallthru
          _
        // Predicated region
        $region93: #{residual_block_forward.1} parent=27 // pred_check
          %p1025 = pneg %p273
        $region94: #{residual_block_forward.1} parent=27 // pred_check_branch
          %1027 = sbr.rel (%p1025) target = $region96
        $region95: #{residual_block_forward.1} parent=27 // pred_region
          %s1028 = smul.u32 %s28, %s27
          %s1029 = smul.u32 3, %s1028
          %p1030 = scmp.lt.s32.totalorder %s1029, 5
          %s1031 = scalar_select %p1030, %s1029, 5
          %s1032 = scalar_lea.vmem %s8, %s1031
          %s1033 = smul.u32 %s28, %s27
          %s1034 = smul.u32 3, %s1033
        $region96: #{residual_block_forward.1} parent=27 // pred_fallthru
          _
        // Predicated region
        $region97: #{residual_block_forward.1} parent=27 // pred_check
          %p1035 = pneg %p305
        $region98: #{residual_block_forward.1} parent=27 // pred_check_branch
          %1037 = sbr.rel (%p1035) target = $region100
        $region99: #{residual_block_forward.1} parent=27 // pred_region
          %s1038 = sand.u32 %s295, 1
          %s1039 = sand.u32 %s295, 1
          %s1040 = smul.addr %s1039, 384
          %s1041 = scalar_lea.vmem [#allocation7], %s1040
          %s1042 = ssub.s32 1, %s27
          %s1043 = smul.u32 %s28, %s1042
          %s1044 = sadd.s32 %s1043, %s27
          %s1045 = smul.u32 3, %s1044
          %s1046 = smul.addr %s1045, 4
          %s1047 = scalar_lea.vmem %s9, %s1046
          // Predicated region
          $region101: #{residual_block_forward.1} parent=99 // pred_check
            _
          $region102: #{residual_block_forward.1} parent=99 // pred_check_branch
            %1049 = sbr.rel (0) target = $region104
          $region103: #{residual_block_forward.1} parent=99 // pred_region
            // Predicated region
            $region105: #{residual_block_forward.1} parent=103 // pred_check
              _
            $region106: #{residual_block_forward.1} parent=103 // pred_check_branch
              %1051 = sbr.rel (0) target = $region108
            $region107: #{residual_block_forward.1} parent=103 // pred_region
              %s1052 = scalar_lea.vmem %s1047, 8
              %s1053 = scalar_lea.vmem %s1041, 8 [#allocation7]
              loop: start=0, step=1, limit=1
              $region109: #{residual_block_forward.1} parent=107 // loop_pre_header
                _
              $region110: #{residual_block_forward.1} parent=107 // loop_header
                %s1055 = sphi 0, %s1059
                %p1056 = scmp.ge.s32.totalorder %s1055, 1
                %s1060 = sphi %s1047, %s1047
                %s1061 = sphi %s1041, %s1041
              $region111: #{residual_block_forward.1} parent=107 // loop_header_branch
                %1058 = sbr.rel (%p1056) target = $region115
              $region112: #{residual_block_forward.1} parent=107 // loop_body
                %v1062 = vld [vmem:[%s1060] sm:$0xff]
                %1063 = vst [vmem:[%s1061] sm:$0xff] %v1062
                %v1064 = vld [vmem:[%s1060 + $0x18] sm:$0xff]
                %1065 = vst [vmem:[%s1061 + $0xc] sm:$0xff] %v1064
                %v1066 = vld [vmem:[%s1060 + $0x30] sm:$0xff]
                %1067 = vst [vmem:[%s1061 + $0x18] sm:$0xff] %v1066
                %v1068 = vld [vmem:[%s1060 + $0x48] sm:$0xff]
                %1069 = vst [vmem:[%s1061 + $0x24] sm:$0xff] %v1068
                %v1070 = vld [vmem:[%s1060 + $0x60] sm:$0xff]
                %1071 = vst [vmem:[%s1061 + $0x30] sm:$0xff] %v1070
                %v1072 = vld [vmem:[%s1060 + $0x78] sm:$0xff]
                %1073 = vst [vmem:[%s1061 + $0x3c] sm:$0xff] %v1072
                %v1074 = vld [vmem:[%s1060 + $0x90] sm:$0xff]
                %1075 = vst [vmem:[%s1061 + $0x48] sm:$0xff] %v1074
                %v1076 = vld [vmem:[%s1060 + $0xa8] sm:$0xff]
                %1077 = vst [vmem:[%s1061 + $0x54] sm:$0xff] %v1076
                %v1078 = vld [vmem:[%s1060 + $0xc0] sm:$0xff]
                %1079 = vst [vmem:[%s1061 + $0x60] sm:$0xff] %v1078
                %v1080 = vld [vmem:[%s1060 + $0xd8] sm:$0xff]
                %1081 = vst [vmem:[%s1061 + $0x6c] sm:$0xff] %v1080
                %v1082 = vld [vmem:[%s1060 + $0xf0] sm:$0xff]
                %1083 = vst [vmem:[%s1061 + $0x78] sm:$0xff] %v1082
                %v1084 = vld [vmem:[%s1060 + $0x108] sm:$0xff]
                %1085 = vst [vmem:[%s1061 + $0x84] sm:$0xff] %v1084
                %v1086 = vld [vmem:[%s1060 + $0x120] sm:$0xff]
                %1087 = vst [vmem:[%s1061 + $0x90] sm:$0xff] %v1086
                %v1088 = vld [vmem:[%s1060 + $0x138] sm:$0xff]
                %1089 = vst [vmem:[%s1061 + $0x9c] sm:$0xff] %v1088
                %v1090 = vld [vmem:[%s1060 + $0x150] sm:$0xff]
                %1091 = vst [vmem:[%s1061 + $0xa8] sm:$0xff] %v1090
                %v1092 = vld [vmem:[%s1060 + $0x168] sm:$0xff]
                %1093 = vst [vmem:[%s1061 + $0xb4] sm:$0xff] %v1092
                %v1094 = vld [vmem:[%s1060 + $0x180] sm:$0xff]
                %1095 = vst [vmem:[%s1061 + $0xc0] sm:$0xff] %v1094
                %v1096 = vld [vmem:[%s1060 + $0x198] sm:$0xff]
                %1097 = vst [vmem:[%s1061 + $0xcc] sm:$0xff] %v1096
                %v1098 = vld [vmem:[%s1060 + $0x1b0] sm:$0xff]
                %1099 = vst [vmem:[%s1061 + $0xd8] sm:$0xff] %v1098
                %v1100 = vld [vmem:[%s1060 + $0x1c8] sm:$0xff]
                %1101 = vst [vmem:[%s1061 + $0xe4] sm:$0xff] %v1100
                %v1102 = vld [vmem:[%s1060 + $0x1e0] sm:$0xff]
                %1103 = vst [vmem:[%s1061 + $0xf0] sm:$0xff] %v1102
                %v1104 = vld [vmem:[%s1060 + $0x1f8] sm:$0xff]
                %1105 = vst [vmem:[%s1061 + $0xfc] sm:$0xff] %v1104
                %v1106 = vld [vmem:[%s1060 + $0x210] sm:$0xff]
                %1107 = vst [vmem:[%s1061 + $0x108] sm:$0xff] %v1106
                %v1108 = vld [vmem:[%s1060 + $0x228] sm:$0xff]
                %1109 = vst [vmem:[%s1061 + $0x114] sm:$0xff] %v1108
                %v1110 = vld [vmem:[%s1060 + $0x240] sm:$0xff]
                %1111 = vst [vmem:[%s1061 + $0x120] sm:$0xff] %v1110
                %v1112 = vld [vmem:[%s1060 + $0x258] sm:$0xff]
                %1113 = vst [vmem:[%s1061 + $0x12c] sm:$0xff] %v1112
                %v1114 = vld [vmem:[%s1060 + $0x270] sm:$0xff]
                %1115 = vst [vmem:[%s1061 + $0x138] sm:$0xff] %v1114
                %v1116 = vld [vmem:[%s1060 + $0x288] sm:$0xff]
                %1117 = vst [vmem:[%s1061 + $0x144] sm:$0xff] %v1116
                %v1118 = vld [vmem:[%s1060 + $0x2a0] sm:$0xff]
                %1119 = vst [vmem:[%s1061 + $0x150] sm:$0xff] %v1118
                %v1120 = vld [vmem:[%s1060 + $0x2b8] sm:$0xff]
                %1121 = vst [vmem:[%s1061 + $0x15c] sm:$0xff] %v1120
                %v1122 = vld [vmem:[%s1060 + $0x2d0] sm:$0xff]
                %1123 = vst [vmem:[%s1061 + $0x168] sm:$0xff] %v1122
                %v1124 = vld [vmem:[%s1060 + $0x2e8] sm:$0xff]
                %1125 = vst [vmem:[%s1061 + $0x174] sm:$0xff] %v1124
              $region113: #{residual_block_forward.1} parent=107 // loop_footer
                %s1059 = sadd.s32 1, %s1055
              $region114: #{residual_block_forward.1} parent=107 // loop_footer_branch
                %1054 = sbr.rel target = $region110
              $region115: #{residual_block_forward.1} parent=107 // loop_exit
                _
              loop: start=0, step=1, limit=1
              $region116: #{residual_block_forward.1} parent=107 // loop_pre_header
                _
              $region117: #{residual_block_forward.1} parent=107 // loop_header
                %s1128 = sphi 0, %s1132
                %p1129 = scmp.ge.s32.totalorder %s1128, 1
                %s1133 = sphi %s1052, %s1052
                %s1134 = sphi %s1053, %s1053
              $region118: #{residual_block_forward.1} parent=107 // loop_header_branch
                %1131 = sbr.rel (%p1129) target = $region122
              $region119: #{residual_block_forward.1} parent=107 // loop_body
                %v1135 = vld [vmem:[%s1133] sm:$0xf]
                %1136 = vst [vmem:[%s1134] sm:$0xf] %v1135
                %v1137 = vld [vmem:[%s1133 + $0x18] sm:$0xf]
                %1138 = vst [vmem:[%s1134 + $0xc] sm:$0xf] %v1137
                %v1139 = vld [vmem:[%s1133 + $0x30] sm:$0xf]
                %1140 = vst [vmem:[%s1134 + $0x18] sm:$0xf] %v1139
                %v1141 = vld [vmem:[%s1133 + $0x48] sm:$0xf]
                %1142 = vst [vmem:[%s1134 + $0x24] sm:$0xf] %v1141
                %v1143 = vld [vmem:[%s1133 + $0x60] sm:$0xf]
                %1144 = vst [vmem:[%s1134 + $0x30] sm:$0xf] %v1143
                %v1145 = vld [vmem:[%s1133 + $0x78] sm:$0xf]
                %1146 = vst [vmem:[%s1134 + $0x3c] sm:$0xf] %v1145
                %v1147 = vld [vmem:[%s1133 + $0x90] sm:$0xf]
                %1148 = vst [vmem:[%s1134 + $0x48] sm:$0xf] %v1147
                %v1149 = vld [vmem:[%s1133 + $0xa8] sm:$0xf]
                %1150 = vst [vmem:[%s1134 + $0x54] sm:$0xf] %v1149
                %v1151 = vld [vmem:[%s1133 + $0xc0] sm:$0xf]
                %1152 = vst [vmem:[%s1134 + $0x60] sm:$0xf] %v1151
                %v1153 = vld [vmem:[%s1133 + $0xd8] sm:$0xf]
                %1154 = vst [vmem:[%s1134 + $0x6c] sm:$0xf] %v1153
                %v1155 = vld [vmem:[%s1133 + $0xf0] sm:$0xf]
                %1156 = vst [vmem:[%s1134 + $0x78] sm:$0xf] %v1155
                %v1157 = vld [vmem:[%s1133 + $0x108] sm:$0xf]
                %1158 = vst [vmem:[%s1134 + $0x84] sm:$0xf] %v1157
                %v1159 = vld [vmem:[%s1133 + $0x120] sm:$0xf]
                %1160 = vst [vmem:[%s1134 + $0x90] sm:$0xf] %v1159
                %v1161 = vld [vmem:[%s1133 + $0x138] sm:$0xf]
                %1162 = vst [vmem:[%s1134 + $0x9c] sm:$0xf] %v1161
                %v1163 = vld [vmem:[%s1133 + $0x150] sm:$0xf]
                %1164 = vst [vmem:[%s1134 + $0xa8] sm:$0xf] %v1163
                %v1165 = vld [vmem:[%s1133 + $0x168] sm:$0xf]
                %1166 = vst [vmem:[%s1134 + $0xb4] sm:$0xf] %v1165
                %v1167 = vld [vmem:[%s1133 + $0x180] sm:$0xf]
                %1168 = vst [vmem:[%s1134 + $0xc0] sm:$0xf] %v1167
                %v1169 = vld [vmem:[%s1133 + $0x198] sm:$0xf]
                %1170 = vst [vmem:[%s1134 + $0xcc] sm:$0xf] %v1169
                %v1171 = vld [vmem:[%s1133 + $0x1b0] sm:$0xf]
                %1172 = vst [vmem:[%s1134 + $0xd8] sm:$0xf] %v1171
                %v1173 = vld [vmem:[%s1133 + $0x1c8] sm:$0xf]
                %1174 = vst [vmem:[%s1134 + $0xe4] sm:$0xf] %v1173
                %v1175 = vld [vmem:[%s1133 + $0x1e0] sm:$0xf]
                %1176 = vst [vmem:[%s1134 + $0xf0] sm:$0xf] %v1175
                %v1177 = vld [vmem:[%s1133 + $0x1f8] sm:$0xf]
                %1178 = vst [vmem:[%s1134 + $0xfc] sm:$0xf] %v1177
                %v1179 = vld [vmem:[%s1133 + $0x210] sm:$0xf]
                %1180 = vst [vmem:[%s1134 + $0x108] sm:$0xf] %v1179
                %v1181 = vld [vmem:[%s1133 + $0x228] sm:$0xf]
                %1182 = vst [vmem:[%s1134 + $0x114] sm:$0xf] %v1181
                %v1183 = vld [vmem:[%s1133 + $0x240] sm:$0xf]
                %1184 = vst [vmem:[%s1134 + $0x120] sm:$0xf] %v1183
                %v1185 = vld [vmem:[%s1133 + $0x258] sm:$0xf]
                %1186 = vst [vmem:[%s1134 + $0x12c] sm:$0xf] %v1185
                %v1187 = vld [vmem:[%s1133 + $0x270] sm:$0xf]
                %1188 = vst [vmem:[%s1134 + $0x138] sm:$0xf] %v1187
                %v1189 = vld [vmem:[%s1133 + $0x288] sm:$0xf]
                %1190 = vst [vmem:[%s1134 + $0x144] sm:$0xf] %v1189
                %v1191 = vld [vmem:[%s1133 + $0x2a0] sm:$0xf]
                %1192 = vst [vmem:[%s1134 + $0x150] sm:$0xf] %v1191
                %v1193 = vld [vmem:[%s1133 + $0x2b8] sm:$0xf]
                %1194 = vst [vmem:[%s1134 + $0x15c] sm:$0xf] %v1193
                %v1195 = vld [vmem:[%s1133 + $0x2d0] sm:$0xf]
                %1196 = vst [vmem:[%s1134 + $0x168] sm:$0xf] %v1195
                %v1197 = vld [vmem:[%s1133 + $0x2e8] sm:$0xf]
                %1198 = vst [vmem:[%s1134 + $0x174] sm:$0xf] %v1197
              $region120: #{residual_block_forward.1} parent=107 // loop_footer
                %s1132 = sadd.s32 1, %s1128
              $region121: #{residual_block_forward.1} parent=107 // loop_footer_branch
                %1127 = sbr.rel target = $region117
              $region122: #{residual_block_forward.1} parent=107 // loop_exit
                _
            $region108: #{residual_block_forward.1} parent=103 // pred_fallthru
              _
          $region104: #{residual_block_forward.1} parent=99 // pred_fallthru
            _
          %1199 = vnop
        $region100: #{residual_block_forward.1} parent=27 // pred_fallthru
          _
        // Predicated region
        $region123: #{residual_block_forward.1} parent=27 // pred_check
          %p1200 = pneg %p337
        $region124: #{residual_block_forward.1} parent=27 // pred_check_branch
          %1202 = sbr.rel (%p1200) target = $region126
        $region125: #{residual_block_forward.1} parent=27 // pred_region
          %s1203 = ssub.s32 1, %s27
          %s1204 = smul.u32 %s28, %s1203
          %s1205 = sadd.s32 %s1204, %s27
          %s1206 = smul.u32 3, %s1205
          %p1207 = scmp.lt.s32.totalorder %s1206, 5
          %s1208 = scalar_select %p1207, %s1206, 5
          %s1209 = scalar_lea.vmem %s10, %s1208
          %s1210 = ssub.s32 1, %s27
          %s1211 = smul.u32 %s28, %s1210
          %s1212 = sadd.s32 %s1211, %s27
          %s1213 = smul.u32 3, %s1212
        $region126: #{residual_block_forward.1} parent=27 // pred_fallthru
          _
      $region28: #{residual_block_forward.1} parent=5 // pred_fallthru
        _
      %p1214 = scmp.le.s32.totalorder 1, %s20
      %p1215 = scmp.lt.s32.totalorder %s20, 5
      %p1216 = pnand %p1214, %p1215
      %p1217 = pneg %p1216
      // Predicated region
      $region127: #{residual_block_forward.1} parent=5 // pred_check
        _
      $region128: #{residual_block_forward.1} parent=5 // pred_check_branch
        %1219 = sbr.rel (%p1216) target = $region130
      $region129: #{residual_block_forward.1} parent=5 // pred_region
        %s1220 = ssub.s32 %s20, 1
        %s1221 = sand.u32 %s114, 1
        %s1222 = sand.u32 %s114, 1
        %s1223 = smul.addr %s1222, 384
        %s1224 = scalar_lea.vmem [#allocation5], %s1223
        // Predicated region
        $region131: #{residual_block_forward.1} parent=129 // pred_check
          %p1225 = pneg %p127
        $region132: #{residual_block_forward.1} parent=129 // pred_check_branch
          %1227 = sbr.rel (%p1225) target = $region134
        $region133: #{residual_block_forward.1} parent=129 // pred_region
          _
        $region134: #{residual_block_forward.1} parent=129 // pred_fallthru
          _
        %s1228 = sand.u32 %s238, 1
        %s1229 = sand.u32 %s238, 1
        %s1230 = smul.addr %s1229, 1152
        %s1231 = scalar_lea.vmem [#allocation6], %s1230
        // Predicated region
        $region135: #{residual_block_forward.1} parent=129 // pred_check
          %p1232 = pneg %p251
        $region136: #{residual_block_forward.1} parent=129 // pred_check_branch
          %1234 = sbr.rel (%p1232) target = $region138
        $region137: #{residual_block_forward.1} parent=129 // pred_region
          _
        $region138: #{residual_block_forward.1} parent=129 // pred_fallthru
          _
        %s1235 = sand.u32 %s298, 1
        %s1236 = sand.u32 %s298, 1
        %s1237 = smul.addr %s1236, 384
        %s1238 = scalar_lea.vmem [#allocation7], %s1237
        // Predicated region
        $region139: #{residual_block_forward.1} parent=129 // pred_check
          %p1239 = pneg %p311
        $region140: #{residual_block_forward.1} parent=129 // pred_check_branch
          %1241 = sbr.rel (%p1239) target = $region142
        $region141: #{residual_block_forward.1} parent=129 // pred_region
          _
        $region142: #{residual_block_forward.1} parent=129 // pred_fallthru
          _
        %p1242 = pneg %p53
        %p1243 = pneg %p50
        %p1244 = pneg %p74
        %p1245 = pneg %p71
        %p1246 = pneg %p95
        %p1247 = pneg %p92
        %s1248 = sand.u32 %s114, 1
        %s1249 = sand.u32 %s114, 1
        %s1250 = smul.addr %s1249, 384
        %s1251 = scalar_lea.vmem [#allocation5], %s1250
        %p1252 = pneg %p127
        %p1253 = pneg %p124
        %s1254 = ssub.s32 1, %s29
        %s1255 = smul.u32 %s30, %s1254
        %s1256 = sadd.s32 %s1255, %s29
        %s1257 = smul.u32 3, %s1256
        %p1258 = scmp.lt.s32.totalorder %s1257, 5
        %s1259 = scalar_select %p1258, %s1257, 5
        %s1260 = scalar_lea.vmem %s4, %s1259
        %p1261 = pneg %p159
        %p1262 = pneg %p156
        %s1263 = ssub.s32 1, %s29
        %s1264 = smul.u32 %s30, %s1263
        %s1265 = sadd.s32 %s1264, %s29
        %s1266 = smul.u32 3, %s1265
        %p1267 = scmp.lt.s32.totalorder %s1266, 5
        %s1268 = scalar_select %p1267, %s1266, 5
        %s1269 = scalar_lea.vmem %s5, %s1268
        %p1270 = pneg %p191
        %p1271 = pneg %p188
        %s1272 = ssub.s32 1, %s29
        %s1273 = smul.u32 %s30, %s1272
        %s1274 = sadd.s32 %s1273, %s29
        %s1275 = smul.u32 3, %s1274
        %p1276 = scmp.lt.s32.totalorder %s1275, 5
        %s1277 = scalar_select %p1276, %s1275, 5
        %s1278 = scalar_lea.vmem %s6, %s1277
        %p1279 = pneg %p223
        %p1280 = pneg %p220
        %s1281 = sand.u32 %s238, 1
        %s1282 = sand.u32 %s238, 1
        %s1283 = smul.addr %s1282, 1152
        %s1284 = scalar_lea.vmem [#allocation6], %s1283
        %p1285 = pneg %p251
        %p1286 = pneg %p248
        %s1287 = smul.u32 %s30, %s29
        %s1288 = smul.u32 3, %s1287
        %p1289 = scmp.lt.s32.totalorder %s1288, 5
        %s1290 = scalar_select %p1289, %s1288, 5
        %s1291 = scalar_lea.vmem %s8, %s1290
        %p1292 = pneg %p279
        %p1293 = pneg %p276
        %s1294 = sand.u32 %s298, 1
        %s1295 = sand.u32 %s298, 1
        %s1296 = smul.addr %s1295, 384
        %s1297 = scalar_lea.vmem [#allocation7], %s1296
        %p1298 = pneg %p311
        %p1299 = pneg %p308
        %s1300 = ssub.s32 1, %s29
        %s1301 = smul.u32 %s30, %s1300
        %s1302 = sadd.s32 %s1301, %s29
        %s1303 = smul.u32 3, %s1302
        %p1304 = scmp.lt.s32.totalorder %s1303, 5
        %s1305 = scalar_select %p1304, %s1303, 5
        %s1306 = scalar_lea.vmem %s10, %s1305
        %p1307 = pneg %p343
        %p1308 = pneg %p340
        %p1309 = pneg %p371
        %p1310 = pneg %p368
        %s1311 = sand.u32 %s358, 1
        %s1312 = scalar_lea.sflag [#allocation9], %s1311
        %s1313 = sand.u32 %s358, 1
        %s1314 = smul.addr %s1313, 24
        %s1315 = scalar_lea.vmem [#allocation8], %s1314
        %s1316 = ssub.s32 1, %s29
        %s1317 = smul.u32 %s30, %s1316
        %s1318 = sadd.s32 %s1317, %s29
        %s1319 = smul.u32 3, %s1318
        %s1320 = ssub.s32 1, %s29
        %s1321 = smul.u32 %s30, %s1320
        %s1322 = sadd.s32 %s1321, %s29
        %s1323 = smul.u32 3, %s1322
        %p1324 = scmp.lt.s32.totalorder %s1323, 5
        %s1325 = scalar_select %p1324, %s1323, 5
        %s1326 = scalar_lea.vmem %s4, %s1325
        %s1327 = ssub.s32 1, %s29
        %s1328 = smul.u32 %s30, %s1327
        %s1329 = sadd.s32 %s1328, %s29
        %s1330 = smul.u32 3, %s1329
        %s1331 = ssub.s32 1, %s29
        %s1332 = smul.u32 %s30, %s1331
        %s1333 = sadd.s32 %s1332, %s29
        %s1334 = smul.u32 3, %s1333
        %p1335 = scmp.lt.s32.totalorder %s1334, 5
        %s1336 = scalar_select %p1335, %s1334, 5
        %s1337 = scalar_lea.vmem %s5, %s1336
        %s1338 = ssub.s32 1, %s29
        %s1339 = smul.u32 %s30, %s1338
        %s1340 = sadd.s32 %s1339, %s29
        %s1341 = smul.u32 3, %s1340
        %s1342 = ssub.s32 1, %s29
        %s1343 = smul.u32 %s30, %s1342
        %s1344 = sadd.s32 %s1343, %s29
        %s1345 = smul.u32 3, %s1344
        %p1346 = scmp.lt.s32.totalorder %s1345, 5
        %s1347 = scalar_select %p1346, %s1345, 5
        %s1348 = scalar_lea.vmem %s6, %s1347
        %s1349 = ssub.s32 1, %s29
        %s1350 = smul.u32 %s30, %s1349
        %s1351 = sadd.s32 %s1350, %s29
        %s1352 = smul.u32 3, %s1351
        %s1353 = smul.u32 %s30, %s29
        %s1354 = smul.u32 3, %s1353
        %s1355 = smul.u32 %s30, %s29
        %s1356 = smul.u32 3, %s1355
        %p1357 = scmp.lt.s32.totalorder %s1356, 5
        %s1358 = scalar_select %p1357, %s1356, 5
        %s1359 = scalar_lea.vmem %s8, %s1358
        %s1360 = smul.u32 %s30, %s29
        %s1361 = smul.u32 3, %s1360
        %s1362 = ssub.s32 1, %s29
        %s1363 = smul.u32 %s30, %s1362
        %s1364 = sadd.s32 %s1363, %s29
        %s1365 = smul.u32 3, %s1364
        %s1366 = ssub.s32 1, %s29
        %s1367 = smul.u32 %s30, %s1366
        %s1368 = sadd.s32 %s1367, %s29
        %s1369 = smul.u32 3, %s1368
        %p1370 = scmp.lt.s32.totalorder %s1369, 5
        %s1371 = scalar_select %p1370, %s1369, 5
        %s1372 = scalar_lea.vmem %s10, %s1371
        %s1373 = ssub.s32 1, %s29
        %s1374 = smul.u32 %s30, %s1373
        %s1375 = sadd.s32 %s1374, %s29
        %s1376 = smul.u32 3, %s1375
        %s1377 = smul.u32 %s30, %s29
        %s1378 = smul.u32 3, %s1377
        %p1380 = scmp.eq.s32.totalorder %s29, 0
        %p1381 = scmp.eq.s32.totalorder %s30, 0
        %p1382 = pnand %p1380, %p1381
        %p1383 = pneg %p1382
        // Predicated region
        $region143: #{residual_block_forward.1} parent=129 // pred_check
          _
        $region144: #{residual_block_forward.1} parent=129 // pred_check_branch
          %1385 = sbr.rel (%p1382) target = $region146
        $region145: #{residual_block_forward.1} parent=129 // pred_region
          %v1386 = vld [vmem:[%s0] sm:$0xff]
          %v1387 = vld [vmem:[%s0 + $0x8] sm:$0xff]
          %v1388 = vld [vmem:[%s1] sm:$0x3]
          %v1390 = vlaneseq
          %v1391 = vshrl.u32 %v1390, 7
          %v1392 = vsub.s32 0, %v1391
          %v1393 = vrot.slane %v1388, %v1392
          %v1394 = vlaneseq
          %v1395 = vshrl.u32 %v1394, 7
          %v1396 = vsub.s32 1, %v1395
          %v1397 = vrot.slane %v1388, %v1396
          %v1400 = vmul.f32 %v1386, %v1393
          %v1401 = vmul.f32 %v1387, %v1397
          %v1402 = vld [vmem:[%s2] sm:$0x3]
          %v1404 = vlaneseq
          %v1405 = vshrl.u32 %v1404, 7
          %v1406 = vsub.s32 0, %v1405
          %v1407 = vrot.slane %v1402, %v1406
          %v1408 = vlaneseq
          %v1409 = vshrl.u32 %v1408, 7
          %v1410 = vsub.s32 1, %v1409
          %v1411 = vrot.slane %v1402, %v1410
          %v1414 = vadd.f32 %v1400, %v1407
          %v1415 = vadd.f32 %v1401, %v1411
          %v1416 = vmax.f32 %v1414, 0.0
          %v1417 = vmax.f32 %v1415, 0.0
          %v1418 = vpack.c.bf16 %v1416, %v1416
          %v1419 = vpack.c.bf16 %v1417, %v1417
          %v1422 = vunpack.c.l.b16 %v1418
          %v1423 = vunpack.c.l.b16 %v1419
          %v1424 = vpack.c.b16 %v1423, %v1422
          %1426 = vst [vmem:[#allocation2] sm:$0xff] %v1424
        $region146: #{residual_block_forward.1} parent=129 // pred_fallthru
          _
        // Predicated region
        $region147: #{residual_block_forward.1} parent=129 // pred_check
          %p1427 = pneg %p1380
        $region148: #{residual_block_forward.1} parent=129 // pred_check_branch
          %1429 = sbr.rel (%p1427) target = $region150
        $region149: #{residual_block_forward.1} parent=129 // pred_region
          %v1430 = vld [vmem:[#allocation2] sm:$0xff]
          %v1431 = vld [vmem:[%s1224] sm:$0xff]
          %v1432 = vld [vmem:[%s1224 + $0x8] sm:$0xf]
          %v1433 = vld [vmem:[%s1224 + $0xc] sm:$0xff]
          %v1434 = vld [vmem:[%s1224 + $0x14] sm:$0xf]
          %v1435 = vld [vmem:[%s1224 + $0x18] sm:$0xff]
          %v1436 = vld [vmem:[%s1224 + $0x20] sm:$0xf]
          %v1437 = vld [vmem:[%s1224 + $0x24] sm:$0xff]
          %v1438 = vld [vmem:[%s1224 + $0x2c] sm:$0xf]
          %v1439 = vld [vmem:[%s1224 + $0x30] sm:$0xff]
          %v1440 = vld [vmem:[%s1224 + $0x38] sm:$0xf]
          %v1441 = vld [vmem:[%s1224 + $0x3c] sm:$0xff]
          %v1442 = vld [vmem:[%s1224 + $0x44] sm:$0xf]
          %v1443 = vld [vmem:[%s1224 + $0x48] sm:$0xff]
          %v1444 = vld [vmem:[%s1224 + $0x50] sm:$0xf]
          %v1445 = vld [vmem:[%s1224 + $0x54] sm:$0xff]
          %v1446 = vld [vmem:[%s1224 + $0x5c] sm:$0xf]
          %v1447 = vld [vmem:[%s1224 + $0x60] sm:$0xff]
          %v1448 = vld [vmem:[%s1224 + $0x68] sm:$0xf]
          %v1449 = vld [vmem:[%s1224 + $0x6c] sm:$0xff]
          %v1450 = vld [vmem:[%s1224 + $0x74] sm:$0xf]
          %v1451 = vld [vmem:[%s1224 + $0x78] sm:$0xff]
          %v1452 = vld [vmem:[%s1224 + $0x80] sm:$0xf]
          %v1453 = vld [vmem:[%s1224 + $0x84] sm:$0xff]
          %v1454 = vld [vmem:[%s1224 + $0x8c] sm:$0xf]
          %v1455 = vld [vmem:[%s1224 + $0x90] sm:$0xff]
          %v1456 = vld [vmem:[%s1224 + $0x98] sm:$0xf]
          %v1457 = vld [vmem:[%s1224 + $0x9c] sm:$0xff]
          %v1458 = vld [vmem:[%s1224 + $0xa4] sm:$0xf]
          %v1459 = vld [vmem:[%s1224 + $0xa8] sm:$0xff]
          %v1460 = vld [vmem:[%s1224 + $0xb0] sm:$0xf]
          %v1461 = vld [vmem:[%s1224 + $0xb4] sm:$0xff]
          %v1462 = vld [vmem:[%s1224 + $0xbc] sm:$0xf]
          %v1463 = vld [vmem:[%s1224 + $0xc0] sm:$0xff]
          %v1464 = vld [vmem:[%s1224 + $0xc8] sm:$0xf]
          %v1465 = vld [vmem:[%s1224 + $0xcc] sm:$0xff]
          %v1466 = vld [vmem:[%s1224 + $0xd4] sm:$0xf]
          %v1467 = vld [vmem:[%s1224 + $0xd8] sm:$0xff]
          %v1468 = vld [vmem:[%s1224 + $0xe0] sm:$0xf]
          %v1469 = vld [vmem:[%s1224 + $0xe4] sm:$0xff]
          %v1470 = vld [vmem:[%s1224 + $0xec] sm:$0xf]
          %v1471 = vld [vmem:[%s1224 + $0xf0] sm:$0xff]
          %v1472 = vld [vmem:[%s1224 + $0xf8] sm:$0xf]
          %v1473 = vld [vmem:[%s1224 + $0xfc] sm:$0xff]
          %v1474 = vld [vmem:[%s1224 + $0x104] sm:$0xf]
          %v1475 = vld [vmem:[%s1224 + $0x108] sm:$0xff]
          %v1476 = vld [vmem:[%s1224 + $0x110] sm:$0xf]
          %v1477 = vld [vmem:[%s1224 + $0x114] sm:$0xff]
          %v1478 = vld [vmem:[%s1224 + $0x11c] sm:$0xf]
          %v1479 = vld [vmem:[%s1224 + $0x120] sm:$0xff]
          %v1480 = vld [vmem:[%s1224 + $0x128] sm:$0xf]
          %v1481 = vld [vmem:[%s1224 + $0x12c] sm:$0xff]
          %v1482 = vld [vmem:[%s1224 + $0x134] sm:$0xf]
          %v1483 = vld [vmem:[%s1224 + $0x138] sm:$0xff]
          %v1484 = vld [vmem:[%s1224 + $0x140] sm:$0xf]
          %v1485 = vld [vmem:[%s1224 + $0x144] sm:$0xff]
          %v1486 = vld [vmem:[%s1224 + $0x14c] sm:$0xf]
          %v1487 = vld [vmem:[%s1224 + $0x150] sm:$0xff]
          %v1488 = vld [vmem:[%s1224 + $0x158] sm:$0xf]
          %v1489 = vld [vmem:[%s1224 + $0x15c] sm:$0xff]
          %v1490 = vld [vmem:[%s1224 + $0x164] sm:$0xf]
          %v1491 = vld [vmem:[%s1224 + $0x168] sm:$0xff]
          %v1492 = vld [vmem:[%s1224 + $0x170] sm:$0xf]
          %v1493 = vld [vmem:[%s1224 + $0x174] sm:$0xff]
          %v1494 = vld [vmem:[%s1224 + $0x17c] sm:$0xf]
          %v1495 = vld [vmem:[%s1326] sm:$0x7]
          %v1497 = vlaneseq
          %v1498 = vshrl.u32 %v1497, 7
          %v1499 = vsub.s32 0, %v1498
          %v1500 = vrot.slane %v1495, %v1499
          %v1501 = vlaneseq
          %v1502 = vshrl.u32 %v1501, 7
          %v1503 = vsub.s32 1, %v1502
          %v1504 = vrot.slane %v1495, %v1503
          %v1505 = vlaneseq
          %v1506 = vshrl.u32 %v1505, 7
          %v1507 = vsub.s32 2, %v1506
          %v1508 = vrot.slane %v1495, %v1507
          %v1513 = vunpack.c.l.b16 %v1430
          %v1514 = vunpack.c.h.b16 %v1430
          %v1515 = vpack.c.b16 %v1513, %v1513
          %v1516 = vpack.c.b16 %v1514, %v1514
          %v1583 = vunpack.c.l.b16 %v1431
          %v1584 = vunpack.c.h.b16 %v1431
          %v1585 = vunpack.c.l.b16 %v1432
          %v1586 = vunpack.c.l.b16 %v1433
          %v1587 = vunpack.c.h.b16 %v1433
          %v1588 = vunpack.c.l.b16 %v1434
          %v1589 = vunpack.c.l.b16 %v1435
          %v1590 = vunpack.c.h.b16 %v1435
          %v1591 = vunpack.c.l.b16 %v1436
          %v1592 = vunpack.c.l.b16 %v1437
          %v1593 = vunpack.c.h.b16 %v1437
          %v1594 = vunpack.c.l.b16 %v1438
          %v1595 = vunpack.c.l.b16 %v1439
          %v1596 = vunpack.c.h.b16 %v1439
          %v1597 = vunpack.c.l.b16 %v1440
          %v1598 = vunpack.c.l.b16 %v1441
          %v1599 = vunpack.c.h.b16 %v1441
          %v1600 = vunpack.c.l.b16 %v1442
          %v1601 = vunpack.c.l.b16 %v1443
          %v1602 = vunpack.c.h.b16 %v1443
          %v1603 = vunpack.c.l.b16 %v1444
          %v1604 = vunpack.c.l.b16 %v1445
          %v1605 = vunpack.c.h.b16 %v1445
          %v1606 = vunpack.c.l.b16 %v1446
          %v1607 = vunpack.c.l.b16 %v1447
          %v1608 = vunpack.c.h.b16 %v1447
          %v1609 = vunpack.c.l.b16 %v1448
          %v1610 = vunpack.c.l.b16 %v1449
          %v1611 = vunpack.c.h.b16 %v1449
          %v1612 = vunpack.c.l.b16 %v1450
          %v1613 = vunpack.c.l.b16 %v1451
          %v1614 = vunpack.c.h.b16 %v1451
          %v1615 = vunpack.c.l.b16 %v1452
          %v1616 = vunpack.c.l.b16 %v1453
          %v1617 = vunpack.c.h.b16 %v1453
          %v1618 = vunpack.c.l.b16 %v1454
          %v1619 = vunpack.c.l.b16 %v1455
          %v1620 = vunpack.c.h.b16 %v1455
          %v1621 = vunpack.c.l.b16 %v1456
          %v1622 = vunpack.c.l.b16 %v1457
          %v1623 = vunpack.c.h.b16 %v1457
          %v1624 = vunpack.c.l.b16 %v1458
          %v1625 = vunpack.c.l.b16 %v1459
          %v1626 = vunpack.c.h.b16 %v1459
          %v1627 = vunpack.c.l.b16 %v1460
          %v1628 = vunpack.c.l.b16 %v1461
          %v1629 = vunpack.c.h.b16 %v1461
          %v1630 = vunpack.c.l.b16 %v1462
          %v1631 = vunpack.c.l.b16 %v1463
          %v1632 = vunpack.c.h.b16 %v1463
          %v1633 = vunpack.c.l.b16 %v1464
          %v1634 = vunpack.c.l.b16 %v1465
          %v1635 = vunpack.c.h.b16 %v1465
          %v1636 = vunpack.c.l.b16 %v1466
          %v1637 = vunpack.c.l.b16 %v1467
          %v1638 = vunpack.c.h.b16 %v1467
          %v1639 = vunpack.c.l.b16 %v1468
          %v1640 = vunpack.c.l.b16 %v1469
          %v1641 = vunpack.c.h.b16 %v1469
          %v1642 = vunpack.c.l.b16 %v1470
          %v1643 = vunpack.c.l.b16 %v1471
          %v1644 = vunpack.c.h.b16 %v1471
          %v1645 = vunpack.c.l.b16 %v1472
          %v1646 = vunpack.c.l.b16 %v1473
          %v1647 = vunpack.c.h.b16 %v1473
          %v1648 = vunpack.c.l.b16 %v1474
          %v1649 = vunpack.c.l.b16 %v1475
          %v1650 = vunpack.c.h.b16 %v1475
          %v1651 = vunpack.c.l.b16 %v1476
          %v1652 = vunpack.c.l.b16 %v1477
          %v1653 = vunpack.c.h.b16 %v1477
          %v1654 = vunpack.c.l.b16 %v1478
          %v1655 = vunpack.c.l.b16 %v1479
          %v1656 = vunpack.c.h.b16 %v1479
          %v1657 = vunpack.c.l.b16 %v1480
          %v1658 = vunpack.c.l.b16 %v1481
          %v1659 = vunpack.c.h.b16 %v1481
          %v1660 = vunpack.c.l.b16 %v1482
          %v1661 = vunpack.c.l.b16 %v1483
          %v1662 = vunpack.c.h.b16 %v1483
          %v1663 = vunpack.c.l.b16 %v1484
          %v1664 = vunpack.c.l.b16 %v1485
          %v1665 = vunpack.c.h.b16 %v1485
          %v1666 = vunpack.c.l.b16 %v1486
          %v1667 = vunpack.c.l.b16 %v1487
          %v1668 = vunpack.c.h.b16 %v1487
          %v1669 = vunpack.c.l.b16 %v1488
          %v1670 = vunpack.c.l.b16 %v1489
          %v1671 = vunpack.c.h.b16 %v1489
          %v1672 = vunpack.c.l.b16 %v1490
          %v1673 = vunpack.c.l.b16 %v1491
          %v1674 = vunpack.c.h.b16 %v1491
          %v1675 = vunpack.c.l.b16 %v1492
          %v1676 = vunpack.c.l.b16 %v1493
          %v1677 = vunpack.c.h.b16 %v1493
          %v1678 = vunpack.c.l.b16 %v1494
          %v1679 = vpack.c.b16 %v1586, %v1583
          %v1680 = vpack.c.b16 %v1587, %v1584
          %v1681 = vpack.c.b16 %v1588, %v1585
          %v1682 = vpack.c.b16 %v1592, %v1589
          %v1683 = vpack.c.b16 %v1593, %v1590
          %v1684 = vpack.c.b16 %v1594, %v1591
          %v1685 = vpack.c.b16 %v1598, %v1595
          %v1686 = vpack.c.b16 %v1599, %v1596
          %v1687 = vpack.c.b16 %v1600, %v1597
          %v1688 = vpack.c.b16 %v1604, %v1601
          %v1689 = vpack.c.b16 %v1605, %v1602
          %v1690 = vpack.c.b16 %v1606, %v1603
          %v1691 = vpack.c.b16 %v1610, %v1607
          %v1692 = vpack.c.b16 %v1611, %v1608
          %v1693 = vpack.c.b16 %v1612, %v1609
          %v1694 = vpack.c.b16 %v1616, %v1613
          %v1695 = vpack.c.b16 %v1617, %v1614
          %v1696 = vpack.c.b16 %v1618, %v1615
          %v1697 = vpack.c.b16 %v1622, %v1619
          %v1698 = vpack.c.b16 %v1623, %v1620
          %v1699 = vpack.c.b16 %v1624, %v1621
          %v1700 = vpack.c.b16 %v1628, %v1625
          %v1701 = vpack.c.b16 %v1629, %v1626
          %v1702 = vpack.c.b16 %v1630, %v1627
          %v1703 = vpack.c.b16 %v1634, %v1631
          %v1704 = vpack.c.b16 %v1635, %v1632
          %v1705 = vpack.c.b16 %v1636, %v1633
          %v1706 = vpack.c.b16 %v1640, %v1637
          %v1707 = vpack.c.b16 %v1641, %v1638
          %v1708 = vpack.c.b16 %v1642, %v1639
          %v1709 = vpack.c.b16 %v1646, %v1643
          %v1710 = vpack.c.b16 %v1647, %v1644
          %v1711 = vpack.c.b16 %v1648, %v1645
          %v1712 = vpack.c.b16 %v1652, %v1649
          %v1713 = vpack.c.b16 %v1653, %v1650
          %v1714 = vpack.c.b16 %v1654, %v1651
          %v1715 = vpack.c.b16 %v1658, %v1655
          %v1716 = vpack.c.b16 %v1659, %v1656
          %v1717 = vpack.c.b16 %v1660, %v1657
          %v1718 = vpack.c.b16 %v1664, %v1661
          %v1719 = vpack.c.b16 %v1665, %v1662
          %v1720 = vpack.c.b16 %v1666, %v1663
          %v1721 = vpack.c.b16 %v1670, %v1667
          %v1722 = vpack.c.b16 %v1671, %v1668
          %v1723 = vpack.c.b16 %v1672, %v1669
          %v1724 = vpack.c.b16 %v1676, %v1673
          %v1725 = vpack.c.b16 %v1677, %v1674
          %v1726 = vpack.c.b16 %v1678, %v1675
          %1775 = vmatprep.subr.bf16.mxu0 %v1680
          %1776 = vmatpush1.bf16.msra.mxu0 %v1679
          %1777 = vmatprep.subr.bf16.mxu0 %v1683
          %1778 = vmatpush1.bf16.msra.mxu0 %v1682
          %1779 = vmatprep.subr.bf16.mxu0 %v1686
          %1780 = vmatpush1.bf16.msra.mxu0 %v1685
          %1781 = vmatprep.subr.bf16.mxu0 %v1689
          %1782 = vmatpush1.bf16.msra.mxu0 %v1688
          %1783 = vmatprep.subr.bf16.mxu0 %v1692
          %1784 = vmatpush1.bf16.msra.mxu0 %v1691
          %1785 = vmatprep.subr.bf16.mxu0 %v1695
          %1786 = vmatpush1.bf16.msra.mxu0 %v1694
          %1787 = vmatprep.subr.bf16.mxu0 %v1698
          %1788 = vmatpush1.bf16.msra.mxu0 %v1697
          %1789 = vmatprep.subr.bf16.mxu0 %v1701
          %1790 = vmatpush1.bf16.msra.mxu0 %v1700
          %1791 = vmatprep.subr.bf16.mxu0 %v1704
          %1792 = vmatpush1.bf16.msra.mxu0 %v1703
          %1793 = vmatprep.subr.bf16.mxu0 %v1707
          %1794 = vmatpush1.bf16.msra.mxu0 %v1706
          %1795 = vmatprep.subr.bf16.mxu0 %v1710
          %1796 = vmatpush1.bf16.msra.mxu0 %v1709
          %1797 = vmatprep.subr.bf16.mxu0 %v1713
          %1798 = vmatpush1.bf16.msra.mxu0 %v1712
          %1799 = vmatprep.subr.bf16.mxu0 %v1716
          %1800 = vmatpush1.bf16.msra.mxu0 %v1715
          %1801 = vmatprep.subr.bf16.mxu0 %v1719
          %1802 = vmatpush1.bf16.msra.mxu0 %v1718
          %1803 = vmatprep.subr.bf16.mxu0 %v1722
          %1804 = vmatpush1.bf16.msra.mxu0 %v1721
          %1805 = vmatprep.subr.bf16.mxu0 %v1725
          %1806 = vmatpush1.bf16.msra.mxu0 %v1724
          %1807 = vmatprep.mubr.bf16.mxu0 %v1516
          %1808 = vmatmul.mubr.bf16.gmra.mrb[0].mxu0 %v1515
          %v1809 = vpop.f32.mrb[0].mxu0
          %v1810 = vadd.f32 %v1500, %v1809
          %v1811 = vpop.f32.mrb[0].mxu0
          %v1812 = vadd.f32 %v1504, %v1811
          %v1813 = vpop.f32.mrb[0].mxu0
          %v1814 = vpop.f32.mrb[0].mxu0
          %1815 = vdwg.mxu0
          %1816 = vmatprep.subr.bf16.mxu0 0
          %1817 = vmatpush1.bf16.msra.mxu0 %v1681
          %1818 = vmatprep.subr.bf16.mxu0 0
          %1819 = vmatpush1.bf16.msra.mxu0 %v1684
          %1820 = vmatprep.subr.bf16.mxu0 0
          %1821 = vmatpush1.bf16.msra.mxu0 %v1687
          %1822 = vmatprep.subr.bf16.mxu0 0
          %1823 = vmatpush1.bf16.msra.mxu0 %v1690
          %1824 = vmatprep.subr.bf16.mxu0 0
          %1825 = vmatpush1.bf16.msra.mxu0 %v1693
          %1826 = vmatprep.subr.bf16.mxu0 0
          %1827 = vmatpush1.bf16.msra.mxu0 %v1696
          %1828 = vmatprep.subr.bf16.mxu0 0
          %1829 = vmatpush1.bf16.msra.mxu0 %v1699
          %1830 = vmatprep.subr.bf16.mxu0 0
          %1831 = vmatpush1.bf16.msra.mxu0 %v1702
          %1832 = vmatprep.subr.bf16.mxu0 0
          %1833 = vmatpush1.bf16.msra.mxu0 %v1705
          %1834 = vmatprep.subr.bf16.mxu0 0
          %1835 = vmatpush1.bf16.msra.mxu0 %v1708
          %1836 = vmatprep.subr.bf16.mxu0 0
          %1837 = vmatpush1.bf16.msra.mxu0 %v1711
          %1838 = vmatprep.subr.bf16.mxu0 0
          %1839 = vmatpush1.bf16.msra.mxu0 %v1714
          %1840 = vmatprep.subr.bf16.mxu0 0
          %1841 = vmatpush1.bf16.msra.mxu0 %v1717
          %1842 = vmatprep.subr.bf16.mxu0 0
          %1843 = vmatpush1.bf16.msra.mxu0 %v1720
          %1844 = vmatprep.subr.bf16.mxu0 0
          %1845 = vmatpush1.bf16.msra.mxu0 %v1723
          %1846 = vmatprep.subr.bf16.mxu0 0
          %1847 = vmatpush1.bf16.msra.mxu0 %v1726
          %1848 = vmatprep.mubr.bf16.mxu0 %v1516
          %1849 = vmatmul.mubr.bf16.gmra.mrb[0].mxu0 %v1515
          %v1850 = vpop.f32.mrb[0].mxu0
          %v1851 = vadd.f32 %v1508, %v1850
          %v1852 = vpop.f32.mrb[0].mxu0
          %v1853 = vpop.f32.mrb[0].mxu0
          %v1854 = vpop.f32.mrb[0].mxu0
          %1855 = vdwg.mxu0
          %v1856 = vld [vmem:[%s1337] sm:$0x7]
          %v1858 = vlaneseq
          %v1859 = vshrl.u32 %v1858, 7
          %v1860 = vsub.s32 0, %v1859
          %v1861 = vrot.slane %v1856, %v1860
          %v1862 = vlaneseq
          %v1863 = vshrl.u32 %v1862, 7
          %v1864 = vsub.s32 1, %v1863
          %v1865 = vrot.slane %v1856, %v1864
          %v1866 = vlaneseq
          %v1867 = vshrl.u32 %v1866, 7
          %v1868 = vsub.s32 2, %v1867
          %v1869 = vrot.slane %v1856, %v1868
          %v1873 = vmul.f32 %v1810, %v1861
          %v1874 = vmul.f32 %v1812, %v1865
          %v1875 = vmul.f32 %v1851, %v1869
          %v1876 = vld [vmem:[%s1348] sm:$0x7]
          %v1878 = vlaneseq
          %v1879 = vshrl.u32 %v1878, 7
          %v1880 = vsub.s32 0, %v1879
          %v1881 = vrot.slane %v1876, %v1880
          %v1882 = vlaneseq
          %v1883 = vshrl.u32 %v1882, 7
          %v1884 = vsub.s32 1, %v1883
          %v1885 = vrot.slane %v1876, %v1884
          %v1886 = vlaneseq
          %v1887 = vshrl.u32 %v1886, 7
          %v1888 = vsub.s32 2, %v1887
          %v1889 = vrot.slane %v1876, %v1888
          %v1893 = vadd.f32 %v1873, %v1881
          %v1894 = vadd.f32 %v1874, %v1885
          %v1895 = vadd.f32 %v1875, %v1889
          %v1896 = vmax.f32 %v1893, 0.0
          %v1897 = vmax.f32 %v1894, 0.0
          %v1898 = vmax.f32 %v1895, 0.0
          %v1899 = vpack.c.bf16 %v1896, %v1896
          %v1900 = vpack.c.bf16 %v1897, %v1897
          %v1901 = vpack.c.bf16 %v1898, %v1898
          %v1905 = vunpack.c.l.b16 %v1899
          %v1906 = vunpack.c.l.b16 %v1900
          %v1907 = vunpack.c.l.b16 %v1901
          %v1908 = vpack.c.b16 %v1906, %v1905
          %v1909 = vpack.c.b16 %v1907, %v1907
          %s1912 = smul.u32 %s30, 3
          %s1913 = smul.addr %s1912, 4
          %s1914 = scalar_lea.vmem [#allocation3], %s1913
          %1915 = vst [vmem:[%s1914] sm:$0xff] %v1908
          %1916 = vst [vmem:[%s1914 + $0x8] sm:$0xf] %v1909
          %v1917 = vld [vmem:[%s0] sm:$0xff]
          %v1918 = vld [vmem:[%s0 + $0x8] sm:$0xff]
          %v1919 = vpack.c.bf16 %v1917, %v1917
          %v1920 = vpack.c.bf16 %v1918, %v1918
          %v1921 = vld [vmem:[%s1238] sm:$0xff]
          %v1922 = vld [vmem:[%s1238 + $0x8] sm:$0xf]
          %v1923 = vld [vmem:[%s1238 + $0xc] sm:$0xff]
          %v1924 = vld [vmem:[%s1238 + $0x14] sm:$0xf]
          %v1925 = vld [vmem:[%s1238 + $0x18] sm:$0xff]
          %v1926 = vld [vmem:[%s1238 + $0x20] sm:$0xf]
          %v1927 = vld [vmem:[%s1238 + $0x24] sm:$0xff]
          %v1928 = vld [vmem:[%s1238 + $0x2c] sm:$0xf]
          %v1929 = vld [vmem:[%s1238 + $0x30] sm:$0xff]
          %v1930 = vld [vmem:[%s1238 + $0x38] sm:$0xf]
          %v1931 = vld [vmem:[%s1238 + $0x3c] sm:$0xff]
          %v1932 = vld [vmem:[%s1238 + $0x44] sm:$0xf]
          %v1933 = vld [vmem:[%s1238 + $0x48] sm:$0xff]
          %v1934 = vld [vmem:[%s1238 + $0x50] sm:$0xf]
          %v1935 = vld [vmem:[%s1238 + $0x54] sm:$0xff]
          %v1936 = vld [vmem:[%s1238 + $0x5c] sm:$0xf]
          %v1937 = vld [vmem:[%s1238 + $0x60] sm:$0xff]
          %v1938 = vld [vmem:[%s1238 + $0x68] sm:$0xf]
          %v1939 = vld [vmem:[%s1238 + $0x6c] sm:$0xff]
          %v1940 = vld [vmem:[%s1238 + $0x74] sm:$0xf]
          %v1941 = vld [vmem:[%s1238 + $0x78] sm:$0xff]
          %v1942 = vld [vmem:[%s1238 + $0x80] sm:$0xf]
          %v1943 = vld [vmem:[%s1238 + $0x84] sm:$0xff]
          %v1944 = vld [vmem:[%s1238 + $0x8c] sm:$0xf]
          %v1945 = vld [vmem:[%s1238 + $0x90] sm:$0xff]
          %v1946 = vld [vmem:[%s1238 + $0x98] sm:$0xf]
          %v1947 = vld [vmem:[%s1238 + $0x9c] sm:$0xff]
          %v1948 = vld [vmem:[%s1238 + $0xa4] sm:$0xf]
          %v1949 = vld [vmem:[%s1238 + $0xa8] sm:$0xff]
          %v1950 = vld [vmem:[%s1238 + $0xb0] sm:$0xf]
          %v1951 = vld [vmem:[%s1238 + $0xb4] sm:$0xff]
          %v1952 = vld [vmem:[%s1238 + $0xbc] sm:$0xf]
          %v1953 = vld [vmem:[%s1238 + $0xc0] sm:$0xff]
          %v1954 = vld [vmem:[%s1238 + $0xc8] sm:$0xf]
          %v1955 = vld [vmem:[%s1238 + $0xcc] sm:$0xff]
          %v1956 = vld [vmem:[%s1238 + $0xd4] sm:$0xf]
          %v1957 = vld [vmem:[%s1238 + $0xd8] sm:$0xff]
          %v1958 = vld [vmem:[%s1238 + $0xe0] sm:$0xf]
          %v1959 = vld [vmem:[%s1238 + $0xe4] sm:$0xff]
          %v1960 = vld [vmem:[%s1238 + $0xec] sm:$0xf]
          %v1961 = vld [vmem:[%s1238 + $0xf0] sm:$0xff]
          %v1962 = vld [vmem:[%s1238 + $0xf8] sm:$0xf]
          %v1963 = vld [vmem:[%s1238 + $0xfc] sm:$0xff]
          %v1964 = vld [vmem:[%s1238 + $0x104] sm:$0xf]
          %v1965 = vld [vmem:[%s1238 + $0x108] sm:$0xff]
          %v1966 = vld [vmem:[%s1238 + $0x110] sm:$0xf]
          %v1967 = vld [vmem:[%s1238 + $0x114] sm:$0xff]
          %v1968 = vld [vmem:[%s1238 + $0x11c] sm:$0xf]
          %v1969 = vld [vmem:[%s1238 + $0x120] sm:$0xff]
          %v1970 = vld [vmem:[%s1238 + $0x128] sm:$0xf]
          %v1971 = vld [vmem:[%s1238 + $0x12c] sm:$0xff]
          %v1972 = vld [vmem:[%s1238 + $0x134] sm:$0xf]
          %v1973 = vld [vmem:[%s1238 + $0x138] sm:$0xff]
          %v1974 = vld [vmem:[%s1238 + $0x140] sm:$0xf]
          %v1975 = vld [vmem:[%s1238 + $0x144] sm:$0xff]
          %v1976 = vld [vmem:[%s1238 + $0x14c] sm:$0xf]
          %v1977 = vld [vmem:[%s1238 + $0x150] sm:$0xff]
          %v1978 = vld [vmem:[%s1238 + $0x158] sm:$0xf]
          %v1979 = vld [vmem:[%s1238 + $0x15c] sm:$0xff]
          %v1980 = vld [vmem:[%s1238 + $0x164] sm:$0xf]
          %v1981 = vld [vmem:[%s1238 + $0x168] sm:$0xff]
          %v1982 = vld [vmem:[%s1238 + $0x170] sm:$0xf]
          %v1983 = vld [vmem:[%s1238 + $0x174] sm:$0xff]
          %v1984 = vld [vmem:[%s1238 + $0x17c] sm:$0xf]
          %v1985 = vld [vmem:[%s1372] sm:$0x7]
          %v1987 = vlaneseq
          %v1988 = vshrl.u32 %v1987, 7
          %v1989 = vsub.s32 0, %v1988
          %v1990 = vrot.slane %v1985, %v1989
          %v1991 = vlaneseq
          %v1992 = vshrl.u32 %v1991, 7
          %v1993 = vsub.s32 1, %v1992
          %v1994 = vrot.slane %v1985, %v1993
          %v1995 = vlaneseq
          %v1996 = vshrl.u32 %v1995, 7
          %v1997 = vsub.s32 2, %v1996
          %v1998 = vrot.slane %v1985, %v1997
          %v2066 = vunpack.c.l.b16 %v1921
          %v2067 = vunpack.c.h.b16 %v1921
          %v2068 = vunpack.c.l.b16 %v1922
          %v2069 = vunpack.c.l.b16 %v1923
          %v2070 = vunpack.c.h.b16 %v1923
          %v2071 = vunpack.c.l.b16 %v1924
          %v2072 = vunpack.c.l.b16 %v1925
          %v2073 = vunpack.c.h.b16 %v1925
          %v2074 = vunpack.c.l.b16 %v1926
          %v2075 = vunpack.c.l.b16 %v1927
          %v2076 = vunpack.c.h.b16 %v1927
          %v2077 = vunpack.c.l.b16 %v1928
          %v2078 = vunpack.c.l.b16 %v1929
          %v2079 = vunpack.c.h.b16 %v1929
          %v2080 = vunpack.c.l.b16 %v1930
          %v2081 = vunpack.c.l.b16 %v1931
          %v2082 = vunpack.c.h.b16 %v1931
          %v2083 = vunpack.c.l.b16 %v1932
          %v2084 = vunpack.c.l.b16 %v1933
          %v2085 = vunpack.c.h.b16 %v1933
          %v2086 = vunpack.c.l.b16 %v1934
          %v2087 = vunpack.c.l.b16 %v1935
          %v2088 = vunpack.c.h.b16 %v1935
          %v2089 = vunpack.c.l.b16 %v1936
          %v2090 = vunpack.c.l.b16 %v1937
          %v2091 = vunpack.c.h.b16 %v1937
          %v2092 = vunpack.c.l.b16 %v1938
          %v2093 = vunpack.c.l.b16 %v1939
          %v2094 = vunpack.c.h.b16 %v1939
          %v2095 = vunpack.c.l.b16 %v1940
          %v2096 = vunpack.c.l.b16 %v1941
          %v2097 = vunpack.c.h.b16 %v1941
          %v2098 = vunpack.c.l.b16 %v1942
          %v2099 = vunpack.c.l.b16 %v1943
          %v2100 = vunpack.c.h.b16 %v1943
          %v2101 = vunpack.c.l.b16 %v1944
          %v2102 = vunpack.c.l.b16 %v1945
          %v2103 = vunpack.c.h.b16 %v1945
          %v2104 = vunpack.c.l.b16 %v1946
          %v2105 = vunpack.c.l.b16 %v1947
          %v2106 = vunpack.c.h.b16 %v1947
          %v2107 = vunpack.c.l.b16 %v1948
          %v2108 = vunpack.c.l.b16 %v1949
          %v2109 = vunpack.c.h.b16 %v1949
          %v2110 = vunpack.c.l.b16 %v1950
          %v2111 = vunpack.c.l.b16 %v1951
          %v2112 = vunpack.c.h.b16 %v1951
          %v2113 = vunpack.c.l.b16 %v1952
          %v2114 = vunpack.c.l.b16 %v1953
          %v2115 = vunpack.c.h.b16 %v1953
          %v2116 = vunpack.c.l.b16 %v1954
          %v2117 = vunpack.c.l.b16 %v1955
          %v2118 = vunpack.c.h.b16 %v1955
          %v2119 = vunpack.c.l.b16 %v1956
          %v2120 = vunpack.c.l.b16 %v1957
          %v2121 = vunpack.c.h.b16 %v1957
          %v2122 = vunpack.c.l.b16 %v1958
          %v2123 = vunpack.c.l.b16 %v1959
          %v2124 = vunpack.c.h.b16 %v1959
          %v2125 = vunpack.c.l.b16 %v1960
          %v2126 = vunpack.c.l.b16 %v1961
          %v2127 = vunpack.c.h.b16 %v1961
          %v2128 = vunpack.c.l.b16 %v1962
          %v2129 = vunpack.c.l.b16 %v1963
          %v2130 = vunpack.c.h.b16 %v1963
          %v2131 = vunpack.c.l.b16 %v1964
          %v2132 = vunpack.c.l.b16 %v1965
          %v2133 = vunpack.c.h.b16 %v1965
          %v2134 = vunpack.c.l.b16 %v1966
          %v2135 = vunpack.c.l.b16 %v1967
          %v2136 = vunpack.c.h.b16 %v1967
          %v2137 = vunpack.c.l.b16 %v1968
          %v2138 = vunpack.c.l.b16 %v1969
          %v2139 = vunpack.c.h.b16 %v1969
          %v2140 = vunpack.c.l.b16 %v1970
          %v2141 = vunpack.c.l.b16 %v1971
          %v2142 = vunpack.c.h.b16 %v1971
          %v2143 = vunpack.c.l.b16 %v1972
          %v2144 = vunpack.c.l.b16 %v1973
          %v2145 = vunpack.c.h.b16 %v1973
          %v2146 = vunpack.c.l.b16 %v1974
          %v2147 = vunpack.c.l.b16 %v1975
          %v2148 = vunpack.c.h.b16 %v1975
          %v2149 = vunpack.c.l.b16 %v1976
          %v2150 = vunpack.c.l.b16 %v1977
          %v2151 = vunpack.c.h.b16 %v1977
          %v2152 = vunpack.c.l.b16 %v1978
          %v2153 = vunpack.c.l.b16 %v1979
          %v2154 = vunpack.c.h.b16 %v1979
          %v2155 = vunpack.c.l.b16 %v1980
          %v2156 = vunpack.c.l.b16 %v1981
          %v2157 = vunpack.c.h.b16 %v1981
          %v2158 = vunpack.c.l.b16 %v1982
          %v2159 = vunpack.c.l.b16 %v1983
          %v2160 = vunpack.c.h.b16 %v1983
          %v2161 = vunpack.c.l.b16 %v1984
          %v2162 = vpack.c.b16 %v2069, %v2066
          %v2163 = vpack.c.b16 %v2070, %v2067
          %v2164 = vpack.c.b16 %v2071, %v2068
          %v2165 = vpack.c.b16 %v2075, %v2072
          %v2166 = vpack.c.b16 %v2076, %v2073
          %v2167 = vpack.c.b16 %v2077, %v2074
          %v2168 = vpack.c.b16 %v2081, %v2078
          %v2169 = vpack.c.b16 %v2082, %v2079
          %v2170 = vpack.c.b16 %v2083, %v2080
          %v2171 = vpack.c.b16 %v2087, %v2084
          %v2172 = vpack.c.b16 %v2088, %v2085
          %v2173 = vpack.c.b16 %v2089, %v2086
          %v2174 = vpack.c.b16 %v2093, %v2090
          %v2175 = vpack.c.b16 %v2094, %v2091
          %v2176 = vpack.c.b16 %v2095, %v2092
          %v2177 = vpack.c.b16 %v2099, %v2096
          %v2178 = vpack.c.b16 %v2100, %v2097
          %v2179 = vpack.c.b16 %v2101, %v2098
          %v2180 = vpack.c.b16 %v2105, %v2102
          %v2181 = vpack.c.b16 %v2106, %v2103
          %v2182 = vpack.c.b16 %v2107, %v2104
          %v2183 = vpack.c.b16 %v2111, %v2108
          %v2184 = vpack.c.b16 %v2112, %v2109
          %v2185 = vpack.c.b16 %v2113, %v2110
          %v2186 = vpack.c.b16 %v2117, %v2114
          %v2187 = vpack.c.b16 %v2118, %v2115
          %v2188 = vpack.c.b16 %v2119, %v2116
          %v2189 = vpack.c.b16 %v2123, %v2120
          %v2190 = vpack.c.b16 %v2124, %v2121
          %v2191 = vpack.c.b16 %v2125, %v2122
          %v2192 = vpack.c.b16 %v2129, %v2126
          %v2193 = vpack.c.b16 %v2130, %v2127
          %v2194 = vpack.c.b16 %v2131, %v2128
          %v2195 = vpack.c.b16 %v2135, %v2132
          %v2196 = vpack.c.b16 %v2136, %v2133
          %v2197 = vpack.c.b16 %v2137, %v2134
          %v2198 = vpack.c.b16 %v2141, %v2138
          %v2199 = vpack.c.b16 %v2142, %v2139
          %v2200 = vpack.c.b16 %v2143, %v2140
          %v2201 = vpack.c.b16 %v2147, %v2144
          %v2202 = vpack.c.b16 %v2148, %v2145
          %v2203 = vpack.c.b16 %v2149, %v2146
          %v2204 = vpack.c.b16 %v2153, %v2150
          %v2205 = vpack.c.b16 %v2154, %v2151
          %v2206 = vpack.c.b16 %v2155, %v2152
          %v2207 = vpack.c.b16 %v2159, %v2156
          %v2208 = vpack.c.b16 %v2160, %v2157
          %v2209 = vpack.c.b16 %v2161, %v2158
          %2258 = vmatprep.subr.bf16.mxu0 %v2163
          %2259 = vmatpush1.bf16.msra.mxu0 %v2162
          %2260 = vmatprep.subr.bf16.mxu0 %v2166
          %2261 = vmatpush1.bf16.msra.mxu0 %v2165
          %2262 = vmatprep.subr.bf16.mxu0 %v2169
          %2263 = vmatpush1.bf16.msra.mxu0 %v2168
          %2264 = vmatprep.subr.bf16.mxu0 %v2172
          %2265 = vmatpush1.bf16.msra.mxu0 %v2171
          %2266 = vmatprep.subr.bf16.mxu0 %v2175
          %2267 = vmatpush1.bf16.msra.mxu0 %v2174
          %2268 = vmatprep.subr.bf16.mxu0 %v2178
          %2269 = vmatpush1.bf16.msra.mxu0 %v2177
          %2270 = vmatprep.subr.bf16.mxu0 %v2181
          %2271 = vmatpush1.bf16.msra.mxu0 %v2180
          %2272 = vmatprep.subr.bf16.mxu0 %v2184
          %2273 = vmatpush1.bf16.msra.mxu0 %v2183
          %2274 = vmatprep.subr.bf16.mxu0 %v2187
          %2275 = vmatpush1.bf16.msra.mxu0 %v2186
          %2276 = vmatprep.subr.bf16.mxu0 %v2190
          %2277 = vmatpush1.bf16.msra.mxu0 %v2189
          %2278 = vmatprep.subr.bf16.mxu0 %v2193
          %2279 = vmatpush1.bf16.msra.mxu0 %v2192
          %2280 = vmatprep.subr.bf16.mxu0 %v2196
          %2281 = vmatpush1.bf16.msra.mxu0 %v2195
          %2282 = vmatprep.subr.bf16.mxu0 %v2199
          %2283 = vmatpush1.bf16.msra.mxu0 %v2198
          %2284 = vmatprep.subr.bf16.mxu0 %v2202
          %2285 = vmatpush1.bf16.msra.mxu0 %v2201
          %2286 = vmatprep.subr.bf16.mxu0 %v2205
          %2287 = vmatpush1.bf16.msra.mxu0 %v2204
          %2288 = vmatprep.subr.bf16.mxu0 %v2208
          %2289 = vmatpush1.bf16.msra.mxu0 %v2207
          %2290 = vmatprep.mubr.bf16.mxu0 %v1920
          %2291 = vmatmul.mubr.bf16.gmra.mrb[0].mxu0 %v1919
          %v2292 = vpop.f32.mrb[0].mxu0
          %v2293 = vadd.f32 %v1990, %v2292
          %v2294 = vpop.f32.mrb[0].mxu0
          %v2295 = vadd.f32 %v1994, %v2294
          %v2296 = vpop.f32.mrb[0].mxu0
          %v2297 = vpop.f32.mrb[0].mxu0
          %2298 = vdwg.mxu0
          %2299 = vmatprep.subr.bf16.mxu0 0
          %2300 = vmatpush1.bf16.msra.mxu0 %v2164
          %2301 = vmatprep.subr.bf16.mxu0 0
          %2302 = vmatpush1.bf16.msra.mxu0 %v2167
          %2303 = vmatprep.subr.bf16.mxu0 0
          %2304 = vmatpush1.bf16.msra.mxu0 %v2170
          %2305 = vmatprep.subr.bf16.mxu0 0
          %2306 = vmatpush1.bf16.msra.mxu0 %v2173
          %2307 = vmatprep.subr.bf16.mxu0 0
          %2308 = vmatpush1.bf16.msra.mxu0 %v2176
          %2309 = vmatprep.subr.bf16.mxu0 0
          %2310 = vmatpush1.bf16.msra.mxu0 %v2179
          %2311 = vmatprep.subr.bf16.mxu0 0
          %2312 = vmatpush1.bf16.msra.mxu0 %v2182
          %2313 = vmatprep.subr.bf16.mxu0 0
          %2314 = vmatpush1.bf16.msra.mxu0 %v2185
          %2315 = vmatprep.subr.bf16.mxu0 0
          %2316 = vmatpush1.bf16.msra.mxu0 %v2188
          %2317 = vmatprep.subr.bf16.mxu0 0
          %2318 = vmatpush1.bf16.msra.mxu0 %v2191
          %2319 = vmatprep.subr.bf16.mxu0 0
          %2320 = vmatpush1.bf16.msra.mxu0 %v2194
          %2321 = vmatprep.subr.bf16.mxu0 0
          %2322 = vmatpush1.bf16.msra.mxu0 %v2197
          %2323 = vmatprep.subr.bf16.mxu0 0
          %2324 = vmatpush1.bf16.msra.mxu0 %v2200
          %2325 = vmatprep.subr.bf16.mxu0 0
          %2326 = vmatpush1.bf16.msra.mxu0 %v2203
          %2327 = vmatprep.subr.bf16.mxu0 0
          %2328 = vmatpush1.bf16.msra.mxu0 %v2206
          %2329 = vmatprep.subr.bf16.mxu0 0
          %2330 = vmatpush1.bf16.msra.mxu0 %v2209
          %2331 = vmatprep.mubr.bf16.mxu0 %v1920
          %2332 = vmatmul.mubr.bf16.gmra.mrb[0].mxu0 %v1919
          %v2333 = vpop.f32.mrb[0].mxu0
          %v2334 = vadd.f32 %v1998, %v2333
          %v2335 = vpop.f32.mrb[0].mxu0
          %v2336 = vpop.f32.mrb[0].mxu0
          %v2337 = vpop.f32.mrb[0].mxu0
          %2338 = vdwg.mxu0
          %s2339 = smul.addr %s1912, 8
          %s2340 = scalar_lea.vmem [#allocation4], %s2339
          %2341 = vst [vmem:[%s2340] sm:$0xff] %v2293
          %2342 = vst [vmem:[%s2340 + $0x8] sm:$0xff] %v2295
          %2343 = vst [vmem:[%s2340 + $0x10] sm:$0xff] %v2334
        $region150: #{residual_block_forward.1} parent=129 // pred_fallthru
          _
        %p2344 = scmp.eq.s32.totalorder %s29, 1
        // Predicated region
        $region151: #{residual_block_forward.1} parent=129 // pred_check
          %p2345 = pneg %p2344
        $region152: #{residual_block_forward.1} parent=129 // pred_check_branch
          %2347 = sbr.rel (%p2345) target = $region154
        $region153: #{residual_block_forward.1} parent=129 // pred_region
          %v2348 = vld [vmem:[#allocation3] sm:$0xff]
          %v2349 = vld [vmem:[#allocation3 + $0x8] sm:$0xf]
          %v2350 = vld [vmem:[%s1231] sm:$0xff]
          %v2351 = vld [vmem:[%s1231 + $0x8] sm:$0xf]
          %v2352 = vld [vmem:[%s1231 + $0xc] sm:$0xff]
          %v2353 = vld [vmem:[%s1231 + $0x14] sm:$0xf]
          %v2354 = vld [vmem:[%s1231 + $0x18] sm:$0xff]
          %v2355 = vld [vmem:[%s1231 + $0x20] sm:$0xf]
          %v2356 = vld [vmem:[%s1231 + $0x24] sm:$0xff]
          %v2357 = vld [vmem:[%s1231 + $0x2c] sm:$0xf]
          %v2358 = vld [vmem:[%s1231 + $0x30] sm:$0xff]
          %v2359 = vld [vmem:[%s1231 + $0x38] sm:$0xf]
          %v2360 = vld [vmem:[%s1231 + $0x3c] sm:$0xff]
          %v2361 = vld [vmem:[%s1231 + $0x44] sm:$0xf]
          %v2362 = vld [vmem:[%s1231 + $0x48] sm:$0xff]
          %v2363 = vld [vmem:[%s1231 + $0x50] sm:$0xf]
          %v2364 = vld [vmem:[%s1231 + $0x54] sm:$0xff]
          %v2365 = vld [vmem:[%s1231 + $0x5c] sm:$0xf]
          %v2366 = vld [vmem:[%s1231 + $0x60] sm:$0xff]
          %v2367 = vld [vmem:[%s1231 + $0x68] sm:$0xf]
          %v2368 = vld [vmem:[%s1231 + $0x6c] sm:$0xff]
          %v2369 = vld [vmem:[%s1231 + $0x74] sm:$0xf]
          %v2370 = vld [vmem:[%s1231 + $0x78] sm:$0xff]
          %v2371 = vld [vmem:[%s1231 + $0x80] sm:$0xf]
          %v2372 = vld [vmem:[%s1231 + $0x84] sm:$0xff]
          %v2373 = vld [vmem:[%s1231 + $0x8c] sm:$0xf]
          %v2374 = vld [vmem:[%s1231 + $0x90] sm:$0xff]
          %v2375 = vld [vmem:[%s1231 + $0x98] sm:$0xf]
          %v2376 = vld [vmem:[%s1231 + $0x9c] sm:$0xff]
          %v2377 = vld [vmem:[%s1231 + $0xa4] sm:$0xf]
          %v2378 = vld [vmem:[%s1231 + $0xa8] sm:$0xff]
          %v2379 = vld [vmem:[%s1231 + $0xb0] sm:$0xf]
          %v2380 = vld [vmem:[%s1231 + $0xb4] sm:$0xff]
          %v2381 = vld [vmem:[%s1231 + $0xbc] sm:$0xf]
          %v2382 = vld [vmem:[%s1231 + $0xc0] sm:$0xff]
          %v2383 = vld [vmem:[%s1231 + $0xc8] sm:$0xf]
          %v2384 = vld [vmem:[%s1231 + $0xcc] sm:$0xff]
          %v2385 = vld [vmem:[%s1231 + $0xd4] sm:$0xf]
          %v2386 = vld [vmem:[%s1231 + $0xd8] sm:$0xff]
          %v2387 = vld [vmem:[%s1231 + $0xe0] sm:$0xf]
          %v2388 = vld [vmem:[%s1231 + $0xe4] sm:$0xff]
          %v2389 = vld [vmem:[%s1231 + $0xec] sm:$0xf]
          %v2390 = vld [vmem:[%s1231 + $0xf0] sm:$0xff]
          %v2391 = vld [vmem:[%s1231 + $0xf8] sm:$0xf]
          %v2392 = vld [vmem:[%s1231 + $0xfc] sm:$0xff]
          %v2393 = vld [vmem:[%s1231 + $0x104] sm:$0xf]
          %v2394 = vld [vmem:[%s1231 + $0x108] sm:$0xff]
          %v2395 = vld [vmem:[%s1231 + $0x110] sm:$0xf]
          %v2396 = vld [vmem:[%s1231 + $0x114] sm:$0xff]
          %v2397 = vld [vmem:[%s1231 + $0x11c] sm:$0xf]
          %v2398 = vld [vmem:[%s1231 + $0x120] sm:$0xff]
          %v2399 = vld [vmem:[%s1231 + $0x128] sm:$0xf]
          %v2400 = vld [vmem:[%s1231 + $0x12c] sm:$0xff]
          %v2401 = vld [vmem:[%s1231 + $0x134] sm:$0xf]
          %v2402 = vld [vmem:[%s1231 + $0x138] sm:$0xff]
          %v2403 = vld [vmem:[%s1231 + $0x140] sm:$0xf]
          %v2404 = vld [vmem:[%s1231 + $0x144] sm:$0xff]
          %v2405 = vld [vmem:[%s1231 + $0x14c] sm:$0xf]
          %v2406 = vld [vmem:[%s1231 + $0x150] sm:$0xff]
          %v2407 = vld [vmem:[%s1231 + $0x158] sm:$0xf]
          %v2408 = vld [vmem:[%s1231 + $0x15c] sm:$0xff]
          %v2409 = vld [vmem:[%s1231 + $0x164] sm:$0xf]
          %v2410 = vld [vmem:[%s1231 + $0x168] sm:$0xff]
          %v2411 = vld [vmem:[%s1231 + $0x170] sm:$0xf]
          %v2412 = vld [vmem:[%s1231 + $0x174] sm:$0xff]
          %v2413 = vld [vmem:[%s1231 + $0x17c] sm:$0xf]
          %v2414 = vld [vmem:[%s1231 + $0x180] sm:$0xff]
          %v2415 = vld [vmem:[%s1231 + $0x188] sm:$0xf]
          %v2416 = vld [vmem:[%s1231 + $0x18c] sm:$0xff]
          %v2417 = vld [vmem:[%s1231 + $0x194] sm:$0xf]
          %v2418 = vld [vmem:[%s1231 + $0x198] sm:$0xff]
          %v2419 = vld [vmem:[%s1231 + $0x1a0] sm:$0xf]
          %v2420 = vld [vmem:[%s1231 + $0x1a4] sm:$0xff]
          %v2421 = vld [vmem:[%s1231 + $0x1ac] sm:$0xf]
          %v2422 = vld [vmem:[%s1231 + $0x1b0] sm:$0xff]
          %v2423 = vld [vmem:[%s1231 + $0x1b8] sm:$0xf]
          %v2424 = vld [vmem:[%s1231 + $0x1bc] sm:$0xff]
          %v2425 = vld [vmem:[%s1231 + $0x1c4] sm:$0xf]
          %v2426 = vld [vmem:[%s1231 + $0x1c8] sm:$0xff]
          %v2427 = vld [vmem:[%s1231 + $0x1d0] sm:$0xf]
          %v2428 = vld [vmem:[%s1231 + $0x1d4] sm:$0xff]
          %v2429 = vld [vmem:[%s1231 + $0x1dc] sm:$0xf]
          %v2430 = vld [vmem:[%s1231 + $0x1e0] sm:$0xff]
          %v2431 = vld [vmem:[%s1231 + $0x1e8] sm:$0xf]
          %v2432 = vld [vmem:[%s1231 + $0x1ec] sm:$0xff]
          %v2433 = vld [vmem:[%s1231 + $0x1f4] sm:$0xf]
          %v2434 = vld [vmem:[%s1231 + $0x1f8] sm:$0xff]
          %v2435 = vld [vmem:[%s1231 + $0x200] sm:$0xf]
          %v2436 = vld [vmem:[%s1231 + $0x204] sm:$0xff]
          %v2437 = vld [vmem:[%s1231 + $0x20c] sm:$0xf]
          %v2438 = vld [vmem:[%s1231 + $0x210] sm:$0xff]
          %v2439 = vld [vmem:[%s1231 + $0x218] sm:$0xf]
          %v2440 = vld [vmem:[%s1231 + $0x21c] sm:$0xff]
          %v2441 = vld [vmem:[%s1231 + $0x224] sm:$0xf]
          %v2442 = vld [vmem:[%s1231 + $0x228] sm:$0xff]
          %v2443 = vld [vmem:[%s1231 + $0x230] sm:$0xf]
          %v2444 = vld [vmem:[%s1231 + $0x234] sm:$0xff]
          %v2445 = vld [vmem:[%s1231 + $0x23c] sm:$0xf]
          %s2446 = scalar_lea.vmem [#allocation3], 12
          %v2447 = vld [vmem:[%s2446] sm:$0xff]
          %v2448 = vld [vmem:[%s2446 + $0x8] sm:$0xf]
          %v2449 = vld [vmem:[%s1231 + $0x240] sm:$0xff]
          %v2450 = vld [vmem:[%s1231 + $0x248] sm:$0xf]
          %v2451 = vld [vmem:[%s1231 + $0x24c] sm:$0xff]
          %v2452 = vld [vmem:[%s1231 + $0x254] sm:$0xf]
          %v2453 = vld [vmem:[%s1231 + $0x258] sm:$0xff]
          %v2454 = vld [vmem:[%s1231 + $0x260] sm:$0xf]
          %v2455 = vld [vmem:[%s1231 + $0x264] sm:$0xff]
          %v2456 = vld [vmem:[%s1231 + $0x26c] sm:$0xf]
          %v2457 = vld [vmem:[%s1231 + $0x270] sm:$0xff]
          %v2458 = vld [vmem:[%s1231 + $0x278] sm:$0xf]
          %v2459 = vld [vmem:[%s1231 + $0x27c] sm:$0xff]
          %v2460 = vld [vmem:[%s1231 + $0x284] sm:$0xf]
          %v2461 = vld [vmem:[%s1231 + $0x288] sm:$0xff]
          %v2462 = vld [vmem:[%s1231 + $0x290] sm:$0xf]
          %v2463 = vld [vmem:[%s1231 + $0x294] sm:$0xff]
          %v2464 = vld [vmem:[%s1231 + $0x29c] sm:$0xf]
          %v2465 = vld [vmem:[%s1231 + $0x2a0] sm:$0xff]
          %v2466 = vld [vmem:[%s1231 + $0x2a8] sm:$0xf]
          %v2467 = vld [vmem:[%s1231 + $0x2ac] sm:$0xff]
          %v2468 = vld [vmem:[%s1231 + $0x2b4] sm:$0xf]
          %v2469 = vld [vmem:[%s1231 + $0x2b8] sm:$0xff]
          %v2470 = vld [vmem:[%s1231 + $0x2c0] sm:$0xf]
          %v2471 = vld [vmem:[%s1231 + $0x2c4] sm:$0xff]
          %v2472 = vld [vmem:[%s1231 + $0x2cc] sm:$0xf]
          %v2473 = vld [vmem:[%s1231 + $0x2d0] sm:$0xff]
          %v2474 = vld [vmem:[%s1231 + $0x2d8] sm:$0xf]
          %v2475 = vld [vmem:[%s1231 + $0x2dc] sm:$0xff]
          %v2476 = vld [vmem:[%s1231 + $0x2e4] sm:$0xf]
          %v2477 = vld [vmem:[%s1231 + $0x2e8] sm:$0xff]
          %v2478 = vld [vmem:[%s1231 + $0x2f0] sm:$0xf]
          %v2479 = vld [vmem:[%s1231 + $0x2f4] sm:$0xff]
          %v2480 = vld [vmem:[%s1231 + $0x2fc] sm:$0xf]
          %v2481 = vld [vmem:[%s1231 + $0x300] sm:$0xff]
          %v2482 = vld [vmem:[%s1231 + $0x308] sm:$0xf]
          %v2483 = vld [vmem:[%s1231 + $0x30c] sm:$0xff]
          %v2484 = vld [vmem:[%s1231 + $0x314] sm:$0xf]
          %v2485 = vld [vmem:[%s1231 + $0x318] sm:$0xff]
          %v2486 = vld [vmem:[%s1231 + $0x320] sm:$0xf]
          %v2487 = vld [vmem:[%s1231 + $0x324] sm:$0xff]
          %v2488 = vld [vmem:[%s1231 + $0x32c] sm:$0xf]
          %v2489 = vld [vmem:[%s1231 + $0x330] sm:$0xff]
          %v2490 = vld [vmem:[%s1231 + $0x338] sm:$0xf]
          %v2491 = vld [vmem:[%s1231 + $0x33c] sm:$0xff]
          %v2492 = vld [vmem:[%s1231 + $0x344] sm:$0xf]
          %v2493 = vld [vmem:[%s1231 + $0x348] sm:$0xff]
          %v2494 = vld [vmem:[%s1231 + $0x350] sm:$0xf]
          %v2495 = vld [vmem:[%s1231 + $0x354] sm:$0xff]
          %v2496 = vld [vmem:[%s1231 + $0x35c] sm:$0xf]
          %v2497 = vld [vmem:[%s1231 + $0x360] sm:$0xff]
          %v2498 = vld [vmem:[%s1231 + $0x368] sm:$0xf]
          %v2499 = vld [vmem:[%s1231 + $0x36c] sm:$0xff]
          %v2500 = vld [vmem:[%s1231 + $0x374] sm:$0xf]
          %v2501 = vld [vmem:[%s1231 + $0x378] sm:$0xff]
          %v2502 = vld [vmem:[%s1231 + $0x380] sm:$0xf]
          %v2503 = vld [vmem:[%s1231 + $0x384] sm:$0xff]
          %v2504 = vld [vmem:[%s1231 + $0x38c] sm:$0xf]
          %v2505 = vld [vmem:[%s1231 + $0x390] sm:$0xff]
          %v2506 = vld [vmem:[%s1231 + $0x398] sm:$0xf]
          %v2507 = vld [vmem:[%s1231 + $0x39c] sm:$0xff]
          %v2508 = vld [vmem:[%s1231 + $0x3a4] sm:$0xf]
          %v2509 = vld [vmem:[%s1231 + $0x3a8] sm:$0xff]
          %v2510 = vld [vmem:[%s1231 + $0x3b0] sm:$0xf]
          %v2511 = vld [vmem:[%s1231 + $0x3b4] sm:$0xff]
          %v2512 = vld [vmem:[%s1231 + $0x3bc] sm:$0xf]
          %v2513 = vld [vmem:[%s1231 + $0x3c0] sm:$0xff]
          %v2514 = vld [vmem:[%s1231 + $0x3c8] sm:$0xf]
          %v2515 = vld [vmem:[%s1231 + $0x3cc] sm:$0xff]
          %v2516 = vld [vmem:[%s1231 + $0x3d4] sm:$0xf]
          %v2517 = vld [vmem:[%s1231 + $0x3d8] sm:$0xff]
          %v2518 = vld [vmem:[%s1231 + $0x3e0] sm:$0xf]
          %v2519 = vld [vmem:[%s1231 + $0x3e4] sm:$0xff]
          %v2520 = vld [vmem:[%s1231 + $0x3ec] sm:$0xf]
          %v2521 = vld [vmem:[%s1231 + $0x3f0] sm:$0xff]
          %v2522 = vld [vmem:[%s1231 + $0x3f8] sm:$0xf]
          %v2523 = vld [vmem:[%s1231 + $0x3fc] sm:$0xff]
          %v2524 = vld [vmem:[%s1231 + $0x404] sm:$0xf]
          %v2525 = vld [vmem:[%s1231 + $0x408] sm:$0xff]
          %v2526 = vld [vmem:[%s1231 + $0x410] sm:$0xf]
          %v2527 = vld [vmem:[%s1231 + $0x414] sm:$0xff]
          %v2528 = vld [vmem:[%s1231 + $0x41c] sm:$0xf]
          %v2529 = vld [vmem:[%s1231 + $0x420] sm:$0xff]
          %v2530 = vld [vmem:[%s1231 + $0x428] sm:$0xf]
          %v2531 = vld [vmem:[%s1231 + $0x42c] sm:$0xff]
          %v2532 = vld [vmem:[%s1231 + $0x434] sm:$0xf]
          %v2533 = vld [vmem:[%s1231 + $0x438] sm:$0xff]
          %v2534 = vld [vmem:[%s1231 + $0x440] sm:$0xf]
          %v2535 = vld [vmem:[%s1231 + $0x444] sm:$0xff]
          %v2536 = vld [vmem:[%s1231 + $0x44c] sm:$0xf]
          %v2537 = vld [vmem:[%s1231 + $0x450] sm:$0xff]
          %v2538 = vld [vmem:[%s1231 + $0x458] sm:$0xf]
          %v2539 = vld [vmem:[%s1231 + $0x45c] sm:$0xff]
          %v2540 = vld [vmem:[%s1231 + $0x464] sm:$0xf]
          %v2541 = vld [vmem:[%s1231 + $0x468] sm:$0xff]
          %v2542 = vld [vmem:[%s1231 + $0x470] sm:$0xf]
          %v2543 = vld [vmem:[%s1231 + $0x474] sm:$0xff]
          %v2544 = vld [vmem:[%s1231 + $0x47c] sm:$0xf]
          %v2547 = vunpack.c.l.b16 %v2447
          %v2548 = vunpack.c.h.b16 %v2447
          %v2549 = vunpack.c.l.b16 %v2448
          %v2550 = vpack.c.b16 %v2547, %v2547
          %v2551 = vpack.c.b16 %v2548, %v2548
          %v2552 = vpack.c.b16 %v2549, %v2549
          %v2652 = vunpack.c.l.b16 %v2449
          %v2653 = vunpack.c.h.b16 %v2449
          %v2654 = vunpack.c.l.b16 %v2450
          %v2655 = vunpack.c.l.b16 %v2451
          %v2656 = vunpack.c.h.b16 %v2451
          %v2657 = vunpack.c.l.b16 %v2452
          %v2658 = vunpack.c.l.b16 %v2453
          %v2659 = vunpack.c.h.b16 %v2453
          %v2660 = vunpack.c.l.b16 %v2454
          %v2661 = vunpack.c.l.b16 %v2455
          %v2662 = vunpack.c.h.b16 %v2455
          %v2663 = vunpack.c.l.b16 %v2456
          %v2664 = vunpack.c.l.b16 %v2457
          %v2665 = vunpack.c.h.b16 %v2457
          %v2666 = vunpack.c.l.b16 %v2458
          %v2667 = vunpack.c.l.b16 %v2459
          %v2668 = vunpack.c.h.b16 %v2459
          %v2669 = vunpack.c.l.b16 %v2460
          %v2670 = vunpack.c.l.b16 %v2461
          %v2671 = vunpack.c.h.b16 %v2461
          %v2672 = vunpack.c.l.b16 %v2462
          %v2673 = vunpack.c.l.b16 %v2463
          %v2674 = vunpack.c.h.b16 %v2463
          %v2675 = vunpack.c.l.b16 %v2464
          %v2676 = vunpack.c.l.b16 %v2465
          %v2677 = vunpack.c.h.b16 %v2465
          %v2678 = vunpack.c.l.b16 %v2466
          %v2679 = vunpack.c.l.b16 %v2467
          %v2680 = vunpack.c.h.b16 %v2467
          %v2681 = vunpack.c.l.b16 %v2468
          %v2682 = vunpack.c.l.b16 %v2469
          %v2683 = vunpack.c.h.b16 %v2469
          %v2684 = vunpack.c.l.b16 %v2470
          %v2685 = vunpack.c.l.b16 %v2471
          %v2686 = vunpack.c.h.b16 %v2471
          %v2687 = vunpack.c.l.b16 %v2472
          %v2688 = vunpack.c.l.b16 %v2473
          %v2689 = vunpack.c.h.b16 %v2473
          %v2690 = vunpack.c.l.b16 %v2474
          %v2691 = vunpack.c.l.b16 %v2475
          %v2692 = vunpack.c.h.b16 %v2475
          %v2693 = vunpack.c.l.b16 %v2476
          %v2694 = vunpack.c.l.b16 %v2477
          %v2695 = vunpack.c.h.b16 %v2477
          %v2696 = vunpack.c.l.b16 %v2478
          %v2697 = vunpack.c.l.b16 %v2479
          %v2698 = vunpack.c.h.b16 %v2479
          %v2699 = vunpack.c.l.b16 %v2480
          %v2700 = vunpack.c.l.b16 %v2481
          %v2701 = vunpack.c.h.b16 %v2481
          %v2702 = vunpack.c.l.b16 %v2482
          %v2703 = vunpack.c.l.b16 %v2483
          %v2704 = vunpack.c.h.b16 %v2483
          %v2705 = vunpack.c.l.b16 %v2484
          %v2706 = vunpack.c.l.b16 %v2485
          %v2707 = vunpack.c.h.b16 %v2485
          %v2708 = vunpack.c.l.b16 %v2486
          %v2709 = vunpack.c.l.b16 %v2487
          %v2710 = vunpack.c.h.b16 %v2487
          %v2711 = vunpack.c.l.b16 %v2488
          %v2712 = vunpack.c.l.b16 %v2489
          %v2713 = vunpack.c.h.b16 %v2489
          %v2714 = vunpack.c.l.b16 %v2490
          %v2715 = vunpack.c.l.b16 %v2491
          %v2716 = vunpack.c.h.b16 %v2491
          %v2717 = vunpack.c.l.b16 %v2492
          %v2718 = vunpack.c.l.b16 %v2493
          %v2719 = vunpack.c.h.b16 %v2493
          %v2720 = vunpack.c.l.b16 %v2494
          %v2721 = vunpack.c.l.b16 %v2495
          %v2722 = vunpack.c.h.b16 %v2495
          %v2723 = vunpack.c.l.b16 %v2496
          %v2724 = vunpack.c.l.b16 %v2497
          %v2725 = vunpack.c.h.b16 %v2497
          %v2726 = vunpack.c.l.b16 %v2498
          %v2727 = vunpack.c.l.b16 %v2499
          %v2728 = vunpack.c.h.b16 %v2499
          %v2729 = vunpack.c.l.b16 %v2500
          %v2730 = vunpack.c.l.b16 %v2501
          %v2731 = vunpack.c.h.b16 %v2501
          %v2732 = vunpack.c.l.b16 %v2502
          %v2733 = vunpack.c.l.b16 %v2503
          %v2734 = vunpack.c.h.b16 %v2503
          %v2735 = vunpack.c.l.b16 %v2504
          %v2736 = vunpack.c.l.b16 %v2505
          %v2737 = vunpack.c.h.b16 %v2505
          %v2738 = vunpack.c.l.b16 %v2506
          %v2739 = vunpack.c.l.b16 %v2507
          %v2740 = vunpack.c.h.b16 %v2507
          %v2741 = vunpack.c.l.b16 %v2508
          %v2742 = vunpack.c.l.b16 %v2509
          %v2743 = vunpack.c.h.b16 %v2509
          %v2744 = vunpack.c.l.b16 %v2510
          %v2745 = vunpack.c.l.b16 %v2511
          %v2746 = vunpack.c.h.b16 %v2511
          %v2747 = vunpack.c.l.b16 %v2512
          %v2748 = vunpack.c.l.b16 %v2513
          %v2749 = vunpack.c.h.b16 %v2513
          %v2750 = vunpack.c.l.b16 %v2514
          %v2751 = vunpack.c.l.b16 %v2515
          %v2752 = vunpack.c.h.b16 %v2515
          %v2753 = vunpack.c.l.b16 %v2516
          %v2754 = vunpack.c.l.b16 %v2517
          %v2755 = vunpack.c.h.b16 %v2517
          %v2756 = vunpack.c.l.b16 %v2518
          %v2757 = vunpack.c.l.b16 %v2519
          %v2758 = vunpack.c.h.b16 %v2519
          %v2759 = vunpack.c.l.b16 %v2520
          %v2760 = vunpack.c.l.b16 %v2521
          %v2761 = vunpack.c.h.b16 %v2521
          %v2762 = vunpack.c.l.b16 %v2522
          %v2763 = vunpack.c.l.b16 %v2523
          %v2764 = vunpack.c.h.b16 %v2523
          %v2765 = vunpack.c.l.b16 %v2524
          %v2766 = vunpack.c.l.b16 %v2525
          %v2767 = vunpack.c.h.b16 %v2525
          %v2768 = vunpack.c.l.b16 %v2526
          %v2769 = vunpack.c.l.b16 %v2527
          %v2770 = vunpack.c.h.b16 %v2527
          %v2771 = vunpack.c.l.b16 %v2528
          %v2772 = vunpack.c.l.b16 %v2529
          %v2773 = vunpack.c.h.b16 %v2529
          %v2774 = vunpack.c.l.b16 %v2530
          %v2775 = vunpack.c.l.b16 %v2531
          %v2776 = vunpack.c.h.b16 %v2531
          %v2777 = vunpack.c.l.b16 %v2532
          %v2778 = vunpack.c.l.b16 %v2533
          %v2779 = vunpack.c.h.b16 %v2533
          %v2780 = vunpack.c.l.b16 %v2534
          %v2781 = vunpack.c.l.b16 %v2535
          %v2782 = vunpack.c.h.b16 %v2535
          %v2783 = vunpack.c.l.b16 %v2536
          %v2784 = vunpack.c.l.b16 %v2537
          %v2785 = vunpack.c.h.b16 %v2537
          %v2786 = vunpack.c.l.b16 %v2538
          %v2787 = vunpack.c.l.b16 %v2539
          %v2788 = vunpack.c.h.b16 %v2539
          %v2789 = vunpack.c.l.b16 %v2540
          %v2790 = vunpack.c.l.b16 %v2541
          %v2791 = vunpack.c.h.b16 %v2541
          %v2792 = vunpack.c.l.b16 %v2542
          %v2793 = vunpack.c.l.b16 %v2543
          %v2794 = vunpack.c.h.b16 %v2543
          %v2795 = vunpack.c.l.b16 %v2544
          %v2796 = vpack.c.b16 %v2655, %v2652
          %v2797 = vpack.c.b16 %v2656, %v2653
          %v2798 = vpack.c.b16 %v2657, %v2654
          %v2799 = vpack.c.b16 %v2661, %v2658
          %v2800 = vpack.c.b16 %v2662, %v2659
          %v2801 = vpack.c.b16 %v2663, %v2660
          %v2802 = vpack.c.b16 %v2667, %v2664
          %v2803 = vpack.c.b16 %v2668, %v2665
          %v2804 = vpack.c.b16 %v2669, %v2666
          %v2805 = vpack.c.b16 %v2673, %v2670
          %v2806 = vpack.c.b16 %v2674, %v2671
          %v2807 = vpack.c.b16 %v2675, %v2672
          %v2808 = vpack.c.b16 %v2679, %v2676
          %v2809 = vpack.c.b16 %v2680, %v2677
          %v2810 = vpack.c.b16 %v2681, %v2678
          %v2811 = vpack.c.b16 %v2685, %v2682
          %v2812 = vpack.c.b16 %v2686, %v2683
          %v2813 = vpack.c.b16 %v2687, %v2684
          %v2814 = vpack.c.b16 %v2691, %v2688
          %v2815 = vpack.c.b16 %v2692, %v2689
          %v2816 = vpack.c.b16 %v2693, %v2690
          %v2817 = vpack.c.b16 %v2697, %v2694
          %v2818 = vpack.c.b16 %v2698, %v2695
          %v2819 = vpack.c.b16 %v2699, %v2696
          %v2820 = vpack.c.b16 %v2703, %v2700
          %v2821 = vpack.c.b16 %v2704, %v2701
          %v2822 = vpack.c.b16 %v2705, %v2702
          %v2823 = vpack.c.b16 %v2709, %v2706
          %v2824 = vpack.c.b16 %v2710, %v2707
          %v2825 = vpack.c.b16 %v2711, %v2708
          %v2826 = vpack.c.b16 %v2715, %v2712
          %v2827 = vpack.c.b16 %v2716, %v2713
          %v2828 = vpack.c.b16 %v2717, %v2714
          %v2829 = vpack.c.b16 %v2721, %v2718
          %v2830 = vpack.c.b16 %v2722, %v2719
          %v2831 = vpack.c.b16 %v2723, %v2720
          %v2832 = vpack.c.b16 %v2727, %v2724
          %v2833 = vpack.c.b16 %v2728, %v2725
          %v2834 = vpack.c.b16 %v2729, %v2726
          %v2835 = vpack.c.b16 %v2733, %v2730
          %v2836 = vpack.c.b16 %v2734, %v2731
          %v2837 = vpack.c.b16 %v2735, %v2732
          %v2838 = vpack.c.b16 %v2739, %v2736
          %v2839 = vpack.c.b16 %v2740, %v2737
          %v2840 = vpack.c.b16 %v2741, %v2738
          %v2841 = vpack.c.b16 %v2745, %v2742
          %v2842 = vpack.c.b16 %v2746, %v2743
          %v2843 = vpack.c.b16 %v2747, %v2744
          %v2844 = vpack.c.b16 %v2751, %v2748
          %v2845 = vpack.c.b16 %v2752, %v2749
          %v2846 = vpack.c.b16 %v2753, %v2750
          %v2847 = vpack.c.b16 %v2757, %v2754
          %v2848 = vpack.c.b16 %v2758, %v2755
          %v2849 = vpack.c.b16 %v2759, %v2756
          %v2850 = vpack.c.b16 %v2763, %v2760
          %v2851 = vpack.c.b16 %v2764, %v2761
          %v2852 = vpack.c.b16 %v2765, %v2762
          %v2853 = vpack.c.b16 %v2769, %v2766
          %v2854 = vpack.c.b16 %v2770, %v2767
          %v2855 = vpack.c.b16 %v2771, %v2768
          %v2856 = vpack.c.b16 %v2775, %v2772
          %v2857 = vpack.c.b16 %v2776, %v2773
          %v2858 = vpack.c.b16 %v2777, %v2774
          %v2859 = vpack.c.b16 %v2781, %v2778
          %v2860 = vpack.c.b16 %v2782, %v2779
          %v2861 = vpack.c.b16 %v2783, %v2780
          %v2862 = vpack.c.b16 %v2787, %v2784
          %v2863 = vpack.c.b16 %v2788, %v2785
          %v2864 = vpack.c.b16 %v2789, %v2786
          %v2865 = vpack.c.b16 %v2793, %v2790
          %v2866 = vpack.c.b16 %v2794, %v2791
          %v2867 = vpack.c.b16 %v2795, %v2792
          %2940 = vmatprep.subr.bf16.mxu0 %v2797
          %2941 = vmatpush1.bf16.msra.mxu0 %v2796
          %2942 = vmatprep.subr.bf16.mxu0 %v2800
          %2943 = vmatpush1.bf16.msra.mxu0 %v2799
          %2944 = vmatprep.subr.bf16.mxu0 %v2803
          %2945 = vmatpush1.bf16.msra.mxu0 %v2802
          %2946 = vmatprep.subr.bf16.mxu0 %v2806
          %2947 = vmatpush1.bf16.msra.mxu0 %v2805
          %2948 = vmatprep.subr.bf16.mxu0 %v2809
          %2949 = vmatpush1.bf16.msra.mxu0 %v2808
          %2950 = vmatprep.subr.bf16.mxu0 %v2812
          %2951 = vmatpush1.bf16.msra.mxu0 %v2811
          %2952 = vmatprep.subr.bf16.mxu0 %v2815
          %2953 = vmatpush1.bf16.msra.mxu0 %v2814
          %2954 = vmatprep.subr.bf16.mxu0 %v2818
          %2955 = vmatpush1.bf16.msra.mxu0 %v2817
          %2956 = vmatprep.subr.bf16.mxu0 %v2821
          %2957 = vmatpush1.bf16.msra.mxu0 %v2820
          %2958 = vmatprep.subr.bf16.mxu0 %v2824
          %2959 = vmatpush1.bf16.msra.mxu0 %v2823
          %2960 = vmatprep.subr.bf16.mxu0 %v2827
          %2961 = vmatpush1.bf16.msra.mxu0 %v2826
          %2962 = vmatprep.subr.bf16.mxu0 %v2830
          %2963 = vmatpush1.bf16.msra.mxu0 %v2829
          %2964 = vmatprep.subr.bf16.mxu0 %v2833
          %2965 = vmatpush1.bf16.msra.mxu0 %v2832
          %2966 = vmatprep.subr.bf16.mxu0 %v2836
          %2967 = vmatpush1.bf16.msra.mxu0 %v2835
          %2968 = vmatprep.subr.bf16.mxu0 %v2839
          %2969 = vmatpush1.bf16.msra.mxu0 %v2838
          %2970 = vmatprep.subr.bf16.mxu0 %v2842
          %2971 = vmatpush1.bf16.msra.mxu0 %v2841
          %2972 = vmatprep.mubr.bf16.mxu0 %v2551
          %2973 = vmatmul.mubr.bf16.gmra.mrb[0].mxu0 %v2550
          %v2974 = vpop.f32.mrb[0].mxu0
          %v2975 = vadd.f32 0.0, %v2974
          %v2976 = vpop.f32.mrb[0].mxu0
          %v2977 = vadd.f32 0.0, %v2976
          %v2978 = vpop.f32.mrb[0].mxu0
          %v2979 = vpop.f32.mrb[0].mxu0
          %2980 = vdwg.mxu0
          %2981 = vmatprep.subr.bf16.mxu0 %v2845
          %2982 = vmatpush1.bf16.msra.mxu0 %v2844
          %2983 = vmatprep.subr.bf16.mxu0 %v2848
          %2984 = vmatpush1.bf16.msra.mxu0 %v2847
          %2985 = vmatprep.subr.bf16.mxu0 %v2851
          %2986 = vmatpush1.bf16.msra.mxu0 %v2850
          %2987 = vmatprep.subr.bf16.mxu0 %v2854
          %2988 = vmatpush1.bf16.msra.mxu0 %v2853
          %2989 = vmatprep.subr.bf16.mxu0 %v2857
          %2990 = vmatpush1.bf16.msra.mxu0 %v2856
          %2991 = vmatprep.subr.bf16.mxu0 %v2860
          %2992 = vmatpush1.bf16.msra.mxu0 %v2859
          %2993 = vmatprep.subr.bf16.mxu0 %v2863
          %2994 = vmatpush1.bf16.msra.mxu0 %v2862
          %2995 = vmatprep.subr.bf16.mxu0 %v2866
          %2996 = vmatpush1.bf16.msra.mxu0 %v2865
          %2997 = vmatprep.subr.bf16.mxu0 0
          %2998 = vmatpush1.bf16.msra.mxu0 0
          %2999 = vmatprep.subr.bf16.mxu0 0
          %3000 = vmatpush1.bf16.msra.mxu0 0
          %3001 = vmatprep.subr.bf16.mxu0 0
          %3002 = vmatpush1.bf16.msra.mxu0 0
          %3003 = vmatprep.subr.bf16.mxu0 0
          %3004 = vmatpush1.bf16.msra.mxu0 0
          %3005 = vmatprep.subr.bf16.mxu0 0
          %3006 = vmatpush1.bf16.msra.mxu0 0
          %3007 = vmatprep.subr.bf16.mxu0 0
          %3008 = vmatpush1.bf16.msra.mxu0 0
          %3009 = vmatprep.subr.bf16.mxu0 0
          %3010 = vmatpush1.bf16.msra.mxu0 0
          %3011 = vmatprep.subr.bf16.mxu0 0
          %3012 = vmatpush1.bf16.msra.mxu0 0
          %3013 = vmatprep.mubr.bf16.mxu0 0
          %3014 = vmatmul.mubr.bf16.gmra.mrb[0].mxu0 %v2552
          %v3015 = vpop.f32.mrb[0].mxu0
          %v3016 = vadd.f32 %v2975, %v3015
          %v3017 = vpop.f32.mrb[0].mxu0
          %v3018 = vadd.f32 %v2977, %v3017
          %v3019 = vpop.f32.mrb[0].mxu0
          %v3020 = vpop.f32.mrb[0].mxu0
          %3021 = vdwg.mxu0
          %3022 = vmatprep.subr.bf16.mxu0 0
          %3023 = vmatpush1.bf16.msra.mxu0 %v2798
          %3024 = vmatprep.subr.bf16.mxu0 0
          %3025 = vmatpush1.bf16.msra.mxu0 %v2801
          %3026 = vmatprep.subr.bf16.mxu0 0
          %3027 = vmatpush1.bf16.msra.mxu0 %v2804
          %3028 = vmatprep.subr.bf16.mxu0 0
          %3029 = vmatpush1.bf16.msra.mxu0 %v2807
          %3030 = vmatprep.subr.bf16.mxu0 0
          %3031 = vmatpush1.bf16.msra.mxu0 %v2810
          %3032 = vmatprep.subr.bf16.mxu0 0
          %3033 = vmatpush1.bf16.msra.mxu0 %v2813
          %3034 = vmatprep.subr.bf16.mxu0 0
          %3035 = vmatpush1.bf16.msra.mxu0 %v2816
          %3036 = vmatprep.subr.bf16.mxu0 0
          %3037 = vmatpush1.bf16.msra.mxu0 %v2819
          %3038 = vmatprep.subr.bf16.mxu0 0
          %3039 = vmatpush1.bf16.msra.mxu0 %v2822
          %3040 = vmatprep.subr.bf16.mxu0 0
          %3041 = vmatpush1.bf16.msra.mxu0 %v2825
          %3042 = vmatprep.subr.bf16.mxu0 0
          %3043 = vmatpush1.bf16.msra.mxu0 %v2828
          %3044 = vmatprep.subr.bf16.mxu0 0
          %3045 = vmatpush1.bf16.msra.mxu0 %v2831
          %3046 = vmatprep.subr.bf16.mxu0 0
          %3047 = vmatpush1.bf16.msra.mxu0 %v2834
          %3048 = vmatprep.subr.bf16.mxu0 0
          %3049 = vmatpush1.bf16.msra.mxu0 %v2837
          %3050 = vmatprep.subr.bf16.mxu0 0
          %3051 = vmatpush1.bf16.msra.mxu0 %v2840
          %3052 = vmatprep.subr.bf16.mxu0 0
          %3053 = vmatpush1.bf16.msra.mxu0 %v2843
          %3054 = vmatprep.mubr.bf16.mxu0 %v2551
          %3055 = vmatmul.mubr.bf16.gmra.mrb[0].mxu0 %v2550
          %v3056 = vpop.f32.mrb[0].mxu0
          %v3057 = vadd.f32 0.0, %v3056
          %v3058 = vpop.f32.mrb[0].mxu0
          %v3059 = vpop.f32.mrb[0].mxu0
          %v3060 = vpop.f32.mrb[0].mxu0
          %3061 = vdwg.mxu0
          %3062 = vmatprep.subr.bf16.mxu0 0
          %3063 = vmatpush1.bf16.msra.mxu0 %v2846
          %3064 = vmatprep.subr.bf16.mxu0 0
          %3065 = vmatpush1.bf16.msra.mxu0 %v2849
          %3066 = vmatprep.subr.bf16.mxu0 0
          %3067 = vmatpush1.bf16.msra.mxu0 %v2852
          %3068 = vmatprep.subr.bf16.mxu0 0
          %3069 = vmatpush1.bf16.msra.mxu0 %v2855
          %3070 = vmatprep.subr.bf16.mxu0 0
          %3071 = vmatpush1.bf16.msra.mxu0 %v2858
          %3072 = vmatprep.subr.bf16.mxu0 0
          %3073 = vmatpush1.bf16.msra.mxu0 %v2861
          %3074 = vmatprep.subr.bf16.mxu0 0
          %3075 = vmatpush1.bf16.msra.mxu0 %v2864
          %3076 = vmatprep.subr.bf16.mxu0 0
          %3077 = vmatpush1.bf16.msra.mxu0 %v2867
          %3078 = vmatprep.subr.bf16.mxu0 0
          %3079 = vmatpush1.bf16.msra.mxu0 0
          %3080 = vmatprep.subr.bf16.mxu0 0
          %3081 = vmatpush1.bf16.msra.mxu0 0
          %3082 = vmatprep.subr.bf16.mxu0 0
          %3083 = vmatpush1.bf16.msra.mxu0 0
          %3084 = vmatprep.subr.bf16.mxu0 0
          %3085 = vmatpush1.bf16.msra.mxu0 0
          %3086 = vmatprep.subr.bf16.mxu0 0
          %3087 = vmatpush1.bf16.msra.mxu0 0
          %3088 = vmatprep.subr.bf16.mxu0 0
          %3089 = vmatpush1.bf16.msra.mxu0 0
          %3090 = vmatprep.subr.bf16.mxu0 0
          %3091 = vmatpush1.bf16.msra.mxu0 0
          %3092 = vmatprep.subr.bf16.mxu0 0
          %3093 = vmatpush1.bf16.msra.mxu0 0
          %3094 = vmatprep.mubr.bf16.mxu0 0
          %3095 = vmatmul.mubr.bf16.gmra.mrb[0].mxu0 %v2552
          %v3096 = vpop.f32.mrb[0].mxu0
          %v3097 = vadd.f32 %v3057, %v3096
          %v3098 = vpop.f32.mrb[0].mxu0
          %v3099 = vpop.f32.mrb[0].mxu0
          %v3100 = vpop.f32.mrb[0].mxu0
          %3101 = vdwg.mxu0
          %v3104 = vunpack.c.l.b16 %v2348
          %v3105 = vunpack.c.h.b16 %v2348
          %v3106 = vunpack.c.l.b16 %v2349
          %v3107 = vpack.c.b16 %v3104, %v3104
          %v3108 = vpack.c.b16 %v3105, %v3105
          %v3109 = vpack.c.b16 %v3106, %v3106
          %v3209 = vunpack.c.l.b16 %v2350
          %v3210 = vunpack.c.h.b16 %v2350
          %v3211 = vunpack.c.l.b16 %v2351
          %v3212 = vunpack.c.l.b16 %v2352
          %v3213 = vunpack.c.h.b16 %v2352
          %v3214 = vunpack.c.l.b16 %v2353
          %v3215 = vunpack.c.l.b16 %v2354
          %v3216 = vunpack.c.h.b16 %v2354
          %v3217 = vunpack.c.l.b16 %v2355
          %v3218 = vunpack.c.l.b16 %v2356
          %v3219 = vunpack.c.h.b16 %v2356
          %v3220 = vunpack.c.l.b16 %v2357
          %v3221 = vunpack.c.l.b16 %v2358
          %v3222 = vunpack.c.h.b16 %v2358
          %v3223 = vunpack.c.l.b16 %v2359
          %v3224 = vunpack.c.l.b16 %v2360
          %v3225 = vunpack.c.h.b16 %v2360
          %v3226 = vunpack.c.l.b16 %v2361
          %v3227 = vunpack.c.l.b16 %v2362
          %v3228 = vunpack.c.h.b16 %v2362
          %v3229 = vunpack.c.l.b16 %v2363
          %v3230 = vunpack.c.l.b16 %v2364
          %v3231 = vunpack.c.h.b16 %v2364
          %v3232 = vunpack.c.l.b16 %v2365
          %v3233 = vunpack.c.l.b16 %v2366
          %v3234 = vunpack.c.h.b16 %v2366
          %v3235 = vunpack.c.l.b16 %v2367
          %v3236 = vunpack.c.l.b16 %v2368
          %v3237 = vunpack.c.h.b16 %v2368
          %v3238 = vunpack.c.l.b16 %v2369
          %v3239 = vunpack.c.l.b16 %v2370
          %v3240 = vunpack.c.h.b16 %v2370
          %v3241 = vunpack.c.l.b16 %v2371
          %v3242 = vunpack.c.l.b16 %v2372
          %v3243 = vunpack.c.h.b16 %v2372
          %v3244 = vunpack.c.l.b16 %v2373
          %v3245 = vunpack.c.l.b16 %v2374
          %v3246 = vunpack.c.h.b16 %v2374
          %v3247 = vunpack.c.l.b16 %v2375
          %v3248 = vunpack.c.l.b16 %v2376
          %v3249 = vunpack.c.h.b16 %v2376
          %v3250 = vunpack.c.l.b16 %v2377
          %v3251 = vunpack.c.l.b16 %v2378
          %v3252 = vunpack.c.h.b16 %v2378
          %v3253 = vunpack.c.l.b16 %v2379
          %v3254 = vunpack.c.l.b16 %v2380
          %v3255 = vunpack.c.h.b16 %v2380
          %v3256 = vunpack.c.l.b16 %v2381
          %v3257 = vunpack.c.l.b16 %v2382
          %v3258 = vunpack.c.h.b16 %v2382
          %v3259 = vunpack.c.l.b16 %v2383
          %v3260 = vunpack.c.l.b16 %v2384
          %v3261 = vunpack.c.h.b16 %v2384
          %v3262 = vunpack.c.l.b16 %v2385
          %v3263 = vunpack.c.l.b16 %v2386
          %v3264 = vunpack.c.h.b16 %v2386
          %v3265 = vunpack.c.l.b16 %v2387
          %v3266 = vunpack.c.l.b16 %v2388
          %v3267 = vunpack.c.h.b16 %v2388
          %v3268 = vunpack.c.l.b16 %v2389
          %v3269 = vunpack.c.l.b16 %v2390
          %v3270 = vunpack.c.h.b16 %v2390
          %v3271 = vunpack.c.l.b16 %v2391
          %v3272 = vunpack.c.l.b16 %v2392
          %v3273 = vunpack.c.h.b16 %v2392
          %v3274 = vunpack.c.l.b16 %v2393
          %v3275 = vunpack.c.l.b16 %v2394
          %v3276 = vunpack.c.h.b16 %v2394
          %v3277 = vunpack.c.l.b16 %v2395
          %v3278 = vunpack.c.l.b16 %v2396
          %v3279 = vunpack.c.h.b16 %v2396
          %v3280 = vunpack.c.l.b16 %v2397
          %v3281 = vunpack.c.l.b16 %v2398
          %v3282 = vunpack.c.h.b16 %v2398
          %v3283 = vunpack.c.l.b16 %v2399
          %v3284 = vunpack.c.l.b16 %v2400
          %v3285 = vunpack.c.h.b16 %v2400
          %v3286 = vunpack.c.l.b16 %v2401
          %v3287 = vunpack.c.l.b16 %v2402
          %v3288 = vunpack.c.h.b16 %v2402
          %v3289 = vunpack.c.l.b16 %v2403
          %v3290 = vunpack.c.l.b16 %v2404
          %v3291 = vunpack.c.h.b16 %v2404
          %v3292 = vunpack.c.l.b16 %v2405
          %v3293 = vunpack.c.l.b16 %v2406
          %v3294 = vunpack.c.h.b16 %v2406
          %v3295 = vunpack.c.l.b16 %v2407
          %v3296 = vunpack.c.l.b16 %v2408
          %v3297 = vunpack.c.h.b16 %v2408
          %v3298 = vunpack.c.l.b16 %v2409
          %v3299 = vunpack.c.l.b16 %v2410
          %v3300 = vunpack.c.h.b16 %v2410
          %v3301 = vunpack.c.l.b16 %v2411
          %v3302 = vunpack.c.l.b16 %v2412
          %v3303 = vunpack.c.h.b16 %v2412
          %v3304 = vunpack.c.l.b16 %v2413
          %v3305 = vunpack.c.l.b16 %v2414
          %v3306 = vunpack.c.h.b16 %v2414
          %v3307 = vunpack.c.l.b16 %v2415
          %v3308 = vunpack.c.l.b16 %v2416
          %v3309 = vunpack.c.h.b16 %v2416
          %v3310 = vunpack.c.l.b16 %v2417
          %v3311 = vunpack.c.l.b16 %v2418
          %v3312 = vunpack.c.h.b16 %v2418
          %v3313 = vunpack.c.l.b16 %v2419
          %v3314 = vunpack.c.l.b16 %v2420
          %v3315 = vunpack.c.h.b16 %v2420
          %v3316 = vunpack.c.l.b16 %v2421
          %v3317 = vunpack.c.l.b16 %v2422
          %v3318 = vunpack.c.h.b16 %v2422
          %v3319 = vunpack.c.l.b16 %v2423
          %v3320 = vunpack.c.l.b16 %v2424
          %v3321 = vunpack.c.h.b16 %v2424
          %v3322 = vunpack.c.l.b16 %v2425
          %v3323 = vunpack.c.l.b16 %v2426
          %v3324 = vunpack.c.h.b16 %v2426
          %v3325 = vunpack.c.l.b16 %v2427
          %v3326 = vunpack.c.l.b16 %v2428
          %v3327 = vunpack.c.h.b16 %v2428
          %v3328 = vunpack.c.l.b16 %v2429
          %v3329 = vunpack.c.l.b16 %v2430
          %v3330 = vunpack.c.h.b16 %v2430
          %v3331 = vunpack.c.l.b16 %v2431
          %v3332 = vunpack.c.l.b16 %v2432
          %v3333 = vunpack.c.h.b16 %v2432
          %v3334 = vunpack.c.l.b16 %v2433
          %v3335 = vunpack.c.l.b16 %v2434
          %v3336 = vunpack.c.h.b16 %v2434
          %v3337 = vunpack.c.l.b16 %v2435
          %v3338 = vunpack.c.l.b16 %v2436
          %v3339 = vunpack.c.h.b16 %v2436
          %v3340 = vunpack.c.l.b16 %v2437
          %v3341 = vunpack.c.l.b16 %v2438
          %v3342 = vunpack.c.h.b16 %v2438
          %v3343 = vunpack.c.l.b16 %v2439
          %v3344 = vunpack.c.l.b16 %v2440
          %v3345 = vunpack.c.h.b16 %v2440
          %v3346 = vunpack.c.l.b16 %v2441
          %v3347 = vunpack.c.l.b16 %v2442
          %v3348 = vunpack.c.h.b16 %v2442
          %v3349 = vunpack.c.l.b16 %v2443
          %v3350 = vunpack.c.l.b16 %v2444
          %v3351 = vunpack.c.h.b16 %v2444
          %v3352 = vunpack.c.l.b16 %v2445
          %v3353 = vpack.c.b16 %v3212, %v3209
          %v3354 = vpack.c.b16 %v3213, %v3210
          %v3355 = vpack.c.b16 %v3214, %v3211
          %v3356 = vpack.c.b16 %v3218, %v3215
          %v3357 = vpack.c.b16 %v3219, %v3216
          %v3358 = vpack.c.b16 %v3220, %v3217
          %v3359 = vpack.c.b16 %v3224, %v3221
          %v3360 = vpack.c.b16 %v3225, %v3222
          %v3361 = vpack.c.b16 %v3226, %v3223
          %v3362 = vpack.c.b16 %v3230, %v3227
          %v3363 = vpack.c.b16 %v3231, %v3228
          %v3364 = vpack.c.b16 %v3232, %v3229
          %v3365 = vpack.c.b16 %v3236, %v3233
          %v3366 = vpack.c.b16 %v3237, %v3234
          %v3367 = vpack.c.b16 %v3238, %v3235
          %v3368 = vpack.c.b16 %v3242, %v3239
          %v3369 = vpack.c.b16 %v3243, %v3240
          %v3370 = vpack.c.b16 %v3244, %v3241
          %v3371 = vpack.c.b16 %v3248, %v3245
          %v3372 = vpack.c.b16 %v3249, %v3246
          %v3373 = vpack.c.b16 %v3250, %v3247
          %v3374 = vpack.c.b16 %v3254, %v3251
          %v3375 = vpack.c.b16 %v3255, %v3252
          %v3376 = vpack.c.b16 %v3256, %v3253
          %v3377 = vpack.c.b16 %v3260, %v3257
          %v3378 = vpack.c.b16 %v3261, %v3258
          %v3379 = vpack.c.b16 %v3262, %v3259
          %v3380 = vpack.c.b16 %v3266, %v3263
          %v3381 = vpack.c.b16 %v3267, %v3264
          %v3382 = vpack.c.b16 %v3268, %v3265
          %v3383 = vpack.c.b16 %v3272, %v3269
          %v3384 = vpack.c.b16 %v3273, %v3270
          %v3385 = vpack.c.b16 %v3274, %v3271
          %v3386 = vpack.c.b16 %v3278, %v3275
          %v3387 = vpack.c.b16 %v3279, %v3276
          %v3388 = vpack.c.b16 %v3280, %v3277
          %v3389 = vpack.c.b16 %v3284, %v3281
          %v3390 = vpack.c.b16 %v3285, %v3282
          %v3391 = vpack.c.b16 %v3286, %v3283
          %v3392 = vpack.c.b16 %v3290, %v3287
          %v3393 = vpack.c.b16 %v3291, %v3288
          %v3394 = vpack.c.b16 %v3292, %v3289
          %v3395 = vpack.c.b16 %v3296, %v3293
          %v3396 = vpack.c.b16 %v3297, %v3294
          %v3397 = vpack.c.b16 %v3298, %v3295
          %v3398 = vpack.c.b16 %v3302, %v3299
          %v3399 = vpack.c.b16 %v3303, %v3300
          %v3400 = vpack.c.b16 %v3304, %v3301
          %v3401 = vpack.c.b16 %v3308, %v3305
          %v3402 = vpack.c.b16 %v3309, %v3306
          %v3403 = vpack.c.b16 %v3310, %v3307
          %v3404 = vpack.c.b16 %v3314, %v3311
          %v3405 = vpack.c.b16 %v3315, %v3312
          %v3406 = vpack.c.b16 %v3316, %v3313
          %v3407 = vpack.c.b16 %v3320, %v3317
          %v3408 = vpack.c.b16 %v3321, %v3318
          %v3409 = vpack.c.b16 %v3322, %v3319
          %v3410 = vpack.c.b16 %v3326, %v3323
          %v3411 = vpack.c.b16 %v3327, %v3324
          %v3412 = vpack.c.b16 %v3328, %v3325
          %v3413 = vpack.c.b16 %v3332, %v3329
          %v3414 = vpack.c.b16 %v3333, %v3330
          %v3415 = vpack.c.b16 %v3334, %v3331
          %v3416 = vpack.c.b16 %v3338, %v3335
          %v3417 = vpack.c.b16 %v3339, %v3336
          %v3418 = vpack.c.b16 %v3340, %v3337
          %v3419 = vpack.c.b16 %v3344, %v3341
          %v3420 = vpack.c.b16 %v3345, %v3342
          %v3421 = vpack.c.b16 %v3346, %v3343
          %v3422 = vpack.c.b16 %v3350, %v3347
          %v3423 = vpack.c.b16 %v3351, %v3348
          %v3424 = vpack.c.b16 %v3352, %v3349
          %3497 = vmatprep.subr.bf16.mxu0 %v3354
          %3498 = vmatpush1.bf16.msra.mxu0 %v3353
          %3499 = vmatprep.subr.bf16.mxu0 %v3357
          %3500 = vmatpush1.bf16.msra.mxu0 %v3356
          %3501 = vmatprep.subr.bf16.mxu0 %v3360
          %3502 = vmatpush1.bf16.msra.mxu0 %v3359
          %3503 = vmatprep.subr.bf16.mxu0 %v3363
          %3504 = vmatpush1.bf16.msra.mxu0 %v3362
          %3505 = vmatprep.subr.bf16.mxu0 %v3366
          %3506 = vmatpush1.bf16.msra.mxu0 %v3365
          %3507 = vmatprep.subr.bf16.mxu0 %v3369
          %3508 = vmatpush1.bf16.msra.mxu0 %v3368
          %3509 = vmatprep.subr.bf16.mxu0 %v3372
          %3510 = vmatpush1.bf16.msra.mxu0 %v3371
          %3511 = vmatprep.subr.bf16.mxu0 %v3375
          %3512 = vmatpush1.bf16.msra.mxu0 %v3374
          %3513 = vmatprep.subr.bf16.mxu0 %v3378
          %3514 = vmatpush1.bf16.msra.mxu0 %v3377
          %3515 = vmatprep.subr.bf16.mxu0 %v3381
          %3516 = vmatpush1.bf16.msra.mxu0 %v3380
          %3517 = vmatprep.subr.bf16.mxu0 %v3384
          %3518 = vmatpush1.bf16.msra.mxu0 %v3383
          %3519 = vmatprep.subr.bf16.mxu0 %v3387
          %3520 = vmatpush1.bf16.msra.mxu0 %v3386
          %3521 = vmatprep.subr.bf16.mxu0 %v3390
          %3522 = vmatpush1.bf16.msra.mxu0 %v3389
          %3523 = vmatprep.subr.bf16.mxu0 %v3393
          %3524 = vmatpush1.bf16.msra.mxu0 %v3392
          %3525 = vmatprep.subr.bf16.mxu0 %v3396
          %3526 = vmatpush1.bf16.msra.mxu0 %v3395
          %3527 = vmatprep.subr.bf16.mxu0 %v3399
          %3528 = vmatpush1.bf16.msra.mxu0 %v3398
          %3529 = vmatprep.mubr.bf16.mxu0 %v3108
          %3530 = vmatmul.mubr.bf16.gmra.mrb[0].mxu0 %v3107
          %v3531 = vpop.f32.mrb[0].mxu0
          %v3532 = vadd.f32 %v3016, %v3531
          %v3533 = vpop.f32.mrb[0].mxu0
          %v3534 = vadd.f32 %v3018, %v3533
          %v3535 = vpop.f32.mrb[0].mxu0
          %v3536 = vpop.f32.mrb[0].mxu0
          %3537 = vdwg.mxu0
          %3538 = vmatprep.subr.bf16.mxu0 %v3402
          %3539 = vmatpush1.bf16.msra.mxu0 %v3401
          %3540 = vmatprep.subr.bf16.mxu0 %v3405
          %3541 = vmatpush1.bf16.msra.mxu0 %v3404
          %3542 = vmatprep.subr.bf16.mxu0 %v3408
          %3543 = vmatpush1.bf16.msra.mxu0 %v3407
          %3544 = vmatprep.subr.bf16.mxu0 %v3411
          %3545 = vmatpush1.bf16.msra.mxu0 %v3410
          %3546 = vmatprep.subr.bf16.mxu0 %v3414
          %3547 = vmatpush1.bf16.msra.mxu0 %v3413
          %3548 = vmatprep.subr.bf16.mxu0 %v3417
          %3549 = vmatpush1.bf16.msra.mxu0 %v3416
          %3550 = vmatprep.subr.bf16.mxu0 %v3420
          %3551 = vmatpush1.bf16.msra.mxu0 %v3419
          %3552 = vmatprep.subr.bf16.mxu0 %v3423
          %3553 = vmatpush1.bf16.msra.mxu0 %v3422
          %3554 = vmatprep.subr.bf16.mxu0 0
          %3555 = vmatpush1.bf16.msra.mxu0 0
          %3556 = vmatprep.subr.bf16.mxu0 0
          %3557 = vmatpush1.bf16.msra.mxu0 0
          %3558 = vmatprep.subr.bf16.mxu0 0
          %3559 = vmatpush1.bf16.msra.mxu0 0
          %3560 = vmatprep.subr.bf16.mxu0 0
          %3561 = vmatpush1.bf16.msra.mxu0 0
          %3562 = vmatprep.subr.bf16.mxu0 0
          %3563 = vmatpush1.bf16.msra.mxu0 0
          %3564 = vmatprep.subr.bf16.mxu0 0
          %3565 = vmatpush1.bf16.msra.mxu0 0
          %3566 = vmatprep.subr.bf16.mxu0 0
          %3567 = vmatpush1.bf16.msra.mxu0 0
          %3568 = vmatprep.subr.bf16.mxu0 0
          %3569 = vmatpush1.bf16.msra.mxu0 0
          %3570 = vmatprep.mubr.bf16.mxu0 0
          %3571 = vmatmul.mubr.bf16.gmra.mrb[0].mxu0 %v3109
          %v3572 = vpop.f32.mrb[0].mxu0
          %v3573 = vadd.f32 %v3532, %v3572
          %v3574 = vpop.f32.mrb[0].mxu0
          %v3575 = vadd.f32 %v3534, %v3574
          %v3576 = vpop.f32.mrb[0].mxu0
          %v3577 = vpop.f32.mrb[0].mxu0
          %3578 = vdwg.mxu0
          %3579 = vmatprep.subr.bf16.mxu0 0
          %3580 = vmatpush1.bf16.msra.mxu0 %v3355
          %3581 = vmatprep.subr.bf16.mxu0 0
          %3582 = vmatpush1.bf16.msra.mxu0 %v3358
          %3583 = vmatprep.subr.bf16.mxu0 0
          %3584 = vmatpush1.bf16.msra.mxu0 %v3361
          %3585 = vmatprep.subr.bf16.mxu0 0
          %3586 = vmatpush1.bf16.msra.mxu0 %v3364
          %3587 = vmatprep.subr.bf16.mxu0 0
          %3588 = vmatpush1.bf16.msra.mxu0 %v3367
          %3589 = vmatprep.subr.bf16.mxu0 0
          %3590 = vmatpush1.bf16.msra.mxu0 %v3370
          %3591 = vmatprep.subr.bf16.mxu0 0
          %3592 = vmatpush1.bf16.msra.mxu0 %v3373
          %3593 = vmatprep.subr.bf16.mxu0 0
          %3594 = vmatpush1.bf16.msra.mxu0 %v3376
          %3595 = vmatprep.subr.bf16.mxu0 0
          %3596 = vmatpush1.bf16.msra.mxu0 %v3379
          %3597 = vmatprep.subr.bf16.mxu0 0
          %3598 = vmatpush1.bf16.msra.mxu0 %v3382
          %3599 = vmatprep.subr.bf16.mxu0 0
          %3600 = vmatpush1.bf16.msra.mxu0 %v3385
          %3601 = vmatprep.subr.bf16.mxu0 0
          %3602 = vmatpush1.bf16.msra.mxu0 %v3388
          %3603 = vmatprep.subr.bf16.mxu0 0
          %3604 = vmatpush1.bf16.msra.mxu0 %v3391
          %3605 = vmatprep.subr.bf16.mxu0 0
          %3606 = vmatpush1.bf16.msra.mxu0 %v3394
          %3607 = vmatprep.subr.bf16.mxu0 0
          %3608 = vmatpush1.bf16.msra.mxu0 %v3397
          %3609 = vmatprep.subr.bf16.mxu0 0
          %3610 = vmatpush1.bf16.msra.mxu0 %v3400
          %3611 = vmatprep.mubr.bf16.mxu0 %v3108
          %3612 = vmatmul.mubr.bf16.gmra.mrb[0].mxu0 %v3107
          %v3613 = vpop.f32.mrb[0].mxu0
          %v3614 = vadd.f32 %v3097, %v3613
          %v3615 = vpop.f32.mrb[0].mxu0
          %v3616 = vpop.f32.mrb[0].mxu0
          %v3617 = vpop.f32.mrb[0].mxu0
          %3618 = vdwg.mxu0
          %3619 = vmatprep.subr.bf16.mxu0 0
          %3620 = vmatpush1.bf16.msra.mxu0 %v3403
          %3621 = vmatprep.subr.bf16.mxu0 0
          %3622 = vmatpush1.bf16.msra.mxu0 %v3406
          %3623 = vmatprep.subr.bf16.mxu0 0
          %3624 = vmatpush1.bf16.msra.mxu0 %v3409
          %3625 = vmatprep.subr.bf16.mxu0 0
          %3626 = vmatpush1.bf16.msra.mxu0 %v3412
          %3627 = vmatprep.subr.bf16.mxu0 0
          %3628 = vmatpush1.bf16.msra.mxu0 %v3415
          %3629 = vmatprep.subr.bf16.mxu0 0
          %3630 = vmatpush1.bf16.msra.mxu0 %v3418
          %3631 = vmatprep.subr.bf16.mxu0 0
          %3632 = vmatpush1.bf16.msra.mxu0 %v3421
          %3633 = vmatprep.subr.bf16.mxu0 0
          %3634 = vmatpush1.bf16.msra.mxu0 %v3424
          %3635 = vmatprep.subr.bf16.mxu0 0
          %3636 = vmatpush1.bf16.msra.mxu0 0
          %3637 = vmatprep.subr.bf16.mxu0 0
          %3638 = vmatpush1.bf16.msra.mxu0 0
          %3639 = vmatprep.subr.bf16.mxu0 0
          %3640 = vmatpush1.bf16.msra.mxu0 0
          %3641 = vmatprep.subr.bf16.mxu0 0
          %3642 = vmatpush1.bf16.msra.mxu0 0
          %3643 = vmatprep.subr.bf16.mxu0 0
          %3644 = vmatpush1.bf16.msra.mxu0 0
          %3645 = vmatprep.subr.bf16.mxu0 0
          %3646 = vmatpush1.bf16.msra.mxu0 0
          %3647 = vmatprep.subr.bf16.mxu0 0
          %3648 = vmatpush1.bf16.msra.mxu0 0
          %3649 = vmatprep.subr.bf16.mxu0 0
          %3650 = vmatpush1.bf16.msra.mxu0 0
          %3651 = vmatprep.mubr.bf16.mxu0 0
          %3652 = vmatmul.mubr.bf16.gmra.mrb[0].mxu0 %v3109
          %v3653 = vpop.f32.mrb[0].mxu0
          %v3654 = vadd.f32 %v3614, %v3653
          %v3655 = vpop.f32.mrb[0].mxu0
          %v3656 = vpop.f32.mrb[0].mxu0
          %v3657 = vpop.f32.mrb[0].mxu0
          %3658 = vdwg.mxu0
          %v3659 = vld [vmem:[%s1359] sm:$0x7]
          %v3661 = vlaneseq
          %v3662 = vshrl.u32 %v3661, 7
          %v3663 = vsub.s32 0, %v3662
          %v3664 = vrot.slane %v3659, %v3663
          %v3665 = vlaneseq
          %v3666 = vshrl.u32 %v3665, 7
          %v3667 = vsub.s32 1, %v3666
          %v3668 = vrot.slane %v3659, %v3667
          %v3669 = vlaneseq
          %v3670 = vshrl.u32 %v3669, 7
          %v3671 = vsub.s32 2, %v3670
          %v3672 = vrot.slane %v3659, %v3671
          %v3676 = vadd.f32 %v3573, %v3664
          %v3677 = vadd.f32 %v3575, %v3668
          %v3678 = vadd.f32 %v3654, %v3672
          %s3679 = smul.u32 %s30, 3
          %s3680 = smul.addr %s3679, 8
          %s3681 = scalar_lea.vmem [#allocation4], %s3680
          %v3682 = vld [vmem:[%s3681] sm:$0xff]
          %v3683 = vld [vmem:[%s3681 + $0x8] sm:$0xff]
          %v3684 = vld [vmem:[%s3681 + $0x10] sm:$0xff]
          %v3685 = vadd.f32 %v3676, %v3682
          %v3686 = vadd.f32 %v3677, %v3683
          %v3687 = vadd.f32 %v3678, %v3684
          %3688 = vst [vmem:[%s1315] sm:$0xff] %v3685
          %3689 = vst [vmem:[%s1315 + $0x8] sm:$0xff] %v3686
          %3690 = vst [vmem:[%s1315 + $0x10] sm:$0xff] %v3687
        $region154: #{residual_block_forward.1} parent=129 // pred_fallthru
          _
        %s3691 = sand.u32 %s358, 1
        %s3692 = scalar_lea.sflag [#allocation9], %s3691
        %s3693 = sand.u32 %s358, 1
        %s3694 = smul.addr %s3693, 24
        %s3695 = scalar_lea.vmem [#allocation8], %s3694
        // Predicated region
        $region155: #{residual_block_forward.1} parent=129 // pred_check
          %p3696 = pneg %p368
        $region156: #{residual_block_forward.1} parent=129 // pred_check_branch
          %3698 = sbr.rel (%p3696) target = $region158
        $region157: #{residual_block_forward.1} parent=129 // pred_region
          %s3699 = smul.u32 %s30, %s29
          %s3700 = smul.u32 3, %s3699
          %s3702 = ssub.s32 384, 384
          %3703 = vsyncadd %s3692, %s3702
          %s3704 = smul.addr %s3700, 128
          %s3705 = scalar_lea.hbm %s11, %s3704
          %s3707 = sshll.u32 %s3695, 4
          %s3708 = int_to_ptr.vmem [resolvable:$true] %s3707
          %3710 = dma.vmem_to_hbm [thread:$0]  %s3708, 384, %s3705, %s3692
        $region158: #{residual_block_forward.1} parent=129 // pred_fallthru
          _
      $region130: #{residual_block_forward.1} parent=5 // pred_fallthru
        _
      %p3711 = scmp.le.s32.totalorder 2, %s20
      // Predicated region
      $region159: #{residual_block_forward.1} parent=5 // pred_check
        %p3712 = pneg %p3711
      $region160: #{residual_block_forward.1} parent=5 // pred_check_branch
        %3714 = sbr.rel (%p3712) target = $region162
      $region161: #{residual_block_forward.1} parent=5 // pred_region
        %s3715 = ssub.s32 %s20, 2
        // Predicated region
        $region163: #{residual_block_forward.1} parent=161 // pred_check
          %p3716 = pneg %p374
        $region164: #{residual_block_forward.1} parent=161 // pred_check_branch
          %3718 = sbr.rel (%p3716) target = $region166
        $region165: #{residual_block_forward.1} parent=161 // pred_region
          %s3719 = sand.u32 %s359, 1
          %s3720 = scalar_lea.sflag [#allocation9], %s3719
          %s3721 = sand.u32 %s359, 1
          %s3722 = smul.addr %s3721, 24
          %s3723 = scalar_lea.vmem [#allocation8], %s3722
          %3724 = dma.done %s3720, 384
        $region166: #{residual_block_forward.1} parent=161 // pred_fallthru
          _
      $region162: #{residual_block_forward.1} parent=5 // pred_fallthru
        _
    $region6: #{residual_block_forward.1} parent=1 // loop_footer
      %s24 = sadd.s32 1, %s20
    $region7: #{residual_block_forward.1} parent=1 // loop_footer_branch
      %19 = sbr.rel target = $region3
    $region8: #{residual_block_forward.1} parent=1 // loop_exit
      _
    %3725 = vsyncpa [#allocation9], 1
    %s3726 = scalar_lea.sflag [#allocation9], 1
    %3727 = vsyncpa %s3726, 1

</llo_original>
